<compile_context>
chip_gen: v7x
topology: tpu7x:2x2x1
jax: 0.10.0
libtpu: 0.0.40
codegen_flags: <defaults>
</compile_context>

<pallas_src>
import math
import numpy as np
import jax
import jax.numpy as jnp
from jax import lax
from jax.experimental import pallas as pl
from jax.experimental.pallas import tpu as pltpu

# ---------------- model dimensions (small, consistent with the module) -------
B, S, H, NH, I, L = 2, 8, 32, 4, 64, 2          # batch, seq, hidden, heads, ffn, layers
HD = H // NH
VOCAB, MAXPOS, TYPEVOCAB = 16, 8, 2
EPS = 1e-12
INV_SQRT2 = 0.7071067811865476
SCALE = 1.0 / math.sqrt(HD)


def _ln(x, g, b):
    mu = jnp.mean(x, axis=-1, keepdims=True)
    var = jnp.mean((x - mu) ** 2, axis=-1, keepdims=True)
    return (x - mu) * lax.rsqrt(var + EPS) * g + b


# ---------------- Pallas kernel: fused embedding-LN + L encoder layers -------
def bert_encoder_kernel(x_ref, mask_ref, eg_ref, eb_ref,
                        wqkv_ref, bqkv_ref, wo_ref, bo_ref, g1_ref, b1_ref,
                        wi_ref, bi_ref, wf_ref, bf_ref, g2_ref, b2_ref,
                        y_ref, attn_ref, ctx_ref):
    x = x_ref[0]                                   # (S, H) summed embeddings
    mask_full = jnp.broadcast_to(mask_ref[0], (S, S))   # hoisted additive mask

    # embedding LayerNorm (eval mode -> dropout layers are identity)
    h = _ln(x, eg_ref[...], eb_ref[...])

    for l in range(L):                             # static unroll; hidden stays in VMEM
        # fused QKV projection: one (S,H)x(H,3H) matmul, one bias add
        qkv = (jnp.dot(h, wqkv_ref[l], preferred_element_type=jnp.float32)
               + bqkv_ref[l])                      # (S, 3H)

        cls_rows = []
        for hh in range(NH):                       # static per-head loop
            lo = hh * HD
            qh = qkv[:, lo:lo + HD]
            kh = qkv[:, H + lo:H + lo + HD]
            vh = qkv[:, 2 * H + lo:2 * H + lo + HD]
            s = lax.dot_general(qh, kh, (((1,), (1,)), ((), ())),
                                preferred_element_type=jnp.float32) * SCALE
            s = s + mask_full                      # (S, S)
            m = jnp.max(s, axis=-1, keepdims=True)
            e = jnp.exp(s - m)
            inv = pl.reciprocal(jnp.sum(e, axis=-1, keepdims=True), approx=True)
            p = e * inv                            # attention probabilities
            if l == L - 1:
                cls_rows.append(p[0:1, :])         # query-row 0, this head
            # write per-head context directly into the (S, H) VMEM slab
            ctx_ref[:, lo:lo + HD] = jnp.dot(p, vh,
                                             preferred_element_type=jnp.float32)

        if l == L - 1:
            acc = cls_rows[0]
            for r in cls_rows[1:]:
                acc = acc + r
            attn_ref[0] = acc * (1.0 / NH)         # head-mean of CLS-row probs

        ctx = ctx_ref[...]                         # (S, H)
        attn_out = (jnp.dot(ctx, wo_ref[l], preferred_element_type=jnp.float32)
                    + bo_ref[l])
        h1 = _ln(attn_out + h, g1_ref[l], b1_ref[l])

        inter = (jnp.dot(h1, wi_ref[l], preferred_element_type=jnp.float32)
                 + bi_ref[l])
        inter = 0.5 * inter * (1.0 + lax.erf(inter * INV_SQRT2))   # exact GELU
        ffn = (jnp.dot(inter, wf_ref[l], preferred_element_type=jnp.float32)
               + bf_ref[l])
        h = _ln(ffn + h1, g2_ref[l], b2_ref[l])

    y_ref[0] = h


def _rep(shape):
    n = len(shape)
    return pl.BlockSpec(shape, lambda i, n=n: (0,) * n)


def bert_encoder(emb, mask_add, p):
    out_shapes = (jax.ShapeDtypeStruct((B, S, H), jnp.float32),
                  jax.ShapeDtypeStruct((B, 1, S), jnp.float32))
    in_specs = [
        pl.BlockSpec((1, S, H), lambda i: (i, 0, 0)),    # embeddings
        pl.BlockSpec((1, 1, S), lambda i: (i, 0, 0)),    # additive key mask
        _rep((1, H)), _rep((1, H)),                      # embedding LN
        _rep((L, H, 3 * H)), _rep((L, 1, 3 * H)),        # fused QKV
        _rep((L, H, H)), _rep((L, 1, H)),                # attn output proj
        _rep((L, 1, H)), _rep((L, 1, H)),                # LN1
        _rep((L, H, I)), _rep((L, 1, I)),                # FFN in
        _rep((L, I, H)), _rep((L, 1, H)),                # FFN out
        _rep((L, 1, H)), _rep((L, 1, H)),                # LN2
    ]
    out_specs = (pl.BlockSpec((1, S, H), lambda i: (i, 0, 0)),
                 pl.BlockSpec((1, 1, S), lambda i: (i, 0, 0)))
    return pl.pallas_call(
        bert_encoder_kernel,
        out_shape=out_shapes,
        grid=(B,),
        in_specs=in_specs,
        out_specs=out_specs,
        scratch_shapes=[pltpu.VMEM((S, H), jnp.float32)],
        compiler_params=pltpu.CompilerParams(dimension_semantics=("parallel",)),
    )(emb, mask_add,
      p["emb_g"], p["emb_b"],
      p["wqkv"], p["bqkv"], p["wo"], p["bo"], p["g1"], p["b1"],
      p["wi"], p["bi"], p["wf"], p["bf"], p["g2"], p["b2"])


# ---------------- parameters (deterministic, BERT-style init) -----------------
def init_params(key):
    keys = iter(jax.random.split(key, 16))

    def w(shape):
        return jax.random.normal(next(keys), shape, jnp.float32) * 0.02

    ones = lambda s: jnp.ones(s, jnp.float32)
    zeros = lambda s: jnp.zeros(s, jnp.float32)
    return {
        "word_emb": w((VOCAB, H)),
        "pos_emb": w((MAXPOS, H)),
        "type_emb": w((TYPEVOCAB, H)),
        "emb_g": ones((1, H)), "emb_b": zeros((1, H)),
        # per-layer weights stacked along a leading L axis (Q|K|V fused)
        "wqkv": w((L, H, 3 * H)), "bqkv": zeros((L, 1, 3 * H)),
        "wo": w((L, H, H)), "bo": zeros((L, 1, H)),
        "g1": ones((L, 1, H)), "b1": zeros((L, 1, H)),
        "wi": w((L, H, I)), "bi": zeros((L, 1, I)),
        "wf": w((L, I, H)), "bf": zeros((L, 1, H)),
        "g2": ones((L, 1, H)), "b2": zeros((L, 1, H)),
    }


# ---------------- BERT encoder (embedding gathers + one fused Pallas call) ----
def encode(params, ids, attn_mask, token_type):
    we = jnp.take(params["word_emb"], ids, axis=0)
    pe = params["pos_emb"][None, :S, :]
    te = jnp.take(params["type_emb"], token_type, axis=0)
    emb = we + pe + te
    mask_add = ((1.0 - attn_mask.astype(jnp.float32)) * -10000.0)[:, None, :]
    hidden, cls_attn = bert_encoder(emb, mask_add, params)
    # attentions[-1][:, :, 0, 1:].mean(dim=1), computed in-kernel; slice keys 1:
    last_layer_attn = cls_attn[:, 0, 1:]                      # (B, S-1)
    return hidden, last_layer_attn


encode_jit = jax.jit(encode)


# ---------------- host-side token aggregation (faithful numpy port) ----------
# TODO(synk): aggregate_tokens is tokenizer/string driven and data-dependent;
# it has no clean Pallas equivalent and is reproduced on the host.
def aggregate_tokens(embeddings, caption_ids, last_layer_attn, idxtoword):
    _, num_layers, num_words, dim = embeddings.shape
    emb = embeddings.transpose(0, 2, 1, 3)          # (B, S, 1, H)
    agg_embs_batch, sentences, last_attns = [], [], []
    for embs, caption_id, last_attn in zip(emb, caption_ids, last_layer_attn):
        agg_embs, token_bank = [], []
        words, word_bank = [], []
        attns, attn_bank = [], []
        for word_emb, word_id, attn in zip(embs, caption_id, last_attn):
            word = idxtoword[int(word_id)]
            if word == "[SEP]":
                new_emb = np.stack(token_bank).sum(axis=0)
                agg_embs.append(new_emb)
                words.append("".join(word_bank))
                attns.append(sum(attn_bank))
                agg_embs.append(word_emb)
                words.append(word)
                attns.append(attn)
                break
            if not word.startswith("##"):
                if len(word_bank) == 0:
                    token_bank.append(word_emb)
                    word_bank.append(word)
                    attn_bank.append(attn)
                else:
                    new_emb = np.stack(token_bank).sum(axis=0)
                    agg_embs.append(new_emb)
                    words.append("".join(word_bank))
                    attns.append(sum(attn_bank))
                    token_bank = [word_emb]
                    word_bank = [word]
                    attn_bank = [attn]
            else:
                token_bank.append(word_emb)
                word_bank.append(word[2:])
                attn_bank.append(attn)
        agg_embs = np.stack(agg_embs)
        padding_size = num_words - len(agg_embs)
        paddings = np.zeros((padding_size, num_layers, dim), dtype=agg_embs.dtype)
        words = words + ["[PAD]"] * padding_size
        last_attns.append(np.concatenate(
            [np.array(attns, dtype=np.float32), np.zeros(padding_size, np.float32)]))
        agg_embs_batch.append(np.concatenate([agg_embs, paddings], axis=0))
        sentences.append(words)
    agg_embs_batch = np.stack(agg_embs_batch).transpose(0, 2, 1, 3)
    last_atten_pt = np.stack(last_attns).astype(agg_embs_batch.dtype)
    return agg_embs_batch, sentences, last_atten_pt


# ---------------- BertEncoder2.forward ----------------------------------------
def bert_encoder2_forward(params, ids, attn_mask, token_type, idxtoword):
    hidden, last_layer_attn = encode_jit(params, ids, attn_mask, token_type)
    all_feat = hidden[:, None]                                       # (B, 1, S, H)
    agg, sents, last_atten_pt = aggregate_tokens(
        np.asarray(all_feat), np.asarray(ids), np.asarray(last_layer_attn), idxtoword)
    last_atten_pt = last_atten_pt[:, 1:]
    all_feat = agg[:, 0]                                             # last_n_layers == 1
    report_feat = all_feat[:, 0]
    word_feat = all_feat[:, 1:]
    return report_feat, word_feat, last_atten_pt, sents


# ---------------- main ---------------------------------------------------------
if __name__ == "__main__":
    key = jax.random.PRNGKey(0)
    params = init_params(key)

    vocab = ["[PAD]", "[CLS]", "[SEP]", "[UNK]", "the", "lung", "heart", "pleural",
             "normal", "chest", "##s", "##al", "##ing", "no", "effusion", "is"]
    idxtoword = {i: w for i, w in enumerate(vocab)}

    ids = jnp.array([[1, 6, 15, 8, 11, 2, 0, 0],
                     [1, 5, 10, 13, 14, 2, 0, 0]], dtype=jnp.int32)
    attn_mask = jnp.array([[1, 1, 1, 1, 1, 1, 0, 0],
                           [1, 1, 1, 1, 1, 1, 0, 0]], dtype=jnp.int32)
    token_type = jnp.zeros((B, S), dtype=jnp.int32)

    # run the fused kernel once and block on its result
    enc_out = encode_jit(params, ids, attn_mask, token_type)
    jax.block_until_ready(enc_out)

    report_feat, word_feat, last_atten_pt, sents = bert_encoder2_forward(
        params, ids, attn_mask, token_type, idxtoword)

    assert report_feat.shape == (B, H)
    assert word_feat.shape == (B, S - 1, H)
    assert last_atten_pt.shape == (B, S - 1)
    assert np.all(np.isfinite(report_feat)) and np.all(np.isfinite(word_feat))
    print("KERNEL_OK")
</pallas_src>

<mosaic_0001>
module attributes {stable_mosaic.version = 11 : i64} {
  func.func @bert_encoder_kernel(%arg0: i32, %arg1: memref<1x8x32xf32, #tpu.memory_space<vmem>>, %arg2: memref<1x1x8xf32, #tpu.memory_space<vmem>>, %arg3: memref<1x32xf32, #tpu.memory_space<vmem>>, %arg4: memref<1x32xf32, #tpu.memory_space<vmem>>, %arg5: memref<2x32x96xf32, #tpu.memory_space<vmem>>, %arg6: memref<2x1x96xf32, #tpu.memory_space<vmem>>, %arg7: memref<2x32x32xf32, #tpu.memory_space<vmem>>, %arg8: memref<2x1x32xf32, #tpu.memory_space<vmem>>, %arg9: memref<2x1x32xf32, #tpu.memory_space<vmem>>, %arg10: memref<2x1x32xf32, #tpu.memory_space<vmem>>, %arg11: memref<2x32x64xf32, #tpu.memory_space<vmem>>, %arg12: memref<2x1x64xf32, #tpu.memory_space<vmem>>, %arg13: memref<2x64x32xf32, #tpu.memory_space<vmem>>, %arg14: memref<2x1x32xf32, #tpu.memory_space<vmem>>, %arg15: memref<2x1x32xf32, #tpu.memory_space<vmem>>, %arg16: memref<2x1x32xf32, #tpu.memory_space<vmem>>, %arg17: memref<1x8x32xf32, #tpu.memory_space<vmem>>, %arg18: memref<1x1x8xf32, #tpu.memory_space<vmem>>, %arg19: memref<8x32xf32, #tpu.memory_space<vmem>>) attributes {dimension_semantics = [#tpu.dimension_semantics<parallel>], iteration_bounds = array<i64: 2>, scalar_prefetch = 0 : i64, scratch_operands = 1 : i64, tpu.core_type = #tpu.core_type<tc>, window_params = [{transform_indices = @transform_0, window_bounds = array<i64: 1, 8, 32>}, {transform_indices = @transform_1, window_bounds = array<i64: 1, 1, 8>}, {pipeline_mode = #tpu.pipeline_mode<synchronous>, transform_indices = @transform_2, window_bounds = array<i64: 1, 32>}, {pipeline_mode = #tpu.pipeline_mode<synchronous>, transform_indices = @transform_3, window_bounds = array<i64: 1, 32>}, {pipeline_mode = #tpu.pipeline_mode<synchronous>, transform_indices = @transform_4, window_bounds = array<i64: 2, 32, 96>}, {pipeline_mode = #tpu.pipeline_mode<synchronous>, transform_indices = @transform_5, window_bounds = array<i64: 2, 1, 96>}, {pipeline_mode = #tpu.pipeline_mode<synchronous>, transform_indices = @transform_6, window_bounds = array<i64: 2, 32, 32>}, {pipeline_mode = #tpu.pipeline_mode<synchronous>, transform_indices = @transform_7, window_bounds = array<i64: 2, 1, 32>}, {pipeline_mode = #tpu.pipeline_mode<synchronous>, transform_indices = @transform_8, window_bounds = array<i64: 2, 1, 32>}, {pipeline_mode = #tpu.pipeline_mode<synchronous>, transform_indices = @transform_9, window_bounds = array<i64: 2, 1, 32>}, {pipeline_mode = #tpu.pipeline_mode<synchronous>, transform_indices = @transform_10, window_bounds = array<i64: 2, 32, 64>}, {pipeline_mode = #tpu.pipeline_mode<synchronous>, transform_indices = @transform_11, window_bounds = array<i64: 2, 1, 64>}, {pipeline_mode = #tpu.pipeline_mode<synchronous>, transform_indices = @transform_12, window_bounds = array<i64: 2, 64, 32>}, {pipeline_mode = #tpu.pipeline_mode<synchronous>, transform_indices = @transform_13, window_bounds = array<i64: 2, 1, 32>}, {pipeline_mode = #tpu.pipeline_mode<synchronous>, transform_indices = @transform_14, window_bounds = array<i64: 2, 1, 32>}, {pipeline_mode = #tpu.pipeline_mode<synchronous>, transform_indices = @transform_15, window_bounds = array<i64: 2, 1, 32>}, {transform_indices = @transform_16, window_bounds = array<i64: 1, 8, 32>}, {transform_indices = @transform_17, window_bounds = array<i64: 1, 1, 8>}]} {
    %c0 = arith.constant 0 : index
    %c0_0 = arith.constant 0 : index
    %c0_1 = arith.constant 0 : index
    %0 = vector.load %arg1[%c0, %c0_0, %c0_1] : memref<1x8x32xf32, #tpu.memory_space<vmem>>, vector<1x8x32xf32>
    %1 = vector.shape_cast %0 : vector<1x8x32xf32> to vector<8x32xf32>
    %c0_2 = arith.constant 0 : index
    %c0_3 = arith.constant 0 : index
    %c0_4 = arith.constant 0 : index
    %2 = vector.load %arg2[%c0_2, %c0_3, %c0_4] : memref<1x1x8xf32, #tpu.memory_space<vmem>>, vector<1x1x8xf32>
    %3 = vector.shape_cast %2 : vector<1x1x8xf32> to vector<1x8xf32>
    %4 = vector.shape_cast %3 : vector<1x8xf32> to vector<1x8xf32>
    %5 = vector.broadcast %4 : vector<1x8xf32> to vector<8x8xf32>
    %c0_5 = arith.constant 0 : index
    %c0_6 = arith.constant 0 : index
    %6 = vector.load %arg3[%c0_5, %c0_6] : memref<1x32xf32, #tpu.memory_space<vmem>>, vector<1x32xf32>
    %c0_7 = arith.constant 0 : index
    %c0_8 = arith.constant 0 : index
    %7 = vector.load %arg4[%c0_7, %c0_8] : memref<1x32xf32, #tpu.memory_space<vmem>>, vector<1x32xf32>
    %cst = arith.constant dense<0.000000e+00> : vector<8xf32>
    %8 = vector.multi_reduction <add>, %1, %cst [1] : vector<8x32xf32> to vector<8xf32>
    %9 = vector.shape_cast %8 : vector<8xf32> to vector<8x1xf32>
    %cst_9 = arith.constant 3.200000e+01 : f32
    %10 = vector.broadcast %cst_9 : f32 to vector<8x1xf32>
    %11 = arith.divf %9, %10 : vector<8x1xf32>
    %12 = vector.broadcast %11 : vector<8x1xf32> to vector<8x32xf32>
    %13 = arith.subf %1, %12 : vector<8x32xf32>
    %14 = arith.mulf %13, %13 : vector<8x32xf32>
    %cst_10 = arith.constant dense<0.000000e+00> : vector<8xf32>
    %15 = vector.multi_reduction <add>, %14, %cst_10 [1] : vector<8x32xf32> to vector<8xf32>
    %16 = vector.shape_cast %15 : vector<8xf32> to vector<8x1xf32>
    %cst_11 = arith.constant 3.200000e+01 : f32
    %17 = vector.broadcast %cst_11 : f32 to vector<8x1xf32>
    %18 = arith.divf %16, %17 : vector<8x1xf32>
    %19 = vector.broadcast %11 : vector<8x1xf32> to vector<8x32xf32>
    %20 = arith.subf %1, %19 : vector<8x32xf32>
    %cst_12 = arith.constant 9.99999996E-13 : f32
    %21 = vector.broadcast %cst_12 : f32 to vector<8x1xf32>
    %22 = arith.addf %18, %21 : vector<8x1xf32>
    %23 = math.rsqrt %22 : vector<8x1xf32>
    %24 = vector.broadcast %23 : vector<8x1xf32> to vector<8x32xf32>
    %25 = arith.mulf %20, %24 : vector<8x32xf32>
    %26 = vector.broadcast %6 : vector<1x32xf32> to vector<8x32xf32>
    %27 = arith.mulf %25, %26 : vector<8x32xf32>
    %28 = vector.broadcast %7 : vector<1x32xf32> to vector<8x32xf32>
    %29 = arith.addf %27, %28 : vector<8x32xf32>
    %c0_13 = arith.constant 0 : index
    %c0_14 = arith.constant 0 : index
    %c0_15 = arith.constant 0 : index
    %30 = vector.load %arg5[%c0_13, %c0_14, %c0_15] : memref<2x32x96xf32, #tpu.memory_space<vmem>>, vector<1x32x96xf32>
    %31 = vector.shape_cast %30 : vector<1x32x96xf32> to vector<32x96xf32>
    %cst_16 = arith.constant dense<0.000000e+00> : vector<8x96xf32>
    %32 = tpu.matmul %29, %31, %cst_16 {dimension_numbers = #tpu.dot_dimension_numbers<[1], [0], [0], [1], [0, 0, 1, 1], [], []>} : vector<8x32xf32>, vector<32x96xf32>, vector<8x96xf32> -> vector<8x96xf32>
    %c0_17 = arith.constant 0 : index
    %c0_18 = arith.constant 0 : index
    %c0_19 = arith.constant 0 : index
    %33 = vector.load %arg6[%c0_17, %c0_18, %c0_19] : memref<2x1x96xf32, #tpu.memory_space<vmem>>, vector<1x1x96xf32>
    %34 = vector.shape_cast %33 : vector<1x1x96xf32> to vector<1x96xf32>
    %35 = vector.broadcast %34 : vector<1x96xf32> to vector<8x96xf32>
    %36 = arith.addf %32, %35 : vector<8x96xf32>
    %37 = vector.extract_strided_slice %36 {offsets = [0, 0], sizes = [8, 8], strides = [1, 1]} : vector<8x96xf32> to vector<8x8xf32>
    %38 = vector.extract_strided_slice %36 {offsets = [0, 32], sizes = [8, 8], strides = [1, 1]} : vector<8x96xf32> to vector<8x8xf32>
    %39 = vector.extract_strided_slice %36 {offsets = [0, 64], sizes = [8, 8], strides = [1, 1]} : vector<8x96xf32> to vector<8x8xf32>
    %cst_20 = arith.constant dense<0.000000e+00> : vector<8x8xf32>
    %40 = tpu.matmul %37, %38, %cst_20 {dimension_numbers = #tpu.dot_dimension_numbers<[1], [1], [0], [0], [0, 0, 1, 0], [], []>} : vector<8x8xf32>, vector<8x8xf32>, vector<8x8xf32> -> vector<8x8xf32>
    %cst_21 = arith.constant 0.353553385 : f32
    %41 = vector.broadcast %cst_21 : f32 to vector<8x8xf32>
    %42 = arith.mulf %40, %41 : vector<8x8xf32>
    %43 = arith.addf %42, %5 : vector<8x8xf32>
    %cst_22 = arith.constant dense<0xFF800000> : vector<8xf32>
    %44 = vector.multi_reduction <maximumf>, %43, %cst_22 [1] : vector<8x8xf32> to vector<8xf32>
    %45 = vector.shape_cast %44 : vector<8xf32> to vector<8x1xf32>
    %46 = vector.broadcast %45 : vector<8x1xf32> to vector<8x8xf32>
    %47 = arith.subf %43, %46 : vector<8x8xf32>
    %48 = math.exp %47 : vector<8x8xf32>
    %cst_23 = arith.constant dense<0.000000e+00> : vector<8xf32>
    %49 = vector.multi_reduction <add>, %48, %cst_23 [1] : vector<8x8xf32> to vector<8xf32>
    %50 = vector.shape_cast %49 : vector<8xf32> to vector<8x1xf32>
    %51 = tpu.reciprocal %50 {approx = true} : vector<8x1xf32> -> vector<8x1xf32>
    %52 = vector.broadcast %51 : vector<8x1xf32> to vector<8x8xf32>
    %53 = arith.mulf %48, %52 : vector<8x8xf32>
    %cst_24 = arith.constant dense<0.000000e+00> : vector<8x8xf32>
    %54 = tpu.matmul %53, %39, %cst_24 {dimension_numbers = #tpu.dot_dimension_numbers<[1], [0], [0], [1], [0, 0, 1, 1], [], []>} : vector<8x8xf32>, vector<8x8xf32>, vector<8x8xf32> -> vector<8x8xf32>
    %c0_25 = arith.constant 0 : index
    %c0_26 = arith.constant 0 : index
    %55 = vector.load %arg19[%c0_25, %c0_26] : memref<8x32xf32, #tpu.memory_space<vmem>>, vector<8x8xf32>
    tpu.vector_store %arg19[%c0_25, %c0_26], %54 {strides = array<i32>} : memref<8x32xf32, #tpu.memory_space<vmem>>, vector<8x8xf32>,
    %56 = vector.extract_strided_slice %36 {offsets = [0, 8], sizes = [8, 8], strides = [1, 1]} : vector<8x96xf32> to vector<8x8xf32>
    %57 = vector.extract_strided_slice %36 {offsets = [0, 40], sizes = [8, 8], strides = [1, 1]} : vector<8x96xf32> to vector<8x8xf32>
    %58 = vector.extract_strided_slice %36 {offsets = [0, 72], sizes = [8, 8], strides = [1, 1]} : vector<8x96xf32> to vector<8x8xf32>
    %cst_27 = arith.constant dense<0.000000e+00> : vector<8x8xf32>
    %59 = tpu.matmul %56, %57, %cst_27 {dimension_numbers = #tpu.dot_dimension_numbers<[1], [1], [0], [0], [0, 0, 1, 0], [], []>} : vector<8x8xf32>, vector<8x8xf32>, vector<8x8xf32> -> vector<8x8xf32>
    %cst_28 = arith.constant 0.353553385 : f32
    %60 = vector.broadcast %cst_28 : f32 to vector<8x8xf32>
    %61 = arith.mulf %59, %60 : vector<8x8xf32>
    %62 = arith.addf %61, %5 : vector<8x8xf32>
    %cst_29 = arith.constant dense<0xFF800000> : vector<8xf32>
    %63 = vector.multi_reduction <maximumf>, %62, %cst_29 [1] : vector<8x8xf32> to vector<8xf32>
    %64 = vector.shape_cast %63 : vector<8xf32> to vector<8x1xf32>
    %65 = vector.broadcast %64 : vector<8x1xf32> to vector<8x8xf32>
    %66 = arith.subf %62, %65 : vector<8x8xf32>
    %67 = math.exp %66 : vector<8x8xf32>
    %cst_30 = arith.constant dense<0.000000e+00> : vector<8xf32>
    %68 = vector.multi_reduction <add>, %67, %cst_30 [1] : vector<8x8xf32> to vector<8xf32>
    %69 = vector.shape_cast %68 : vector<8xf32> to vector<8x1xf32>
    %70 = tpu.reciprocal %69 {approx = true} : vector<8x1xf32> -> vector<8x1xf32>
    %71 = vector.broadcast %70 : vector<8x1xf32> to vector<8x8xf32>
    %72 = arith.mulf %67, %71 : vector<8x8xf32>
    %cst_31 = arith.constant dense<0.000000e+00> : vector<8x8xf32>
    %73 = tpu.matmul %72, %58, %cst_31 {dimension_numbers = #tpu.dot_dimension_numbers<[1], [0], [0], [1], [0, 0, 1, 1], [], []>} : vector<8x8xf32>, vector<8x8xf32>, vector<8x8xf32> -> vector<8x8xf32>
    %c0_32 = arith.constant 0 : index
    %c8 = arith.constant 8 : index
    %74 = vector.load %arg19[%c0_32, %c8] : memref<8x32xf32, #tpu.memory_space<vmem>>, vector<8x8xf32>
    tpu.vector_store %arg19[%c0_32, %c8], %73 {strides = array<i32>} : memref<8x32xf32, #tpu.memory_space<vmem>>, vector<8x8xf32>,
    %75 = vector.extract_strided_slice %36 {offsets = [0, 16], sizes = [8, 8], strides = [1, 1]} : vector<8x96xf32> to vector<8x8xf32>
    %76 = vector.extract_strided_slice %36 {offsets = [0, 48], sizes = [8, 8], strides = [1, 1]} : vector<8x96xf32> to vector<8x8xf32>
    %77 = vector.extract_strided_slice %36 {offsets = [0, 80], sizes = [8, 8], strides = [1, 1]} : vector<8x96xf32> to vector<8x8xf32>
    %cst_33 = arith.constant dense<0.000000e+00> : vector<8x8xf32>
    %78 = tpu.matmul %75, %76, %cst_33 {dimension_numbers = #tpu.dot_dimension_numbers<[1], [1], [0], [0], [0, 0, 1, 0], [], []>} : vector<8x8xf32>, vector<8x8xf32>, vector<8x8xf32> -> vector<8x8xf32>
    %cst_34 = arith.constant 0.353553385 : f32
    %79 = vector.broadcast %cst_34 : f32 to vector<8x8xf32>
    %80 = arith.mulf %78, %79 : vector<8x8xf32>
    %81 = arith.addf %80, %5 : vector<8x8xf32>
    %cst_35 = arith.constant dense<0xFF800000> : vector<8xf32>
    %82 = vector.multi_reduction <maximumf>, %81, %cst_35 [1] : vector<8x8xf32> to vector<8xf32>
    %83 = vector.shape_cast %82 : vector<8xf32> to vector<8x1xf32>
    %84 = vector.broadcast %83 : vector<8x1xf32> to vector<8x8xf32>
    %85 = arith.subf %81, %84 : vector<8x8xf32>
    %86 = math.exp %85 : vector<8x8xf32>
    %cst_36 = arith.constant dense<0.000000e+00> : vector<8xf32>
    %87 = vector.multi_reduction <add>, %86, %cst_36 [1] : vector<8x8xf32> to vector<8xf32>
    %88 = vector.shape_cast %87 : vector<8xf32> to vector<8x1xf32>
    %89 = tpu.reciprocal %88 {approx = true} : vector<8x1xf32> -> vector<8x1xf32>
    %90 = vector.broadcast %89 : vector<8x1xf32> to vector<8x8xf32>
    %91 = arith.mulf %86, %90 : vector<8x8xf32>
    %cst_37 = arith.constant dense<0.000000e+00> : vector<8x8xf32>
    %92 = tpu.matmul %91, %77, %cst_37 {dimension_numbers = #tpu.dot_dimension_numbers<[1], [0], [0], [1], [0, 0, 1, 1], [], []>} : vector<8x8xf32>, vector<8x8xf32>, vector<8x8xf32> -> vector<8x8xf32>
    %c0_38 = arith.constant 0 : index
    %c16 = arith.constant 16 : index
    %93 = vector.load %arg19[%c0_38, %c16] : memref<8x32xf32, #tpu.memory_space<vmem>>, vector<8x8xf32>
    tpu.vector_store %arg19[%c0_38, %c16], %92 {strides = array<i32>} : memref<8x32xf32, #tpu.memory_space<vmem>>, vector<8x8xf32>,
    %94 = vector.extract_strided_slice %36 {offsets = [0, 24], sizes = [8, 8], strides = [1, 1]} : vector<8x96xf32> to vector<8x8xf32>
    %95 = vector.extract_strided_slice %36 {offsets = [0, 56], sizes = [8, 8], strides = [1, 1]} : vector<8x96xf32> to vector<8x8xf32>
    %96 = vector.extract_strided_slice %36 {offsets = [0, 88], sizes = [8, 8], strides = [1, 1]} : vector<8x96xf32> to vector<8x8xf32>
    %cst_39 = arith.constant dense<0.000000e+00> : vector<8x8xf32>
    %97 = tpu.matmul %94, %95, %cst_39 {dimension_numbers = #tpu.dot_dimension_numbers<[1], [1], [0], [0], [0, 0, 1, 0], [], []>} : vector<8x8xf32>, vector<8x8xf32>, vector<8x8xf32> -> vector<8x8xf32>
    %cst_40 = arith.constant 0.353553385 : f32
    %98 = vector.broadcast %cst_40 : f32 to vector<8x8xf32>
    %99 = arith.mulf %97, %98 : vector<8x8xf32>
    %100 = arith.addf %99, %5 : vector<8x8xf32>
    %cst_41 = arith.constant dense<0xFF800000> : vector<8xf32>
    %101 = vector.multi_reduction <maximumf>, %100, %cst_41 [1] : vector<8x8xf32> to vector<8xf32>
    %102 = vector.shape_cast %101 : vector<8xf32> to vector<8x1xf32>
    %103 = vector.broadcast %102 : vector<8x1xf32> to vector<8x8xf32>
    %104 = arith.subf %100, %103 : vector<8x8xf32>
    %105 = math.exp %104 : vector<8x8xf32>
    %cst_42 = arith.constant dense<0.000000e+00> : vector<8xf32>
    %106 = vector.multi_reduction <add>, %105, %cst_42 [1] : vector<8x8xf32> to vector<8xf32>
    %107 = vector.shape_cast %106 : vector<8xf32> to vector<8x1xf32>
    %108 = tpu.reciprocal %107 {approx = true} : vector<8x1xf32> -> vector<8x1xf32>
    %109 = vector.broadcast %108 : vector<8x1xf32> to vector<8x8xf32>
    %110 = arith.mulf %105, %109 : vector<8x8xf32>
    %cst_43 = arith.constant dense<0.000000e+00> : vector<8x8xf32>
    %111 = tpu.matmul %110, %96, %cst_43 {dimension_numbers = #tpu.dot_dimension_numbers<[1], [0], [0], [1], [0, 0, 1, 1], [], []>} : vector<8x8xf32>, vector<8x8xf32>, vector<8x8xf32> -> vector<8x8xf32>
    %c0_44 = arith.constant 0 : index
    %c24 = arith.constant 24 : index
    %112 = vector.load %arg19[%c0_44, %c24] : memref<8x32xf32, #tpu.memory_space<vmem>>, vector<8x8xf32>
    tpu.vector_store %arg19[%c0_44, %c24], %111 {strides = array<i32>} : memref<8x32xf32, #tpu.memory_space<vmem>>, vector<8x8xf32>,
    %c0_45 = arith.constant 0 : index
    %c0_46 = arith.constant 0 : index
    %113 = vector.load %arg19[%c0_45, %c0_46] : memref<8x32xf32, #tpu.memory_space<vmem>>, vector<8x32xf32>
    %c0_47 = arith.constant 0 : index
    %c0_48 = arith.constant 0 : index
    %c0_49 = arith.constant 0 : index
    %114 = vector.load %arg7[%c0_47, %c0_48, %c0_49] : memref<2x32x32xf32, #tpu.memory_space<vmem>>, vector<1x32x32xf32>
    %115 = vector.shape_cast %114 : vector<1x32x32xf32> to vector<32x32xf32>
    %cst_50 = arith.constant dense<0.000000e+00> : vector<8x32xf32>
    %116 = tpu.matmul %113, %115, %cst_50 {dimension_numbers = #tpu.dot_dimension_numbers<[1], [0], [0], [1], [0, 0, 1, 1], [], []>} : vector<8x32xf32>, vector<32x32xf32>, vector<8x32xf32> -> vector<8x32xf32>
    %c0_51 = arith.constant 0 : index
    %c0_52 = arith.constant 0 : index
    %c0_53 = arith.constant 0 : index
    %117 = vector.load %arg8[%c0_51, %c0_52, %c0_53] : memref<2x1x32xf32, #tpu.memory_space<vmem>>, vector<1x1x32xf32>
    %118 = vector.shape_cast %117 : vector<1x1x32xf32> to vector<1x32xf32>
    %119 = vector.broadcast %118 : vector<1x32xf32> to vector<8x32xf32>
    %120 = arith.addf %116, %119 : vector<8x32xf32>
    %121 = arith.addf %120, %29 : vector<8x32xf32>
    %c0_54 = arith.constant 0 : index
    %c0_55 = arith.constant 0 : index
    %c0_56 = arith.constant 0 : index
    %122 = vector.load %arg9[%c0_54, %c0_55, %c0_56] : memref<2x1x32xf32, #tpu.memory_space<vmem>>, vector<1x1x32xf32>
    %123 = vector.shape_cast %122 : vector<1x1x32xf32> to vector<1x32xf32>
    %c0_57 = arith.constant 0 : index
    %c0_58 = arith.constant 0 : index
    %c0_59 = arith.constant 0 : index
    %124 = vector.load %arg10[%c0_57, %c0_58, %c0_59] : memref<2x1x32xf32, #tpu.memory_space<vmem>>, vector<1x1x32xf32>
    %125 = vector.shape_cast %124 : vector<1x1x32xf32> to vector<1x32xf32>
    %cst_60 = arith.constant dense<0.000000e+00> : vector<8xf32>
    %126 = vector.multi_reduction <add>, %121, %cst_60 [1] : vector<8x32xf32> to vector<8xf32>
    %127 = vector.shape_cast %126 : vector<8xf32> to vector<8x1xf32>
    %cst_61 = arith.constant 3.200000e+01 : f32
    %128 = vector.broadcast %cst_61 : f32 to vector<8x1xf32>
    %129 = arith.divf %127, %128 : vector<8x1xf32>
    %130 = vector.broadcast %129 : vector<8x1xf32> to vector<8x32xf32>
    %131 = arith.subf %121, %130 : vector<8x32xf32>
    %132 = arith.mulf %131, %131 : vector<8x32xf32>
    %cst_62 = arith.constant dense<0.000000e+00> : vector<8xf32>
    %133 = vector.multi_reduction <add>, %132, %cst_62 [1] : vector<8x32xf32> to vector<8xf32>
    %134 = vector.shape_cast %133 : vector<8xf32> to vector<8x1xf32>
    %cst_63 = arith.constant 3.200000e+01 : f32
    %135 = vector.broadcast %cst_63 : f32 to vector<8x1xf32>
    %136 = arith.divf %134, %135 : vector<8x1xf32>
    %137 = vector.broadcast %129 : vector<8x1xf32> to vector<8x32xf32>
    %138 = arith.subf %121, %137 : vector<8x32xf32>
    %cst_64 = arith.constant 9.99999996E-13 : f32
    %139 = vector.broadcast %cst_64 : f32 to vector<8x1xf32>
    %140 = arith.addf %136, %139 : vector<8x1xf32>
    %141 = math.rsqrt %140 : vector<8x1xf32>
    %142 = vector.broadcast %141 : vector<8x1xf32> to vector<8x32xf32>
    %143 = arith.mulf %138, %142 : vector<8x32xf32>
    %144 = vector.broadcast %123 : vector<1x32xf32> to vector<8x32xf32>
    %145 = arith.mulf %143, %144 : vector<8x32xf32>
    %146 = vector.broadcast %125 : vector<1x32xf32> to vector<8x32xf32>
    %147 = arith.addf %145, %146 : vector<8x32xf32>
    %c0_65 = arith.constant 0 : index
    %c0_66 = arith.constant 0 : index
    %c0_67 = arith.constant 0 : index
    %148 = vector.load %arg11[%c0_65, %c0_66, %c0_67] : memref<2x32x64xf32, #tpu.memory_space<vmem>>, vector<1x32x64xf32>
    %149 = vector.shape_cast %148 : vector<1x32x64xf32> to vector<32x64xf32>
    %cst_68 = arith.constant dense<0.000000e+00> : vector<8x64xf32>
    %150 = tpu.matmul %147, %149, %cst_68 {dimension_numbers = #tpu.dot_dimension_numbers<[1], [0], [0], [1], [0, 0, 1, 1], [], []>} : vector<8x32xf32>, vector<32x64xf32>, vector<8x64xf32> -> vector<8x64xf32>
    %c0_69 = arith.constant 0 : index
    %c0_70 = arith.constant 0 : index
    %c0_71 = arith.constant 0 : index
    %151 = vector.load %arg12[%c0_69, %c0_70, %c0_71] : memref<2x1x64xf32, #tpu.memory_space<vmem>>, vector<1x1x64xf32>
    %152 = vector.shape_cast %151 : vector<1x1x64xf32> to vector<1x64xf32>
    %153 = vector.broadcast %152 : vector<1x64xf32> to vector<8x64xf32>
    %154 = arith.addf %150, %153 : vector<8x64xf32>
    %cst_72 = arith.constant 5.000000e-01 : f32
    %155 = vector.broadcast %cst_72 : f32 to vector<8x64xf32>
    %156 = arith.mulf %155, %154 : vector<8x64xf32>
    %cst_73 = arith.constant 0.707106769 : f32
    %157 = vector.broadcast %cst_73 : f32 to vector<8x64xf32>
    %158 = arith.mulf %154, %157 : vector<8x64xf32>
    %159 = math.erf %158 : vector<8x64xf32>
    %cst_74 = arith.constant 1.000000e+00 : f32
    %160 = vector.broadcast %cst_74 : f32 to vector<8x64xf32>
    %161 = arith.addf %160, %159 : vector<8x64xf32>
    %162 = arith.mulf %156, %161 : vector<8x64xf32>
    %c0_75 = arith.constant 0 : index
    %c0_76 = arith.constant 0 : index
    %c0_77 = arith.constant 0 : index
    %163 = vector.load %arg13[%c0_75, %c0_76, %c0_77] : memref<2x64x32xf32, #tpu.memory_space<vmem>>, vector<1x64x32xf32>
    %164 = vector.shape_cast %163 : vector<1x64x32xf32> to vector<64x32xf32>
    %cst_78 = arith.constant dense<0.000000e+00> : vector<8x32xf32>
    %165 = tpu.matmul %162, %164, %cst_78 {dimension_numbers = #tpu.dot_dimension_numbers<[1], [0], [0], [1], [0, 0, 1, 1], [], []>} : vector<8x64xf32>, vector<64x32xf32>, vector<8x32xf32> -> vector<8x32xf32>
    %c0_79 = arith.constant 0 : index
    %c0_80 = arith.constant 0 : index
    %c0_81 = arith.constant 0 : index
    %166 = vector.load %arg14[%c0_79, %c0_80, %c0_81] : memref<2x1x32xf32, #tpu.memory_space<vmem>>, vector<1x1x32xf32>
    %167 = vector.shape_cast %166 : vector<1x1x32xf32> to vector<1x32xf32>
    %168 = vector.broadcast %167 : vector<1x32xf32> to vector<8x32xf32>
    %169 = arith.addf %165, %168 : vector<8x32xf32>
    %170 = arith.addf %169, %147 : vector<8x32xf32>
    %c0_82 = arith.constant 0 : index
    %c0_83 = arith.constant 0 : index
    %c0_84 = arith.constant 0 : index
    %171 = vector.load %arg15[%c0_82, %c0_83, %c0_84] : memref<2x1x32xf32, #tpu.memory_space<vmem>>, vector<1x1x32xf32>
    %172 = vector.shape_cast %171 : vector<1x1x32xf32> to vector<1x32xf32>
    %c0_85 = arith.constant 0 : index
    %c0_86 = arith.constant 0 : index
    %c0_87 = arith.constant 0 : index
    %173 = vector.load %arg16[%c0_85, %c0_86, %c0_87] : memref<2x1x32xf32, #tpu.memory_space<vmem>>, vector<1x1x32xf32>
    %174 = vector.shape_cast %173 : vector<1x1x32xf32> to vector<1x32xf32>
    %cst_88 = arith.constant dense<0.000000e+00> : vector<8xf32>
    %175 = vector.multi_reduction <add>, %170, %cst_88 [1] : vector<8x32xf32> to vector<8xf32>
    %176 = vector.shape_cast %175 : vector<8xf32> to vector<8x1xf32>
    %cst_89 = arith.constant 3.200000e+01 : f32
    %177 = vector.broadcast %cst_89 : f32 to vector<8x1xf32>
    %178 = arith.divf %176, %177 : vector<8x1xf32>
    %179 = vector.broadcast %178 : vector<8x1xf32> to vector<8x32xf32>
    %180 = arith.subf %170, %179 : vector<8x32xf32>
    %181 = arith.mulf %180, %180 : vector<8x32xf32>
    %cst_90 = arith.constant dense<0.000000e+00> : vector<8xf32>
    %182 = vector.multi_reduction <add>, %181, %cst_90 [1] : vector<8x32xf32> to vector<8xf32>
    %183 = vector.shape_cast %182 : vector<8xf32> to vector<8x1xf32>
    %cst_91 = arith.constant 3.200000e+01 : f32
    %184 = vector.broadcast %cst_91 : f32 to vector<8x1xf32>
    %185 = arith.divf %183, %184 : vector<8x1xf32>
    %186 = vector.broadcast %178 : vector<8x1xf32> to vector<8x32xf32>
    %187 = arith.subf %170, %186 : vector<8x32xf32>
    %cst_92 = arith.constant 9.99999996E-13 : f32
    %188 = vector.broadcast %cst_92 : f32 to vector<8x1xf32>
    %189 = arith.addf %185, %188 : vector<8x1xf32>
    %190 = math.rsqrt %189 : vector<8x1xf32>
    %191 = vector.broadcast %190 : vector<8x1xf32> to vector<8x32xf32>
    %192 = arith.mulf %187, %191 : vector<8x32xf32>
    %193 = vector.broadcast %172 : vector<1x32xf32> to vector<8x32xf32>
    %194 = arith.mulf %192, %193 : vector<8x32xf32>
    %195 = vector.broadcast %174 : vector<1x32xf32> to vector<8x32xf32>
    %196 = arith.addf %194, %195 : vector<8x32xf32>
    %c1 = arith.constant 1 : index
    %c0_93 = arith.constant 0 : index
    %c0_94 = arith.constant 0 : index
    %197 = vector.load %arg5[%c1, %c0_93, %c0_94] : memref<2x32x96xf32, #tpu.memory_space<vmem>>, vector<1x32x96xf32>
    %198 = vector.shape_cast %197 : vector<1x32x96xf32> to vector<32x96xf32>
    %cst_95 = arith.constant dense<0.000000e+00> : vector<8x96xf32>
    %199 = tpu.matmul %196, %198, %cst_95 {dimension_numbers = #tpu.dot_dimension_numbers<[1], [0], [0], [1], [0, 0, 1, 1], [], []>} : vector<8x32xf32>, vector<32x96xf32>, vector<8x96xf32> -> vector<8x96xf32>
    %c1_96 = arith.constant 1 : index
    %c0_97 = arith.constant 0 : index
    %c0_98 = arith.constant 0 : index
    %200 = vector.load %arg6[%c1_96, %c0_97, %c0_98] : memref<2x1x96xf32, #tpu.memory_space<vmem>>, vector<1x1x96xf32>
    %201 = vector.shape_cast %200 : vector<1x1x96xf32> to vector<1x96xf32>
    %202 = vector.broadcast %201 : vector<1x96xf32> to vector<8x96xf32>
    %203 = arith.addf %199, %202 : vector<8x96xf32>
    %204 = vector.extract_strided_slice %203 {offsets = [0, 0], sizes = [8, 8], strides = [1, 1]} : vector<8x96xf32> to vector<8x8xf32>
    %205 = vector.extract_strided_slice %203 {offsets = [0, 32], sizes = [8, 8], strides = [1, 1]} : vector<8x96xf32> to vector<8x8xf32>
    %206 = vector.extract_strided_slice %203 {offsets = [0, 64], sizes = [8, 8], strides = [1, 1]} : vector<8x96xf32> to vector<8x8xf32>
    %cst_99 = arith.constant dense<0.000000e+00> : vector<8x8xf32>
    %207 = tpu.matmul %204, %205, %cst_99 {dimension_numbers = #tpu.dot_dimension_numbers<[1], [1], [0], [0], [0, 0, 1, 0], [], []>} : vector<8x8xf32>, vector<8x8xf32>, vector<8x8xf32> -> vector<8x8xf32>
    %cst_100 = arith.constant 0.353553385 : f32
    %208 = vector.broadcast %cst_100 : f32 to vector<8x8xf32>
    %209 = arith.mulf %207, %208 : vector<8x8xf32>
    %210 = arith.addf %209, %5 : vector<8x8xf32>
    %cst_101 = arith.constant dense<0xFF800000> : vector<8xf32>
    %211 = vector.multi_reduction <maximumf>, %210, %cst_101 [1] : vector<8x8xf32> to vector<8xf32>
    %212 = vector.shape_cast %211 : vector<8xf32> to vector<8x1xf32>
    %213 = vector.broadcast %212 : vector<8x1xf32> to vector<8x8xf32>
    %214 = arith.subf %210, %213 : vector<8x8xf32>
    %215 = math.exp %214 : vector<8x8xf32>
    %cst_102 = arith.constant dense<0.000000e+00> : vector<8xf32>
    %216 = vector.multi_reduction <add>, %215, %cst_102 [1] : vector<8x8xf32> to vector<8xf32>
    %217 = vector.shape_cast %216 : vector<8xf32> to vector<8x1xf32>
    %218 = tpu.reciprocal %217 {approx = true} : vector<8x1xf32> -> vector<8x1xf32>
    %219 = vector.broadcast %218 : vector<8x1xf32> to vector<8x8xf32>
    %220 = arith.mulf %215, %219 : vector<8x8xf32>
    %221 = vector.extract_strided_slice %220 {offsets = [0, 0], sizes = [1, 8], strides = [1, 1]} : vector<8x8xf32> to vector<1x8xf32>
    %cst_103 = arith.constant dense<0.000000e+00> : vector<8x8xf32>
    %222 = tpu.matmul %220, %206, %cst_103 {dimension_numbers = #tpu.dot_dimension_numbers<[1], [0], [0], [1], [0, 0, 1, 1], [], []>} : vector<8x8xf32>, vector<8x8xf32>, vector<8x8xf32> -> vector<8x8xf32>
    %c0_104 = arith.constant 0 : index
    %c0_105 = arith.constant 0 : index
    %223 = vector.load %arg19[%c0_104, %c0_105] : memref<8x32xf32, #tpu.memory_space<vmem>>, vector<8x8xf32>
    tpu.vector_store %arg19[%c0_104, %c0_105], %222 {strides = array<i32>} : memref<8x32xf32, #tpu.memory_space<vmem>>, vector<8x8xf32>,
    %224 = vector.extract_strided_slice %203 {offsets = [0, 8], sizes = [8, 8], strides = [1, 1]} : vector<8x96xf32> to vector<8x8xf32>
    %225 = vector.extract_strided_slice %203 {offsets = [0, 40], sizes = [8, 8], strides = [1, 1]} : vector<8x96xf32> to vector<8x8xf32>
    %226 = vector.extract_strided_slice %203 {offsets = [0, 72], sizes = [8, 8], strides = [1, 1]} : vector<8x96xf32> to vector<8x8xf32>
    %cst_106 = arith.constant dense<0.000000e+00> : vector<8x8xf32>
    %227 = tpu.matmul %224, %225, %cst_106 {dimension_numbers = #tpu.dot_dimension_numbers<[1], [1], [0], [0], [0, 0, 1, 0], [], []>} : vector<8x8xf32>, vector<8x8xf32>, vector<8x8xf32> -> vector<8x8xf32>
    %cst_107 = arith.constant 0.353553385 : f32
    %228 = vector.broadcast %cst_107 : f32 to vector<8x8xf32>
    %229 = arith.mulf %227, %228 : vector<8x8xf32>
    %230 = arith.addf %229, %5 : vector<8x8xf32>
    %cst_108 = arith.constant dense<0xFF800000> : vector<8xf32>
    %231 = vector.multi_reduction <maximumf>, %230, %cst_108 [1] : vector<8x8xf32> to vector<8xf32>
    %232 = vector.shape_cast %231 : vector<8xf32> to vector<8x1xf32>
    %233 = vector.broadcast %232 : vector<8x1xf32> to vector<8x8xf32>
    %234 = arith.subf %230, %233 : vector<8x8xf32>
    %235 = math.exp %234 : vector<8x8xf32>
    %cst_109 = arith.constant dense<0.000000e+00> : vector<8xf32>
    %236 = vector.multi_reduction <add>, %235, %cst_109 [1] : vector<8x8xf32> to vector<8xf32>
    %237 = vector.shape_cast %236 : vector<8xf32> to vector<8x1xf32>
    %238 = tpu.reciprocal %237 {approx = true} : vector<8x1xf32> -> vector<8x1xf32>
    %239 = vector.broadcast %238 : vector<8x1xf32> to vector<8x8xf32>
    %240 = arith.mulf %235, %239 : vector<8x8xf32>
    %241 = vector.extract_strided_slice %240 {offsets = [0, 0], sizes = [1, 8], strides = [1, 1]} : vector<8x8xf32> to vector<1x8xf32>
    %cst_110 = arith.constant dense<0.000000e+00> : vector<8x8xf32>
    %242 = tpu.matmul %240, %226, %cst_110 {dimension_numbers = #tpu.dot_dimension_numbers<[1], [0], [0], [1], [0, 0, 1, 1], [], []>} : vector<8x8xf32>, vector<8x8xf32>, vector<8x8xf32> -> vector<8x8xf32>
    %c0_111 = arith.constant 0 : index
    %c8_112 = arith.constant 8 : index
    %243 = vector.load %arg19[%c0_111, %c8_112] : memref<8x32xf32, #tpu.memory_space<vmem>>, vector<8x8xf32>
    tpu.vector_store %arg19[%c0_111, %c8_112], %242 {strides = array<i32>} : memref<8x32xf32, #tpu.memory_space<vmem>>, vector<8x8xf32>,
    %244 = vector.extract_strided_slice %203 {offsets = [0, 16], sizes = [8, 8], strides = [1, 1]} : vector<8x96xf32> to vector<8x8xf32>
    %245 = vector.extract_strided_slice %203 {offsets = [0, 48], sizes = [8, 8], strides = [1, 1]} : vector<8x96xf32> to vector<8x8xf32>
    %246 = vector.extract_strided_slice %203 {offsets = [0, 80], sizes = [8, 8], strides = [1, 1]} : vector<8x96xf32> to vector<8x8xf32>
    %cst_113 = arith.constant dense<0.000000e+00> : vector<8x8xf32>
    %247 = tpu.matmul %244, %245, %cst_113 {dimension_numbers = #tpu.dot_dimension_numbers<[1], [1], [0], [0], [0, 0, 1, 0], [], []>} : vector<8x8xf32>, vector<8x8xf32>, vector<8x8xf32> -> vector<8x8xf32>
    %cst_114 = arith.constant 0.353553385 : f32
    %248 = vector.broadcast %cst_114 : f32 to vector<8x8xf32>
    %249 = arith.mulf %247, %248 : vector<8x8xf32>
    %250 = arith.addf %249, %5 : vector<8x8xf32>
    %cst_115 = arith.constant dense<0xFF800000> : vector<8xf32>
    %251 = vector.multi_reduction <maximumf>, %250, %cst_115 [1] : vector<8x8xf32> to vector<8xf32>
    %252 = vector.shape_cast %251 : vector<8xf32> to vector<8x1xf32>
    %253 = vector.broadcast %252 : vector<8x1xf32> to vector<8x8xf32>
    %254 = arith.subf %250, %253 : vector<8x8xf32>
    %255 = math.exp %254 : vector<8x8xf32>
    %cst_116 = arith.constant dense<0.000000e+00> : vector<8xf32>
    %256 = vector.multi_reduction <add>, %255, %cst_116 [1] : vector<8x8xf32> to vector<8xf32>
    %257 = vector.shape_cast %256 : vector<8xf32> to vector<8x1xf32>
    %258 = tpu.reciprocal %257 {approx = true} : vector<8x1xf32> -> vector<8x1xf32>
    %259 = vector.broadcast %258 : vector<8x1xf32> to vector<8x8xf32>
    %260 = arith.mulf %255, %259 : vector<8x8xf32>
    %261 = vector.extract_strided_slice %260 {offsets = [0, 0], sizes = [1, 8], strides = [1, 1]} : vector<8x8xf32> to vector<1x8xf32>
    %cst_117 = arith.constant dense<0.000000e+00> : vector<8x8xf32>
    %262 = tpu.matmul %260, %246, %cst_117 {dimension_numbers = #tpu.dot_dimension_numbers<[1], [0], [0], [1], [0, 0, 1, 1], [], []>} : vector<8x8xf32>, vector<8x8xf32>, vector<8x8xf32> -> vector<8x8xf32>
    %c0_118 = arith.constant 0 : index
    %c16_119 = arith.constant 16 : index
    %263 = vector.load %arg19[%c0_118, %c16_119] : memref<8x32xf32, #tpu.memory_space<vmem>>, vector<8x8xf32>
    tpu.vector_store %arg19[%c0_118, %c16_119], %262 {strides = array<i32>} : memref<8x32xf32, #tpu.memory_space<vmem>>, vector<8x8xf32>,
    %264 = vector.extract_strided_slice %203 {offsets = [0, 24], sizes = [8, 8], strides = [1, 1]} : vector<8x96xf32> to vector<8x8xf32>
    %265 = vector.extract_strided_slice %203 {offsets = [0, 56], sizes = [8, 8], strides = [1, 1]} : vector<8x96xf32> to vector<8x8xf32>
    %266 = vector.extract_strided_slice %203 {offsets = [0, 88], sizes = [8, 8], strides = [1, 1]} : vector<8x96xf32> to vector<8x8xf32>
    %cst_120 = arith.constant dense<0.000000e+00> : vector<8x8xf32>
    %267 = tpu.matmul %264, %265, %cst_120 {dimension_numbers = #tpu.dot_dimension_numbers<[1], [1], [0], [0], [0, 0, 1, 0], [], []>} : vector<8x8xf32>, vector<8x8xf32>, vector<8x8xf32> -> vector<8x8xf32>
    %cst_121 = arith.constant 0.353553385 : f32
    %268 = vector.broadcast %cst_121 : f32 to vector<8x8xf32>
    %269 = arith.mulf %267, %268 : vector<8x8xf32>
    %270 = arith.addf %269, %5 : vector<8x8xf32>
    %cst_122 = arith.constant dense<0xFF800000> : vector<8xf32>
    %271 = vector.multi_reduction <maximumf>, %270, %cst_122 [1] : vector<8x8xf32> to vector<8xf32>
    %272 = vector.shape_cast %271 : vector<8xf32> to vector<8x1xf32>
    %273 = vector.broadcast %272 : vector<8x1xf32> to vector<8x8xf32>
    %274 = arith.subf %270, %273 : vector<8x8xf32>
    %275 = math.exp %274 : vector<8x8xf32>
    %cst_123 = arith.constant dense<0.000000e+00> : vector<8xf32>
    %276 = vector.multi_reduction <add>, %275, %cst_123 [1] : vector<8x8xf32> to vector<8xf32>
    %277 = vector.shape_cast %276 : vector<8xf32> to vector<8x1xf32>
    %278 = tpu.reciprocal %277 {approx = true} : vector<8x1xf32> -> vector<8x1xf32>
    %279 = vector.broadcast %278 : vector<8x1xf32> to vector<8x8xf32>
    %280 = arith.mulf %275, %279 : vector<8x8xf32>
    %281 = vector.extract_strided_slice %280 {offsets = [0, 0], sizes = [1, 8], strides = [1, 1]} : vector<8x8xf32> to vector<1x8xf32>
    %cst_124 = arith.constant dense<0.000000e+00> : vector<8x8xf32>
    %282 = tpu.matmul %280, %266, %cst_124 {dimension_numbers = #tpu.dot_dimension_numbers<[1], [0], [0], [1], [0, 0, 1, 1], [], []>} : vector<8x8xf32>, vector<8x8xf32>, vector<8x8xf32> -> vector<8x8xf32>
    %c0_125 = arith.constant 0 : index
    %c24_126 = arith.constant 24 : index
    %283 = vector.load %arg19[%c0_125, %c24_126] : memref<8x32xf32, #tpu.memory_space<vmem>>, vector<8x8xf32>
    tpu.vector_store %arg19[%c0_125, %c24_126], %282 {strides = array<i32>} : memref<8x32xf32, #tpu.memory_space<vmem>>, vector<8x8xf32>,
    %284 = arith.addf %221, %241 : vector<1x8xf32>
    %285 = arith.addf %284, %261 : vector<1x8xf32>
    %286 = arith.addf %285, %281 : vector<1x8xf32>
    %cst_127 = arith.constant 2.500000e-01 : f32
    %287 = vector.broadcast %cst_127 : f32 to vector<1x8xf32>
    %288 = arith.mulf %286, %287 : vector<1x8xf32>
    %c0_128 = arith.constant 0 : index
    %c0_129 = arith.constant 0 : index
    %c0_130 = arith.constant 0 : index
    %289 = vector.load %arg18[%c0_128, %c0_129, %c0_130] : memref<1x1x8xf32, #tpu.memory_space<vmem>>, vector<1x1x8xf32>
    %290 = vector.shape_cast %289 : vector<1x1x8xf32> to vector<1x8xf32>
    %291 = vector.shape_cast %288 : vector<1x8xf32> to vector<1x1x8xf32>
    tpu.vector_store %arg18[%c0_128, %c0_129, %c0_130], %291 {strides = array<i32>} : memref<1x1x8xf32, #tpu.memory_space<vmem>>, vector<1x1x8xf32>,
    %c0_131 = arith.constant 0 : index
    %c0_132 = arith.constant 0 : index
    %292 = vector.load %arg19[%c0_131, %c0_132] : memref<8x32xf32, #tpu.memory_space<vmem>>, vector<8x32xf32>
    %c1_133 = arith.constant 1 : index
    %c0_134 = arith.constant 0 : index
    %c0_135 = arith.constant 0 : index
    %293 = vector.load %arg7[%c1_133, %c0_134, %c0_135] : memref<2x32x32xf32, #tpu.memory_space<vmem>>, vector<1x32x32xf32>
    %294 = vector.shape_cast %293 : vector<1x32x32xf32> to vector<32x32xf32>
    %cst_136 = arith.constant dense<0.000000e+00> : vector<8x32xf32>
    %295 = tpu.matmul %292, %294, %cst_136 {dimension_numbers = #tpu.dot_dimension_numbers<[1], [0], [0], [1], [0, 0, 1, 1], [], []>} : vector<8x32xf32>, vector<32x32xf32>, vector<8x32xf32> -> vector<8x32xf32>
    %c1_137 = arith.constant 1 : index
    %c0_138 = arith.constant 0 : index
    %c0_139 = arith.constant 0 : index
    %296 = vector.load %arg8[%c1_137, %c0_138, %c0_139] : memref<2x1x32xf32, #tpu.memory_space<vmem>>, vector<1x1x32xf32>
    %297 = vector.shape_cast %296 : vector<1x1x32xf32> to vector<1x32xf32>
    %298 = vector.broadcast %297 : vector<1x32xf32> to vector<8x32xf32>
    %299 = arith.addf %295, %298 : vector<8x32xf32>
    %300 = arith.addf %299, %196 : vector<8x32xf32>
    %c1_140 = arith.constant 1 : index
    %c0_141 = arith.constant 0 : index
    %c0_142 = arith.constant 0 : index
    %301 = vector.load %arg9[%c1_140, %c0_141, %c0_142] : memref<2x1x32xf32, #tpu.memory_space<vmem>>, vector<1x1x32xf32>
    %302 = vector.shape_cast %301 : vector<1x1x32xf32> to vector<1x32xf32>
    %c1_143 = arith.constant 1 : index
    %c0_144 = arith.constant 0 : index
    %c0_145 = arith.constant 0 : index
    %303 = vector.load %arg10[%c1_143, %c0_144, %c0_145] : memref<2x1x32xf32, #tpu.memory_space<vmem>>, vector<1x1x32xf32>
    %304 = vector.shape_cast %303 : vector<1x1x32xf32> to vector<1x32xf32>
    %cst_146 = arith.constant dense<0.000000e+00> : vector<8xf32>
    %305 = vector.multi_reduction <add>, %300, %cst_146 [1] : vector<8x32xf32> to vector<8xf32>
    %306 = vector.shape_cast %305 : vector<8xf32> to vector<8x1xf32>
    %cst_147 = arith.constant 3.200000e+01 : f32
    %307 = vector.broadcast %cst_147 : f32 to vector<8x1xf32>
    %308 = arith.divf %306, %307 : vector<8x1xf32>
    %309 = vector.broadcast %308 : vector<8x1xf32> to vector<8x32xf32>
    %310 = arith.subf %300, %309 : vector<8x32xf32>
    %311 = arith.mulf %310, %310 : vector<8x32xf32>
    %cst_148 = arith.constant dense<0.000000e+00> : vector<8xf32>
    %312 = vector.multi_reduction <add>, %311, %cst_148 [1] : vector<8x32xf32> to vector<8xf32>
    %313 = vector.shape_cast %312 : vector<8xf32> to vector<8x1xf32>
    %cst_149 = arith.constant 3.200000e+01 : f32
    %314 = vector.broadcast %cst_149 : f32 to vector<8x1xf32>
    %315 = arith.divf %313, %314 : vector<8x1xf32>
    %316 = vector.broadcast %308 : vector<8x1xf32> to vector<8x32xf32>
    %317 = arith.subf %300, %316 : vector<8x32xf32>
    %cst_150 = arith.constant 9.99999996E-13 : f32
    %318 = vector.broadcast %cst_150 : f32 to vector<8x1xf32>
    %319 = arith.addf %315, %318 : vector<8x1xf32>
    %320 = math.rsqrt %319 : vector<8x1xf32>
    %321 = vector.broadcast %320 : vector<8x1xf32> to vector<8x32xf32>
    %322 = arith.mulf %317, %321 : vector<8x32xf32>
    %323 = vector.broadcast %302 : vector<1x32xf32> to vector<8x32xf32>
    %324 = arith.mulf %322, %323 : vector<8x32xf32>
    %325 = vector.broadcast %304 : vector<1x32xf32> to vector<8x32xf32>
    %326 = arith.addf %324, %325 : vector<8x32xf32>
    %c1_151 = arith.constant 1 : index
    %c0_152 = arith.constant 0 : index
    %c0_153 = arith.constant 0 : index
    %327 = vector.load %arg11[%c1_151, %c0_152, %c0_153] : memref<2x32x64xf32, #tpu.memory_space<vmem>>, vector<1x32x64xf32>
    %328 = vector.shape_cast %327 : vector<1x32x64xf32> to vector<32x64xf32>
    %cst_154 = arith.constant dense<0.000000e+00> : vector<8x64xf32>
    %329 = tpu.matmul %326, %328, %cst_154 {dimension_numbers = #tpu.dot_dimension_numbers<[1], [0], [0], [1], [0, 0, 1, 1], [], []>} : vector<8x32xf32>, vector<32x64xf32>, vector<8x64xf32> -> vector<8x64xf32>
    %c1_155 = arith.constant 1 : index
    %c0_156 = arith.constant 0 : index
    %c0_157 = arith.constant 0 : index
    %330 = vector.load %arg12[%c1_155, %c0_156, %c0_157] : memref<2x1x64xf32, #tpu.memory_space<vmem>>, vector<1x1x64xf32>
    %331 = vector.shape_cast %330 : vector<1x1x64xf32> to vector<1x64xf32>
    %332 = vector.broadcast %331 : vector<1x64xf32> to vector<8x64xf32>
    %333 = arith.addf %329, %332 : vector<8x64xf32>
    %cst_158 = arith.constant 5.000000e-01 : f32
    %334 = vector.broadcast %cst_158 : f32 to vector<8x64xf32>
    %335 = arith.mulf %334, %333 : vector<8x64xf32>
    %cst_159 = arith.constant 0.707106769 : f32
    %336 = vector.broadcast %cst_159 : f32 to vector<8x64xf32>
    %337 = arith.mulf %333, %336 : vector<8x64xf32>
    %338 = math.erf %337 : vector<8x64xf32>
    %cst_160 = arith.constant 1.000000e+00 : f32
    %339 = vector.broadcast %cst_160 : f32 to vector<8x64xf32>
    %340 = arith.addf %339, %338 : vector<8x64xf32>
    %341 = arith.mulf %335, %340 : vector<8x64xf32>
    %c1_161 = arith.constant 1 : index
    %c0_162 = arith.constant 0 : index
    %c0_163 = arith.constant 0 : index
    %342 = vector.load %arg13[%c1_161, %c0_162, %c0_163] : memref<2x64x32xf32, #tpu.memory_space<vmem>>, vector<1x64x32xf32>
    %343 = vector.shape_cast %342 : vector<1x64x32xf32> to vector<64x32xf32>
    %cst_164 = arith.constant dense<0.000000e+00> : vector<8x32xf32>
    %344 = tpu.matmul %341, %343, %cst_164 {dimension_numbers = #tpu.dot_dimension_numbers<[1], [0], [0], [1], [0, 0, 1, 1], [], []>} : vector<8x64xf32>, vector<64x32xf32>, vector<8x32xf32> -> vector<8x32xf32>
    %c1_165 = arith.constant 1 : index
    %c0_166 = arith.constant 0 : index
    %c0_167 = arith.constant 0 : index
    %345 = vector.load %arg14[%c1_165, %c0_166, %c0_167] : memref<2x1x32xf32, #tpu.memory_space<vmem>>, vector<1x1x32xf32>
    %346 = vector.shape_cast %345 : vector<1x1x32xf32> to vector<1x32xf32>
    %347 = vector.broadcast %346 : vector<1x32xf32> to vector<8x32xf32>
    %348 = arith.addf %344, %347 : vector<8x32xf32>
    %349 = arith.addf %348, %326 : vector<8x32xf32>
    %c1_168 = arith.constant 1 : index
    %c0_169 = arith.constant 0 : index
    %c0_170 = arith.constant 0 : index
    %350 = vector.load %arg15[%c1_168, %c0_169, %c0_170] : memref<2x1x32xf32, #tpu.memory_space<vmem>>, vector<1x1x32xf32>
    %351 = vector.shape_cast %350 : vector<1x1x32xf32> to vector<1x32xf32>
    %c1_171 = arith.constant 1 : index
    %c0_172 = arith.constant 0 : index
    %c0_173 = arith.constant 0 : index
    %352 = vector.load %arg16[%c1_171, %c0_172, %c0_173] : memref<2x1x32xf32, #tpu.memory_space<vmem>>, vector<1x1x32xf32>
    %353 = vector.shape_cast %352 : vector<1x1x32xf32> to vector<1x32xf32>
    %cst_174 = arith.constant dense<0.000000e+00> : vector<8xf32>
    %354 = vector.multi_reduction <add>, %349, %cst_174 [1] : vector<8x32xf32> to vector<8xf32>
    %355 = vector.shape_cast %354 : vector<8xf32> to vector<8x1xf32>
    %cst_175 = arith.constant 3.200000e+01 : f32
    %356 = vector.broadcast %cst_175 : f32 to vector<8x1xf32>
    %357 = arith.divf %355, %356 : vector<8x1xf32>
    %358 = vector.broadcast %357 : vector<8x1xf32> to vector<8x32xf32>
    %359 = arith.subf %349, %358 : vector<8x32xf32>
    %360 = arith.mulf %359, %359 : vector<8x32xf32>
    %cst_176 = arith.constant dense<0.000000e+00> : vector<8xf32>
    %361 = vector.multi_reduction <add>, %360, %cst_176 [1] : vector<8x32xf32> to vector<8xf32>
    %362 = vector.shape_cast %361 : vector<8xf32> to vector<8x1xf32>
    %cst_177 = arith.constant 3.200000e+01 : f32
    %363 = vector.broadcast %cst_177 : f32 to vector<8x1xf32>
    %364 = arith.divf %362, %363 : vector<8x1xf32>
    %365 = vector.broadcast %357 : vector<8x1xf32> to vector<8x32xf32>
    %366 = arith.subf %349, %365 : vector<8x32xf32>
    %cst_178 = arith.constant 9.99999996E-13 : f32
    %367 = vector.broadcast %cst_178 : f32 to vector<8x1xf32>
    %368 = arith.addf %364, %367 : vector<8x1xf32>
    %369 = math.rsqrt %368 : vector<8x1xf32>
    %370 = vector.broadcast %369 : vector<8x1xf32> to vector<8x32xf32>
    %371 = arith.mulf %366, %370 : vector<8x32xf32>
    %372 = vector.broadcast %351 : vector<1x32xf32> to vector<8x32xf32>
    %373 = arith.mulf %371, %372 : vector<8x32xf32>
    %374 = vector.broadcast %353 : vector<1x32xf32> to vector<8x32xf32>
    %375 = arith.addf %373, %374 : vector<8x32xf32>
    %c0_179 = arith.constant 0 : index
    %c0_180 = arith.constant 0 : index
    %c0_181 = arith.constant 0 : index
    %376 = vector.load %arg17[%c0_179, %c0_180, %c0_181] : memref<1x8x32xf32, #tpu.memory_space<vmem>>, vector<1x8x32xf32>
    %377 = vector.shape_cast %376 : vector<1x8x32xf32> to vector<8x32xf32>
    %378 = vector.shape_cast %375 : vector<8x32xf32> to vector<1x8x32xf32>
    tpu.vector_store %arg17[%c0_179, %c0_180, %c0_181], %378 {strides = array<i32>} : memref<1x8x32xf32, #tpu.memory_space<vmem>>, vector<1x8x32xf32>,
    return
  }
  func.func @transform_0(%arg0: i32) -> (i32, i32, i32) {
    %c0_i32 = arith.constant 0 : i32
    %c0_i32_0 = arith.constant 0 : i32
    %c0_i32_1 = arith.constant 0 : i32
    return %arg0, %c0_i32, %c0_i32_0 : i32, i32, i32
  }
  func.func @transform_1(%arg0: i32) -> (i32, i32, i32) {
    %c0_i32 = arith.constant 0 : i32
    %c0_i32_0 = arith.constant 0 : i32
    %c0_i32_1 = arith.constant 0 : i32
    return %arg0, %c0_i32, %c0_i32_0 : i32, i32, i32
  }
  func.func @transform_2(%arg0: i32) -> (i32, i32) {
    %c0_i32 = arith.constant 0 : i32
    %c0_i32_0 = arith.constant 0 : i32
    %c0_i32_1 = arith.constant 0 : i32
    return %c0_i32, %c0_i32_0 : i32, i32
  }
  func.func @transform_3(%arg0: i32) -> (i32, i32) {
    %c0_i32 = arith.constant 0 : i32
    %c0_i32_0 = arith.constant 0 : i32
    %c0_i32_1 = arith.constant 0 : i32
    return %c0_i32, %c0_i32_0 : i32, i32
  }
  func.func @transform_4(%arg0: i32) -> (i32, i32, i32) {
    %c0_i32 = arith.constant 0 : i32
    %c0_i32_0 = arith.constant 0 : i32
    %c0_i32_1 = arith.constant 0 : i32
    %c0_i32_2 = arith.constant 0 : i32
    return %c0_i32, %c0_i32_0, %c0_i32_1 : i32, i32, i32
  }
  func.func @transform_5(%arg0: i32) -> (i32, i32, i32) {
    %c0_i32 = arith.constant 0 : i32
    %c0_i32_0 = arith.constant 0 : i32
    %c0_i32_1 = arith.constant 0 : i32
    %c0_i32_2 = arith.constant 0 : i32
    return %c0_i32, %c0_i32_0, %c0_i32_1 : i32, i32, i32
  }
  func.func @transform_6(%arg0: i32) -> (i32, i32, i32) {
    %c0_i32 = arith.constant 0 : i32
    %c0_i32_0 = arith.constant 0 : i32
    %c0_i32_1 = arith.constant 0 : i32
    %c0_i32_2 = arith.constant 0 : i32
    return %c0_i32, %c0_i32_0, %c0_i32_1 : i32, i32, i32
  }
  func.func @transform_7(%arg0: i32) -> (i32, i32, i32) {
    %c0_i32 = arith.constant 0 : i32
    %c0_i32_0 = arith.constant 0 : i32
    %c0_i32_1 = arith.constant 0 : i32
    %c0_i32_2 = arith.constant 0 : i32
    return %c0_i32, %c0_i32_0, %c0_i32_1 : i32, i32, i32
  }
  func.func @transform_8(%arg0: i32) -> (i32, i32, i32) {
    %c0_i32 = arith.constant 0 : i32
    %c0_i32_0 = arith.constant 0 : i32
    %c0_i32_1 = arith.constant 0 : i32
    %c0_i32_2 = arith.constant 0 : i32
    return %c0_i32, %c0_i32_0, %c0_i32_1 : i32, i32, i32
  }
  func.func @transform_9(%arg0: i32) -> (i32, i32, i32) {
    %c0_i32 = arith.constant 0 : i32
    %c0_i32_0 = arith.constant 0 : i32
    %c0_i32_1 = arith.constant 0 : i32
    %c0_i32_2 = arith.constant 0 : i32
    return %c0_i32, %c0_i32_0, %c0_i32_1 : i32, i32, i32
  }
  func.func @transform_10(%arg0: i32) -> (i32, i32, i32) {
    %c0_i32 = arith.constant 0 : i32
    %c0_i32_0 = arith.constant 0 : i32
    %c0_i32_1 = arith.constant 0 : i32
    %c0_i32_2 = arith.constant 0 : i32
    return %c0_i32, %c0_i32_0, %c0_i32_1 : i32, i32, i32
  }
  func.func @transform_11(%arg0: i32) -> (i32, i32, i32) {
    %c0_i32 = arith.constant 0 : i32
    %c0_i32_0 = arith.constant 0 : i32
    %c0_i32_1 = arith.constant 0 : i32
    %c0_i32_2 = arith.constant 0 : i32
    return %c0_i32, %c0_i32_0, %c0_i32_1 : i32, i32, i32
  }
  func.func @transform_12(%arg0: i32) -> (i32, i32, i32) {
    %c0_i32 = arith.constant 0 : i32
    %c0_i32_0 = arith.constant 0 : i32
    %c0_i32_1 = arith.constant 0 : i32
    %c0_i32_2 = arith.constant 0 : i32
    return %c0_i32, %c0_i32_0, %c0_i32_1 : i32, i32, i32
  }
  func.func @transform_13(%arg0: i32) -> (i32, i32, i32) {
    %c0_i32 = arith.constant 0 : i32
    %c0_i32_0 = arith.constant 0 : i32
    %c0_i32_1 = arith.constant 0 : i32
    %c0_i32_2 = arith.constant 0 : i32
    return %c0_i32, %c0_i32_0, %c0_i32_1 : i32, i32, i32
  }
  func.func @transform_14(%arg0: i32) -> (i32, i32, i32) {
    %c0_i32 = arith.constant 0 : i32
    %c0_i32_0 = arith.constant 0 : i32
    %c0_i32_1 = arith.constant 0 : i32
    %c0_i32_2 = arith.constant 0 : i32
    return %c0_i32, %c0_i32_0, %c0_i32_1 : i32, i32, i32
  }
  func.func @transform_15(%arg0: i32) -> (i32, i32, i32) {
    %c0_i32 = arith.constant 0 : i32
    %c0_i32_0 = arith.constant 0 : i32
    %c0_i32_1 = arith.constant 0 : i32
    %c0_i32_2 = arith.constant 0 : i32
    return %c0_i32, %c0_i32_0, %c0_i32_1 : i32, i32, i32
  }
  func.func @transform_16(%arg0: i32) -> (i32, i32, i32) {
    %c0_i32 = arith.constant 0 : i32
    %c0_i32_0 = arith.constant 0 : i32
    %c0_i32_1 = arith.constant 0 : i32
    return %arg0, %c0_i32, %c0_i32_0 : i32, i32, i32
  }
  func.func @transform_17(%arg0: i32) -> (i32, i32, i32) {
    %c0_i32 = arith.constant 0 : i32
    %c0_i32_0 = arith.constant 0 : i32
    %c0_i32_1 = arith.constant 0 : i32
    return %arg0, %c0_i32, %c0_i32_0 : i32, i32, i32
  }
}

</mosaic_0001>

<llo_original>
// kernel: encode.1
$region0: #{encode.1}
  #allocation0 [shape = 'u32[]', space=smem, size = 0x4, offset = 0x4, fixed_abs, tag = 'smem constant byte address 0x4 - core index']
  #allocation1 [shape = 'u32[144,128]{1,0:T(1,128)}', space=vmem, size = 0x12000, scoped, tag = 'internal scratch']
  #allocation2 [shape = 'f32[8,32]{1,0:T(8,128)}', space=vmem, size = 0x1000, scoped, tag = 'scratch operand']
  %s0 = inlined_call_operand.vmem [shape: f32[2,8,32], index: 0, kind: input, shape index: {}]
  %s1 = inlined_call_operand.vmem [shape: f32[2,1,8], index: 1, kind: input, shape index: {}]
  %s2 = inlined_call_operand.vmem [shape: f32[1,32], index: 2, kind: input, shape index: {}]
  %s3 = inlined_call_operand.vmem [shape: f32[1,32], index: 3, kind: input, shape index: {}]
  %s4 = inlined_call_operand.vmem [shape: f32[2,32,96], index: 4, kind: input, shape index: {}]
  %s5 = inlined_call_operand.vmem [shape: f32[2,1,96], index: 5, kind: input, shape index: {}]
  %s6 = inlined_call_operand.vmem [shape: f32[2,32,32], index: 6, kind: input, shape index: {}]
  %s7 = inlined_call_operand.vmem [shape: f32[2,1,32], index: 7, kind: input, shape index: {}]
  %s8 = inlined_call_operand.vmem [shape: f32[2,1,32], index: 8, kind: input, shape index: {}]
  %s9 = inlined_call_operand.vmem [shape: f32[2,1,32], index: 9, kind: input, shape index: {}]
  %s10 = inlined_call_operand.vmem [shape: f32[2,32,64], index: 10, kind: input, shape index: {}]
  %s11 = inlined_call_operand.vmem [shape: f32[2,1,64], index: 11, kind: input, shape index: {}]
  %s12 = inlined_call_operand.vmem [shape: f32[2,64,32], index: 12, kind: input, shape index: {}]
  %s13 = inlined_call_operand.vmem [shape: f32[2,1,32], index: 13, kind: input, shape index: {}]
  %s14 = inlined_call_operand.vmem [shape: f32[2,1,32], index: 14, kind: input, shape index: {}]
  %s15 = inlined_call_operand.vmem [shape: f32[2,1,32], index: 15, kind: input, shape index: {}]
  %s16 = inlined_call_operand.hbm [shape: f32[2,8,32], index: 16, kind: output, shape index: {0}]
  %s17 = inlined_call_operand.vmem [shape: f32[2,1,8], index: 17, kind: output, shape index: {1}]
  %18 = xla_tuple %s16, %s17
  %s19 = sld [smem:[#allocation0]]
  $region105: #{encode.1} parent=0
    _
  %s21 = ssub.s32 1, %s19
  %s22 = scalar_select 0, %s21, %s19
  $region1: #{encode.1} parent=0
    #allocation3 [shape = 'u8[8192]{0}', space=vmem, size = 0x2000, scoped, tag = 'output window, operand 0']
    #allocation4 [shape = 's32[2]{0}', space=sflag, size = 0x8, scoped, tag = 'scoped memory for encode.1']
    %23 = vsyncpa [#allocation4], 0
    %s24 = scalar_lea.sflag [#allocation4], 1
    %25 = vsyncpa %s24, 0
    loop: start=0, step=1, limit=4
    $region2: #{encode.1} parent=1 // loop_pre_header
      _
    $region3: #{encode.1} parent=1 // loop_header
      %s27 = sphi 0, %s31
      %p28 = scmp.ge.s32.totalorder %s27, 4
      %s37 = sphi 0, %s39
      %s40 = sphi 0, %s37
      %s41 = sphi 0, %s40
      %s57 = sphi 0, %s41
      %s63 = sphi 0, %s65
      %s66 = sphi 0, %s63
      %s67 = sphi 0, %s66
      %s83 = sphi 0, %s67
      %s87 = sphi 0, %s87
      %s89 = sphi 0, %s87
      %s90 = sphi 0, %s89
      %s104 = sphi 0, %s90
      %s108 = sphi 0, %s108
      %s110 = sphi 0, %s108
      %s111 = sphi 0, %s110
      %s125 = sphi 0, %s111
      %s129 = sphi 0, %s129
      %s131 = sphi 0, %s129
      %s132 = sphi 0, %s131
      %s146 = sphi 0, %s132
      %s150 = sphi 0, %s150
      %s152 = sphi 0, %s150
      %s153 = sphi 0, %s152
      %s167 = sphi 0, %s153
      %s171 = sphi 0, %s171
      %s173 = sphi 0, %s171
      %s174 = sphi 0, %s173
      %s188 = sphi 0, %s174
      %s192 = sphi 0, %s192
      %s194 = sphi 0, %s192
      %s195 = sphi 0, %s194
      %s209 = sphi 0, %s195
      %s213 = sphi 0, %s213
      %s215 = sphi 0, %s213
      %s216 = sphi 0, %s215
      %s230 = sphi 0, %s216
      %s234 = sphi 0, %s234
      %s236 = sphi 0, %s234
      %s237 = sphi 0, %s236
      %s251 = sphi 0, %s237
      %s255 = sphi 0, %s255
      %s257 = sphi 0, %s255
      %s258 = sphi 0, %s257
      %s272 = sphi 0, %s258
      %s276 = sphi 0, %s276
      %s278 = sphi 0, %s276
      %s279 = sphi 0, %s278
      %s293 = sphi 0, %s279
      %s297 = sphi 0, %s297
      %s299 = sphi 0, %s297
      %s300 = sphi 0, %s299
      %s314 = sphi 0, %s300
      %s318 = sphi 0, %s318
      %s320 = sphi 0, %s318
      %s321 = sphi 0, %s320
      %s335 = sphi 0, %s321
      %s339 = sphi 0, %s339
      %s341 = sphi 0, %s339
      %s342 = sphi 0, %s341
      %s356 = sphi 0, %s342
      %s360 = sphi 0, %s360
      %s362 = sphi 0, %s360
      %s363 = sphi 0, %s362
      %s377 = sphi 0, %s363
      %s383 = sphi 0, %s385
      %s386 = sphi 0, %s383
      %s387 = sphi 0, %s386
      %s403 = sphi 0, %s387
      %s409 = sphi 0, %s411
      %s412 = sphi 0, %s409
      %s413 = sphi 0, %s412
      %s429 = sphi 0, %s413
    $region4: #{encode.1} parent=1 // loop_header_branch
      %30 = sbr.rel (%p28) target = $region8
    $region5: #{encode.1} parent=1 // loop_body
      %s32 = ssub.s32 %s27, 1
      %s33 = ssub.s32 %s27, 2
      %s34 = sadd.s32 %s27, 1
      %s35 = ssub.s32 %s27, %s34
      %p36 = scmp.eq.s32.totalorder %s35, 0
      %s38 = sadd.s32 %s37, 1
      %s39 = scalar_select %p36, %s37, %s38
      %p42 = pneg %p36
      %p43 = scmp.eq.s32.totalorder %s27, 1
      %p44 = por %p42, %p43
      %p45 = scmp.ne.s32.totalorder %s37, %s40
      %p46 = scmp.eq.s32.totalorder %s27, 0
      %p47 = por %p45, %p46
      %p48 = scmp.ne.s32.totalorder %s37, %s40
      %p49 = scmp.eq.s32.totalorder %s32, 1
      %p50 = por %p48, %p49
      %p51 = scmp.ne.s32.totalorder %s40, %s41
      %p52 = scmp.eq.s32.totalorder %s32, 0
      %p53 = por %p51, %p52
      %p54 = scmp.ne.s32.totalorder %s40, %s41
      %p55 = scmp.eq.s32.totalorder %s33, 1
      %p56 = por %p54, %p55
      %p58 = scmp.ne.s32.totalorder %s41, %s57
      %p59 = scmp.eq.s32.totalorder %s33, 0
      %p60 = por %p58, %p59
      %s61 = ssub.s32 %s27, %s34
      %p62 = scmp.eq.s32.totalorder %s61, 0
      %s64 = sadd.s32 %s63, 1
      %s65 = scalar_select %p62, %s63, %s64
      %p68 = pneg %p62
      %p69 = scmp.eq.s32.totalorder %s27, 1
      %p70 = por %p68, %p69
      %p71 = scmp.ne.s32.totalorder %s63, %s66
      %p72 = scmp.eq.s32.totalorder %s27, 0
      %p73 = por %p71, %p72
      %p74 = scmp.ne.s32.totalorder %s63, %s66
      %p75 = scmp.eq.s32.totalorder %s32, 1
      %p76 = por %p74, %p75
      %p77 = scmp.ne.s32.totalorder %s66, %s67
      %p78 = scmp.eq.s32.totalorder %s32, 0
      %p79 = por %p77, %p78
      %p80 = scmp.ne.s32.totalorder %s66, %s67
      %p81 = scmp.eq.s32.totalorder %s33, 1
      %p82 = por %p80, %p81
      %p84 = scmp.ne.s32.totalorder %s67, %s83
      %p85 = scmp.eq.s32.totalorder %s33, 0
      %p86 = por %p84, %p85
      %s88 = sadd.s32 %s87, 1
      %p91 = scmp.eq.s32.totalorder %s27, 1
      %p92 = scmp.ne.s32.totalorder %s87, %s89
      %p93 = scmp.eq.s32.totalorder %s27, 0
      %p94 = por %p92, %p93
      %p95 = scmp.ne.s32.totalorder %s87, %s89
      %p96 = scmp.eq.s32.totalorder %s32, 1
      %p97 = por %p95, %p96
      %p98 = scmp.ne.s32.totalorder %s89, %s90
      %p99 = scmp.eq.s32.totalorder %s32, 0
      %p100 = por %p98, %p99
      %p101 = scmp.ne.s32.totalorder %s89, %s90
      %p102 = scmp.eq.s32.totalorder %s33, 1
      %p103 = por %p101, %p102
      %p105 = scmp.ne.s32.totalorder %s90, %s104
      %p106 = scmp.eq.s32.totalorder %s33, 0
      %p107 = por %p105, %p106
      %s109 = sadd.s32 %s108, 1
      %p112 = scmp.eq.s32.totalorder %s27, 1
      %p113 = scmp.ne.s32.totalorder %s108, %s110
      %p114 = scmp.eq.s32.totalorder %s27, 0
      %p115 = por %p113, %p114
      %p116 = scmp.ne.s32.totalorder %s108, %s110
      %p117 = scmp.eq.s32.totalorder %s32, 1
      %p118 = por %p116, %p117
      %p119 = scmp.ne.s32.totalorder %s110, %s111
      %p120 = scmp.eq.s32.totalorder %s32, 0
      %p121 = por %p119, %p120
      %p122 = scmp.ne.s32.totalorder %s110, %s111
      %p123 = scmp.eq.s32.totalorder %s33, 1
      %p124 = por %p122, %p123
      %p126 = scmp.ne.s32.totalorder %s111, %s125
      %p127 = scmp.eq.s32.totalorder %s33, 0
      %p128 = por %p126, %p127
      %s130 = sadd.s32 %s129, 1
      %p133 = scmp.eq.s32.totalorder %s27, 1
      %p134 = scmp.ne.s32.totalorder %s129, %s131
      %p135 = scmp.eq.s32.totalorder %s27, 0
      %p136 = por %p134, %p135
      %p137 = scmp.ne.s32.totalorder %s129, %s131
      %p138 = scmp.eq.s32.totalorder %s32, 1
      %p139 = por %p137, %p138
      %p140 = scmp.ne.s32.totalorder %s131, %s132
      %p141 = scmp.eq.s32.totalorder %s32, 0
      %p142 = por %p140, %p141
      %p143 = scmp.ne.s32.totalorder %s131, %s132
      %p144 = scmp.eq.s32.totalorder %s33, 1
      %p145 = por %p143, %p144
      %p147 = scmp.ne.s32.totalorder %s132, %s146
      %p148 = scmp.eq.s32.totalorder %s33, 0
      %p149 = por %p147, %p148
      %s151 = sadd.s32 %s150, 1
      %p154 = scmp.eq.s32.totalorder %s27, 1
      %p155 = scmp.ne.s32.totalorder %s150, %s152
      %p156 = scmp.eq.s32.totalorder %s27, 0
      %p157 = por %p155, %p156
      %p158 = scmp.ne.s32.totalorder %s150, %s152
      %p159 = scmp.eq.s32.totalorder %s32, 1
      %p160 = por %p158, %p159
      %p161 = scmp.ne.s32.totalorder %s152, %s153
      %p162 = scmp.eq.s32.totalorder %s32, 0
      %p163 = por %p161, %p162
      %p164 = scmp.ne.s32.totalorder %s152, %s153
      %p165 = scmp.eq.s32.totalorder %s33, 1
      %p166 = por %p164, %p165
      %p168 = scmp.ne.s32.totalorder %s153, %s167
      %p169 = scmp.eq.s32.totalorder %s33, 0
      %p170 = por %p168, %p169
      %s172 = sadd.s32 %s171, 1
      %p175 = scmp.eq.s32.totalorder %s27, 1
      %p176 = scmp.ne.s32.totalorder %s171, %s173
      %p177 = scmp.eq.s32.totalorder %s27, 0
      %p178 = por %p176, %p177
      %p179 = scmp.ne.s32.totalorder %s171, %s173
      %p180 = scmp.eq.s32.totalorder %s32, 1
      %p181 = por %p179, %p180
      %p182 = scmp.ne.s32.totalorder %s173, %s174
      %p183 = scmp.eq.s32.totalorder %s32, 0
      %p184 = por %p182, %p183
      %p185 = scmp.ne.s32.totalorder %s173, %s174
      %p186 = scmp.eq.s32.totalorder %s33, 1
      %p187 = por %p185, %p186
      %p189 = scmp.ne.s32.totalorder %s174, %s188
      %p190 = scmp.eq.s32.totalorder %s33, 0
      %p191 = por %p189, %p190
      %s193 = sadd.s32 %s192, 1
      %p196 = scmp.eq.s32.totalorder %s27, 1
      %p197 = scmp.ne.s32.totalorder %s192, %s194
      %p198 = scmp.eq.s32.totalorder %s27, 0
      %p199 = por %p197, %p198
      %p200 = scmp.ne.s32.totalorder %s192, %s194
      %p201 = scmp.eq.s32.totalorder %s32, 1
      %p202 = por %p200, %p201
      %p203 = scmp.ne.s32.totalorder %s194, %s195
      %p204 = scmp.eq.s32.totalorder %s32, 0
      %p205 = por %p203, %p204
      %p206 = scmp.ne.s32.totalorder %s194, %s195
      %p207 = scmp.eq.s32.totalorder %s33, 1
      %p208 = por %p206, %p207
      %p210 = scmp.ne.s32.totalorder %s195, %s209
      %p211 = scmp.eq.s32.totalorder %s33, 0
      %p212 = por %p210, %p211
      %s214 = sadd.s32 %s213, 1
      %p217 = scmp.eq.s32.totalorder %s27, 1
      %p218 = scmp.ne.s32.totalorder %s213, %s215
      %p219 = scmp.eq.s32.totalorder %s27, 0
      %p220 = por %p218, %p219
      %p221 = scmp.ne.s32.totalorder %s213, %s215
      %p222 = scmp.eq.s32.totalorder %s32, 1
      %p223 = por %p221, %p222
      %p224 = scmp.ne.s32.totalorder %s215, %s216
      %p225 = scmp.eq.s32.totalorder %s32, 0
      %p226 = por %p224, %p225
      %p227 = scmp.ne.s32.totalorder %s215, %s216
      %p228 = scmp.eq.s32.totalorder %s33, 1
      %p229 = por %p227, %p228
      %p231 = scmp.ne.s32.totalorder %s216, %s230
      %p232 = scmp.eq.s32.totalorder %s33, 0
      %p233 = por %p231, %p232
      %s235 = sadd.s32 %s234, 1
      %p238 = scmp.eq.s32.totalorder %s27, 1
      %p239 = scmp.ne.s32.totalorder %s234, %s236
      %p240 = scmp.eq.s32.totalorder %s27, 0
      %p241 = por %p239, %p240
      %p242 = scmp.ne.s32.totalorder %s234, %s236
      %p243 = scmp.eq.s32.totalorder %s32, 1
      %p244 = por %p242, %p243
      %p245 = scmp.ne.s32.totalorder %s236, %s237
      %p246 = scmp.eq.s32.totalorder %s32, 0
      %p247 = por %p245, %p246
      %p248 = scmp.ne.s32.totalorder %s236, %s237
      %p249 = scmp.eq.s32.totalorder %s33, 1
      %p250 = por %p248, %p249
      %p252 = scmp.ne.s32.totalorder %s237, %s251
      %p253 = scmp.eq.s32.totalorder %s33, 0
      %p254 = por %p252, %p253
      %s256 = sadd.s32 %s255, 1
      %p259 = scmp.eq.s32.totalorder %s27, 1
      %p260 = scmp.ne.s32.totalorder %s255, %s257
      %p261 = scmp.eq.s32.totalorder %s27, 0
      %p262 = por %p260, %p261
      %p263 = scmp.ne.s32.totalorder %s255, %s257
      %p264 = scmp.eq.s32.totalorder %s32, 1
      %p265 = por %p263, %p264
      %p266 = scmp.ne.s32.totalorder %s257, %s258
      %p267 = scmp.eq.s32.totalorder %s32, 0
      %p268 = por %p266, %p267
      %p269 = scmp.ne.s32.totalorder %s257, %s258
      %p270 = scmp.eq.s32.totalorder %s33, 1
      %p271 = por %p269, %p270
      %p273 = scmp.ne.s32.totalorder %s258, %s272
      %p274 = scmp.eq.s32.totalorder %s33, 0
      %p275 = por %p273, %p274
      %s277 = sadd.s32 %s276, 1
      %p280 = scmp.eq.s32.totalorder %s27, 1
      %p281 = scmp.ne.s32.totalorder %s276, %s278
      %p282 = scmp.eq.s32.totalorder %s27, 0
      %p283 = por %p281, %p282
      %p284 = scmp.ne.s32.totalorder %s276, %s278
      %p285 = scmp.eq.s32.totalorder %s32, 1
      %p286 = por %p284, %p285
      %p287 = scmp.ne.s32.totalorder %s278, %s279
      %p288 = scmp.eq.s32.totalorder %s32, 0
      %p289 = por %p287, %p288
      %p290 = scmp.ne.s32.totalorder %s278, %s279
      %p291 = scmp.eq.s32.totalorder %s33, 1
      %p292 = por %p290, %p291
      %p294 = scmp.ne.s32.totalorder %s279, %s293
      %p295 = scmp.eq.s32.totalorder %s33, 0
      %p296 = por %p294, %p295
      %s298 = sadd.s32 %s297, 1
      %p301 = scmp.eq.s32.totalorder %s27, 1
      %p302 = scmp.ne.s32.totalorder %s297, %s299
      %p303 = scmp.eq.s32.totalorder %s27, 0
      %p304 = por %p302, %p303
      %p305 = scmp.ne.s32.totalorder %s297, %s299
      %p306 = scmp.eq.s32.totalorder %s32, 1
      %p307 = por %p305, %p306
      %p308 = scmp.ne.s32.totalorder %s299, %s300
      %p309 = scmp.eq.s32.totalorder %s32, 0
      %p310 = por %p308, %p309
      %p311 = scmp.ne.s32.totalorder %s299, %s300
      %p312 = scmp.eq.s32.totalorder %s33, 1
      %p313 = por %p311, %p312
      %p315 = scmp.ne.s32.totalorder %s300, %s314
      %p316 = scmp.eq.s32.totalorder %s33, 0
      %p317 = por %p315, %p316
      %s319 = sadd.s32 %s318, 1
      %p322 = scmp.eq.s32.totalorder %s27, 1
      %p323 = scmp.ne.s32.totalorder %s318, %s320
      %p324 = scmp.eq.s32.totalorder %s27, 0
      %p325 = por %p323, %p324
      %p326 = scmp.ne.s32.totalorder %s318, %s320
      %p327 = scmp.eq.s32.totalorder %s32, 1
      %p328 = por %p326, %p327
      %p329 = scmp.ne.s32.totalorder %s320, %s321
      %p330 = scmp.eq.s32.totalorder %s32, 0
      %p331 = por %p329, %p330
      %p332 = scmp.ne.s32.totalorder %s320, %s321
      %p333 = scmp.eq.s32.totalorder %s33, 1
      %p334 = por %p332, %p333
      %p336 = scmp.ne.s32.totalorder %s321, %s335
      %p337 = scmp.eq.s32.totalorder %s33, 0
      %p338 = por %p336, %p337
      %s340 = sadd.s32 %s339, 1
      %p343 = scmp.eq.s32.totalorder %s27, 1
      %p344 = scmp.ne.s32.totalorder %s339, %s341
      %p345 = scmp.eq.s32.totalorder %s27, 0
      %p346 = por %p344, %p345
      %p347 = scmp.ne.s32.totalorder %s339, %s341
      %p348 = scmp.eq.s32.totalorder %s32, 1
      %p349 = por %p347, %p348
      %p350 = scmp.ne.s32.totalorder %s341, %s342
      %p351 = scmp.eq.s32.totalorder %s32, 0
      %p352 = por %p350, %p351
      %p353 = scmp.ne.s32.totalorder %s341, %s342
      %p354 = scmp.eq.s32.totalorder %s33, 1
      %p355 = por %p353, %p354
      %p357 = scmp.ne.s32.totalorder %s342, %s356
      %p358 = scmp.eq.s32.totalorder %s33, 0
      %p359 = por %p357, %p358
      %s361 = sadd.s32 %s360, 1
      %p364 = scmp.eq.s32.totalorder %s27, 1
      %p365 = scmp.ne.s32.totalorder %s360, %s362
      %p366 = scmp.eq.s32.totalorder %s27, 0
      %p367 = por %p365, %p366
      %p368 = scmp.ne.s32.totalorder %s360, %s362
      %p369 = scmp.eq.s32.totalorder %s32, 1
      %p370 = por %p368, %p369
      %p371 = scmp.ne.s32.totalorder %s362, %s363
      %p372 = scmp.eq.s32.totalorder %s32, 0
      %p373 = por %p371, %p372
      %p374 = scmp.ne.s32.totalorder %s362, %s363
      %p375 = scmp.eq.s32.totalorder %s33, 1
      %p376 = por %p374, %p375
      %p378 = scmp.ne.s32.totalorder %s363, %s377
      %p379 = scmp.eq.s32.totalorder %s33, 0
      %p380 = por %p378, %p379
      %s381 = ssub.s32 %s27, %s34
      %p382 = scmp.eq.s32.totalorder %s381, 0
      %s384 = sadd.s32 %s383, 1
      %s385 = scalar_select %p382, %s383, %s384
      %p388 = pneg %p382
      %p389 = scmp.eq.s32.totalorder %s27, 1
      %p390 = por %p388, %p389
      %p391 = scmp.ne.s32.totalorder %s383, %s386
      %p392 = scmp.eq.s32.totalorder %s27, 0
      %p393 = por %p391, %p392
      %p394 = scmp.ne.s32.totalorder %s383, %s386
      %p395 = scmp.eq.s32.totalorder %s32, 1
      %p396 = por %p394, %p395
      %p397 = scmp.ne.s32.totalorder %s386, %s387
      %p398 = scmp.eq.s32.totalorder %s32, 0
      %p399 = por %p397, %p398
      %p400 = scmp.ne.s32.totalorder %s386, %s387
      %p401 = scmp.eq.s32.totalorder %s33, 1
      %p402 = por %p400, %p401
      %p404 = scmp.ne.s32.totalorder %s387, %s403
      %p405 = scmp.eq.s32.totalorder %s33, 0
      %p406 = por %p404, %p405
      %s407 = ssub.s32 %s27, %s34
      %p408 = scmp.eq.s32.totalorder %s407, 0
      %s410 = sadd.s32 %s409, 1
      %s411 = scalar_select %p408, %s409, %s410
      %p414 = pneg %p408
      %p415 = scmp.eq.s32.totalorder %s27, 1
      %p416 = por %p414, %p415
      %p417 = scmp.ne.s32.totalorder %s409, %s412
      %p418 = scmp.eq.s32.totalorder %s27, 0
      %p419 = por %p417, %p418
      %p420 = scmp.ne.s32.totalorder %s409, %s412
      %p421 = scmp.eq.s32.totalorder %s32, 1
      %p422 = por %p420, %p421
      %p423 = scmp.ne.s32.totalorder %s412, %s413
      %p424 = scmp.eq.s32.totalorder %s32, 0
      %p425 = por %p423, %p424
      %p426 = scmp.ne.s32.totalorder %s412, %s413
      %p427 = scmp.eq.s32.totalorder %s33, 1
      %p428 = por %p426, %p427
      %p430 = scmp.ne.s32.totalorder %s413, %s429
      %p431 = scmp.eq.s32.totalorder %s33, 0
      %p432 = por %p430, %p431
      %p433 = scmp.le.s32.totalorder 1, %s27
      %p434 = scmp.lt.s32.totalorder %s27, 3
      %p435 = pnand %p433, %p434
      %p436 = pneg %p435
      // Predicated region
      $region9: #{encode.1} parent=5 // pred_check
        _
      $region10: #{encode.1} parent=5 // pred_check_branch
        %438 = sbr.rel (%p435) target = $region12
      $region11: #{encode.1} parent=5 // pred_region
        %s439 = ssub.s32 %s27, 1
        // Predicated region
        $region13: #{encode.1} parent=11 // pred_check
          %p440 = pneg %p100
        $region14: #{encode.1} parent=11 // pred_check_branch
          %442 = sbr.rel (%p440) target = $region16
        $region15: #{encode.1} parent=11 // pred_region
          _
        $region16: #{encode.1} parent=11 // pred_fallthru
          _
        // Predicated region
        $region17: #{encode.1} parent=11 // pred_check
          %p443 = pneg %p121
        $region18: #{encode.1} parent=11 // pred_check_branch
          %445 = sbr.rel (%p443) target = $region20
        $region19: #{encode.1} parent=11 // pred_region
          _
        $region20: #{encode.1} parent=11 // pred_fallthru
          _
        // Predicated region
        $region21: #{encode.1} parent=11 // pred_check
          %p446 = pneg %p142
        $region22: #{encode.1} parent=11 // pred_check_branch
          %448 = sbr.rel (%p446) target = $region24
        $region23: #{encode.1} parent=11 // pred_region
          _
        $region24: #{encode.1} parent=11 // pred_fallthru
          _
        // Predicated region
        $region25: #{encode.1} parent=11 // pred_check
          %p449 = pneg %p163
        $region26: #{encode.1} parent=11 // pred_check_branch
          %451 = sbr.rel (%p449) target = $region28
        $region27: #{encode.1} parent=11 // pred_region
          _
        $region28: #{encode.1} parent=11 // pred_fallthru
          _
        // Predicated region
        $region29: #{encode.1} parent=11 // pred_check
          %p452 = pneg %p184
        $region30: #{encode.1} parent=11 // pred_check_branch
          %454 = sbr.rel (%p452) target = $region32
        $region31: #{encode.1} parent=11 // pred_region
          _
        $region32: #{encode.1} parent=11 // pred_fallthru
          _
        // Predicated region
        $region33: #{encode.1} parent=11 // pred_check
          %p455 = pneg %p205
        $region34: #{encode.1} parent=11 // pred_check_branch
          %457 = sbr.rel (%p455) target = $region36
        $region35: #{encode.1} parent=11 // pred_region
          _
        $region36: #{encode.1} parent=11 // pred_fallthru
          _
        // Predicated region
        $region37: #{encode.1} parent=11 // pred_check
          %p458 = pneg %p226
        $region38: #{encode.1} parent=11 // pred_check_branch
          %460 = sbr.rel (%p458) target = $region40
        $region39: #{encode.1} parent=11 // pred_region
          _
        $region40: #{encode.1} parent=11 // pred_fallthru
          _
        // Predicated region
        $region41: #{encode.1} parent=11 // pred_check
          %p461 = pneg %p247
        $region42: #{encode.1} parent=11 // pred_check_branch
          %463 = sbr.rel (%p461) target = $region44
        $region43: #{encode.1} parent=11 // pred_region
          _
        $region44: #{encode.1} parent=11 // pred_fallthru
          _
        // Predicated region
        $region45: #{encode.1} parent=11 // pred_check
          %p464 = pneg %p268
        $region46: #{encode.1} parent=11 // pred_check_branch
          %466 = sbr.rel (%p464) target = $region48
        $region47: #{encode.1} parent=11 // pred_region
          _
        $region48: #{encode.1} parent=11 // pred_fallthru
          _
        // Predicated region
        $region49: #{encode.1} parent=11 // pred_check
          %p467 = pneg %p289
        $region50: #{encode.1} parent=11 // pred_check_branch
          %469 = sbr.rel (%p467) target = $region52
        $region51: #{encode.1} parent=11 // pred_region
          _
        $region52: #{encode.1} parent=11 // pred_fallthru
          _
        // Predicated region
        $region53: #{encode.1} parent=11 // pred_check
          %p470 = pneg %p310
        $region54: #{encode.1} parent=11 // pred_check_branch
          %472 = sbr.rel (%p470) target = $region56
        $region55: #{encode.1} parent=11 // pred_region
          _
        $region56: #{encode.1} parent=11 // pred_fallthru
          _
        // Predicated region
        $region57: #{encode.1} parent=11 // pred_check
          %p473 = pneg %p331
        $region58: #{encode.1} parent=11 // pred_check_branch
          %475 = sbr.rel (%p473) target = $region60
        $region59: #{encode.1} parent=11 // pred_region
          _
        $region60: #{encode.1} parent=11 // pred_fallthru
          _
        // Predicated region
        $region61: #{encode.1} parent=11 // pred_check
          %p476 = pneg %p352
        $region62: #{encode.1} parent=11 // pred_check_branch
          %478 = sbr.rel (%p476) target = $region64
        $region63: #{encode.1} parent=11 // pred_region
          _
        $region64: #{encode.1} parent=11 // pred_fallthru
          _
        // Predicated region
        $region65: #{encode.1} parent=11 // pred_check
          %p479 = pneg %p373
        $region66: #{encode.1} parent=11 // pred_check_branch
          %481 = sbr.rel (%p479) target = $region68
        $region67: #{encode.1} parent=11 // pred_region
          _
        $region68: #{encode.1} parent=11 // pred_fallthru
          _
      $region12: #{encode.1} parent=5 // pred_fallthru
        _
      %p482 = scmp.lt.s32.totalorder %s27, 2
      // Predicated region
      $region69: #{encode.1} parent=5 // pred_check
        %p483 = pneg %p482
      $region70: #{encode.1} parent=5 // pred_check_branch
        %485 = sbr.rel (%p483) target = $region72
      $region71: #{encode.1} parent=5 // pred_region
        // Predicated region
        $region73: #{encode.1} parent=71 // pred_check
          %p486 = pneg %p47
        $region74: #{encode.1} parent=71 // pred_check_branch
          %488 = sbr.rel (%p486) target = $region76
        $region75: #{encode.1} parent=71 // pred_region
          %p489 = scmp.lt.s32.totalorder %s27, 1
          %s490 = scalar_select %p489, %s27, 1
          %s491 = smul.addr %s490, 8
          %s492 = scalar_lea.vmem %s0, %s491
        $region76: #{encode.1} parent=71 // pred_fallthru
          _
        // Predicated region
        $region77: #{encode.1} parent=71 // pred_check
          %p493 = pneg %p73
        $region78: #{encode.1} parent=71 // pred_check_branch
          %495 = sbr.rel (%p493) target = $region80
        $region79: #{encode.1} parent=71 // pred_region
          %p496 = scmp.lt.s32.totalorder %s27, 1
          %s497 = scalar_select %p496, %s27, 1
          %s498 = scalar_lea.vmem %s1, %s497
        $region80: #{encode.1} parent=71 // pred_fallthru
          _
      $region72: #{encode.1} parent=5 // pred_fallthru
        _
      %p499 = scmp.le.s32.totalorder 1, %s27
      %p500 = scmp.lt.s32.totalorder %s27, 3
      %p501 = pnand %p499, %p500
      %p502 = pneg %p501
      // Predicated region
      $region81: #{encode.1} parent=5 // pred_check
        _
      $region82: #{encode.1} parent=5 // pred_check_branch
        %504 = sbr.rel (%p501) target = $region84
      $region83: #{encode.1} parent=5 // pred_region
        %s505 = ssub.s32 %s27, 1
        %p506 = scmp.lt.s32.totalorder %s32, 1
        %s507 = scalar_select %p506, %s32, 1
        %s508 = smul.addr %s507, 8
        %s509 = scalar_lea.vmem %s0, %s508
        %p510 = pneg %p53
        %p511 = pneg %p50
        %p512 = scmp.lt.s32.totalorder %s32, 1
        %s513 = scalar_select %p512, %s32, 1
        %s514 = scalar_lea.vmem %s1, %s513
        %p515 = pneg %p79
        %p516 = pneg %p76
        %p517 = pneg %p100
        %p518 = pneg %p97
        %p519 = pneg %p121
        %p520 = pneg %p118
        %p521 = pneg %p142
        %p522 = pneg %p139
        %p523 = pneg %p163
        %p524 = pneg %p160
        %p525 = pneg %p184
        %p526 = pneg %p181
        %p527 = pneg %p205
        %p528 = pneg %p202
        %p529 = pneg %p226
        %p530 = pneg %p223
        %p531 = pneg %p247
        %p532 = pneg %p244
        %p533 = pneg %p268
        %p534 = pneg %p265
        %p535 = pneg %p289
        %p536 = pneg %p286
        %p537 = pneg %p310
        %p538 = pneg %p307
        %p539 = pneg %p331
        %p540 = pneg %p328
        %p541 = pneg %p352
        %p542 = pneg %p349
        %p543 = pneg %p373
        %p544 = pneg %p370
        %p545 = pneg %p399
        %p546 = pneg %p396
        %s547 = sand.u32 %s386, 1
        %s548 = scalar_lea.sflag [#allocation4], %s547
        %s549 = sand.u32 %s386, 1
        %s550 = smul.addr %s549, 8
        %s551 = scalar_lea.vmem [#allocation3], %s550
        %p552 = pneg %p425
        %p553 = pneg %p422
        %p554 = scmp.lt.s32.totalorder %s32, 1
        %s555 = scalar_select %p554, %s32, 1
        %s556 = scalar_lea.vmem %s17, %s555
        %p557 = scmp.lt.s32.totalorder %s32, 1
        %s558 = scalar_select %p557, %s32, 1
        %s559 = smul.addr %s558, 8
        %s560 = scalar_lea.vmem %s0, %s559
        %p561 = scmp.lt.s32.totalorder %s32, 1
        %s562 = scalar_select %p561, %s32, 1
        %s563 = scalar_lea.vmem %s1, %s562
        %p564 = scmp.lt.s32.totalorder %s32, 1
        %s565 = scalar_select %p564, %s32, 1
        %s566 = scalar_lea.vmem %s17, %s565
        %v567 = vld [vmem:[%s560] sm:$0xff]
        %v568 = vld [vmem:[%s563] sm:$0x1]
        %v570 = vlaneseq
        %v571 = vshrl.u32 %v570, 7
        %v572 = vsub.s32 0, %v571
        %v573 = vrot.slane %v568, %v572
        %v575 = vld [vmem:[%s2] sm:$0x1]
        %v576 = vld [vmem:[%s3] sm:$0x1]
        %vm577 = vcmask 261120
        %v578 = vsel %vm577, %v567, 0.0
        %579 = vadd.xlane.f32.xlu0 %v578
        %v580 = vpop.xlane.xlu0 %579
        %v581 = vrcp.pop 32.0
        %v582 = vmul.f32 %v580, %v581
        %v583 = vsub.f32 %v567, %v582
        %v584 = vmul.f32 %v583, %v583
        %v585 = vsel %vm577, %v584, 0.0
        %586 = vadd.xlane.f32.xlu0 %v585
        %v587 = vpop.xlane.xlu0 %586
        %v588 = vmul.f32 %v587, %v581
        %v589 = vadd.f32 %v588, 1e-12
        %v590 = vrsqrt.pop %v589
        %v591 = vmul.f32 %v583, %v590
        %v593 = vlaneseq
        %v594 = vshrl.u32 %v593, 7
        %v595 = vsub.s32 0, %v594
        %v596 = vrot.slane %v575, %v595
        %v598 = vmul.f32 %v591, %v596
        %v600 = vlaneseq
        %v601 = vshrl.u32 %v600, 7
        %v602 = vsub.s32 0, %v601
        %v603 = vrot.slane %v576, %v602
        %v605 = vadd.f32 %v598, %v603
        %v606 = vld [vmem:[%s4] sm:$0xff]
        %v607 = vld [vmem:[%s4 + $0x8] sm:$0xff]
        %v608 = vld [vmem:[%s4 + $0x10] sm:$0xff]
        %v609 = vld [vmem:[%s4 + $0x18] sm:$0xff]
        %v610 = vld [vmem:[%s5] sm:$0x1]
        %v612 = vlaneseq
        %v613 = vshrl.u32 %v612, 7
        %v614 = vsub.s32 0, %v613
        %v615 = vrot.slane %v610, %v614
        %v618 = vsel %vm577, %v605, 0
        %620 = vmatprep.subr.mxu0 0.0
        %621 = vmatpush1.msra.mxu0 %v606
        %622 = vmatprep.subr.mxu0 0.0
        %623 = vmatpush1.msra.mxu0 %v607
        %624 = vmatprep.subr.mxu0 0.0
        %625 = vmatpush1.msra.mxu0 %v608
        %626 = vmatprep.subr.mxu0 0.0
        %627 = vmatpush1.msra.mxu0 %v609
        %628 = vmatprep.subr.mxu0 0.0
        %629 = vmatpush1.msra.mxu0 0.0
        %630 = vmatprep.subr.mxu0 0.0
        %631 = vmatpush1.msra.mxu0 0.0
        %632 = vmatprep.subr.mxu0 0.0
        %633 = vmatpush1.msra.mxu0 0.0
        %634 = vmatprep.subr.mxu0 0.0
        %635 = vmatpush1.msra.mxu0 0.0
        %636 = vmatprep.subr.mxu0 0.0
        %637 = vmatpush1.msra.mxu0 0.0
        %638 = vmatprep.subr.mxu0 0.0
        %639 = vmatpush1.msra.mxu0 0.0
        %640 = vmatprep.subr.mxu0 0.0
        %641 = vmatpush1.msra.mxu0 0.0
        %642 = vmatprep.subr.mxu0 0.0
        %643 = vmatpush1.msra.mxu0 0.0
        %644 = vmatprep.subr.mxu0 0.0
        %645 = vmatpush1.msra.mxu0 0.0
        %646 = vmatprep.subr.mxu0 0.0
        %647 = vmatpush1.msra.mxu0 0.0
        %648 = vmatprep.subr.mxu0 0.0
        %649 = vmatpush1.msra.mxu0 0.0
        %650 = vmatprep.subr.mxu0 0.0
        %651 = vmatpush1.msra.mxu0 0.0
        %652 = vmatprep.subr.mxu0 0.0
        %653 = vmatpush1.msra.mxu0 0.0
        %654 = vmatprep.subr.mxu0 0.0
        %655 = vmatpush1.msra.mxu0 0.0
        %656 = vmatprep.subr.mxu0 0.0
        %657 = vmatpush1.msra.mxu0 0.0
        %658 = vmatprep.subr.mxu0 0.0
        %659 = vmatpush1.msra.mxu0 0.0
        %660 = vmatprep.subr.mxu0 0.0
        %661 = vmatpush1.msra.mxu0 0.0
        %662 = vmatprep.subr.mxu0 0.0
        %663 = vmatpush1.msra.mxu0 0.0
        %664 = vmatprep.subr.mxu0 0.0
        %665 = vmatpush1.msra.mxu0 0.0
        %666 = vmatprep.subr.mxu0 0.0
        %667 = vmatpush1.msra.mxu0 0.0
        %668 = vmatprep.subr.mxu0 0.0
        %669 = vmatpush1.msra.mxu0 0.0
        %670 = vmatprep.subr.mxu0 0.0
        %671 = vmatpush1.msra.mxu0 0.0
        %672 = vmatprep.subr.mxu0 0.0
        %673 = vmatpush1.msra.mxu0 0.0
        %674 = vmatprep.subr.mxu0 0.0
        %675 = vmatpush1.msra.mxu0 0.0
        %676 = vmatprep.subr.mxu0 0.0
        %677 = vmatpush1.msra.mxu0 0.0
        %678 = vmatprep.subr.mxu0 0.0
        %679 = vmatpush1.msra.mxu0 0.0
        %680 = vmatprep.subr.mxu0 0.0
        %681 = vmatpush1.msra.mxu0 0.0
        %682 = vmatprep.subr.mxu0 0.0
        %683 = vmatpush1.msra.mxu0 0.0
        %684 = vmatprep.mubr.f32.mxu0 0.0
        %685 = vmatmul.mubr.f32.gmra.mrb[0].mxu0 %v618
        %v686 = vpop.f32.mrb[0].mxu0
        %v687 = vadd.f32 %v615, %v686
        %v688 = vpop.f32.mrb[0].mxu0
        %689 = vdwg.mxu0
        %691 = vrot.lane.b32.xlu0 %v687, 96
        %v692 = vpop.permute.xlu0 %691
        %vm693 = vcmask 64512
        %v694 = vsel %vm693, %v687, 0
        %v696 = vsel %vm693, %v692, 0
        %698 = vmatprep.subr.mxu0 0.0
        %699 = vmatpush1.xpose.msra.mxu0 %v696
        %700 = vmatprep.subr.mxu0 0.0
        %701 = vmatpush1.xpose.msra.mxu0 0.0
        %702 = vmatprep.subr.mxu0 0.0
        %703 = vmatpush1.xpose.msra.mxu0 0.0
        %704 = vmatprep.subr.mxu0 0.0
        %705 = vmatpush1.xpose.msra.mxu0 0.0
        %706 = vmatprep.subr.mxu0 0.0
        %707 = vmatpush1.xpose.msra.mxu0 0.0
        %708 = vmatprep.subr.mxu0 0.0
        %709 = vmatpush1.xpose.msra.mxu0 0.0
        %710 = vmatprep.subr.mxu0 0.0
        %711 = vmatpush1.xpose.msra.mxu0 0.0
        %712 = vmatprep.subr.mxu0 0.0
        %713 = vmatpush1.xpose.msra.mxu0 0.0
        %714 = vmatprep.subr.mxu0 0.0
        %715 = vmatpush1.xpose.msra.mxu0 0.0
        %716 = vmatprep.subr.mxu0 0.0
        %717 = vmatpush1.xpose.msra.mxu0 0.0
        %718 = vmatprep.subr.mxu0 0.0
        %719 = vmatpush1.xpose.msra.mxu0 0.0
        %720 = vmatprep.subr.mxu0 0.0
        %721 = vmatpush1.xpose.msra.mxu0 0.0
        %722 = vmatprep.subr.mxu0 0.0
        %723 = vmatpush1.xpose.msra.mxu0 0.0
        %724 = vmatprep.subr.mxu0 0.0
        %725 = vmatpush1.xpose.msra.mxu0 0.0
        %726 = vmatprep.subr.mxu0 0.0
        %727 = vmatpush1.xpose.msra.mxu0 0.0
        %728 = vmatprep.subr.mxu0 0.0
        %729 = vmatpush1.xpose.msra.mxu0 0.0
        %730 = vmatprep.subr.mxu0 0.0
        %731 = vmatpush1.xpose.msra.mxu0 0.0
        %732 = vmatprep.subr.mxu0 0.0
        %733 = vmatpush1.xpose.msra.mxu0 0.0
        %734 = vmatprep.subr.mxu0 0.0
        %735 = vmatpush1.xpose.msra.mxu0 0.0
        %736 = vmatprep.subr.mxu0 0.0
        %737 = vmatpush1.xpose.msra.mxu0 0.0
        %738 = vmatprep.subr.mxu0 0.0
        %739 = vmatpush1.xpose.msra.mxu0 0.0
        %740 = vmatprep.subr.mxu0 0.0
        %741 = vmatpush1.xpose.msra.mxu0 0.0
        %742 = vmatprep.subr.mxu0 0.0
        %743 = vmatpush1.xpose.msra.mxu0 0.0
        %744 = vmatprep.subr.mxu0 0.0
        %745 = vmatpush1.xpose.msra.mxu0 0.0
        %746 = vmatprep.subr.mxu0 0.0
        %747 = vmatpush1.xpose.msra.mxu0 0.0
        %748 = vmatprep.subr.mxu0 0.0
        %749 = vmatpush1.xpose.msra.mxu0 0.0
        %750 = vmatprep.subr.mxu0 0.0
        %751 = vmatpush1.xpose.msra.mxu0 0.0
        %752 = vmatprep.subr.mxu0 0.0
        %753 = vmatpush1.xpose.msra.mxu0 0.0
        %754 = vmatprep.subr.mxu0 0.0
        %755 = vmatpush1.xpose.msra.mxu0 0.0
        %756 = vmatprep.subr.mxu0 0.0
        %757 = vmatpush1.xpose.msra.mxu0 0.0
        %758 = vmatprep.subr.mxu0 0.0
        %759 = vmatpush1.xpose.msra.mxu0 0.0
        %760 = vmatprep.subr.mxu0 0.0
        %761 = vmatpush1.xpose.msra.mxu0 0.0
        %762 = vmatprep.mubr.f32.mxu0 0.0
        %763 = vmatmul.mubr.f32.gmra.mrb[0].mxu0 %v694
        %v764 = vpop.f32.mrb[0].mxu0
        %v765 = vadd.f32 0.0, %v764
        %v766 = vpop.f32.mrb[0].mxu0
        %767 = vdwg.mxu0
        %v768 = vmul.f32 %v765, 0.35355338
        %v769 = vadd.f32 %v768, %v573
        %v770 = vsel %vm693, %v769, -inf
        %771 = vmax.xlane.f32.xlu0 %v770
        %v772 = vpop.xlane.xlu0 %771
        %v773 = vsub.f32 %v769, %v772
        %v774 = vmul.f32 %v773, 1.442695
        %v775 = vpow.pop %v774
        %v776 = vsel %vm693, %v775, 0.0
        %777 = vadd.xlane.f32.xlu0 %v776
        %v778 = vpop.xlane.xlu0 %777
        %v779 = vrcp.pop %v778
        %v780 = vmul.f32 %v775, %v779
        %781 = vrot.lane.b32.xlu0 %v687, 64
        %v782 = vpop.permute.xlu0 %781
        %v785 = vsel %vm693, %v780, 0
        %787 = vmatprep.subr.mxu0 0.0
        %788 = vmatpush1.msra.mxu0 %v782
        %789 = vmatprep.subr.mxu0 0.0
        %790 = vmatpush1.msra.mxu0 0.0
        %791 = vmatprep.subr.mxu0 0.0
        %792 = vmatpush1.msra.mxu0 0.0
        %793 = vmatprep.subr.mxu0 0.0
        %794 = vmatpush1.msra.mxu0 0.0
        %795 = vmatprep.subr.mxu0 0.0
        %796 = vmatpush1.msra.mxu0 0.0
        %797 = vmatprep.subr.mxu0 0.0
        %798 = vmatpush1.msra.mxu0 0.0
        %799 = vmatprep.subr.mxu0 0.0
        %800 = vmatpush1.msra.mxu0 0.0
        %801 = vmatprep.subr.mxu0 0.0
        %802 = vmatpush1.msra.mxu0 0.0
        %803 = vmatprep.subr.mxu0 0.0
        %804 = vmatpush1.msra.mxu0 0.0
        %805 = vmatprep.subr.mxu0 0.0
        %806 = vmatpush1.msra.mxu0 0.0
        %807 = vmatprep.subr.mxu0 0.0
        %808 = vmatpush1.msra.mxu0 0.0
        %809 = vmatprep.subr.mxu0 0.0
        %810 = vmatpush1.msra.mxu0 0.0
        %811 = vmatprep.subr.mxu0 0.0
        %812 = vmatpush1.msra.mxu0 0.0
        %813 = vmatprep.subr.mxu0 0.0
        %814 = vmatpush1.msra.mxu0 0.0
        %815 = vmatprep.subr.mxu0 0.0
        %816 = vmatpush1.msra.mxu0 0.0
        %817 = vmatprep.subr.mxu0 0.0
        %818 = vmatpush1.msra.mxu0 0.0
        %819 = vmatprep.subr.mxu0 0.0
        %820 = vmatpush1.msra.mxu0 0.0
        %821 = vmatprep.subr.mxu0 0.0
        %822 = vmatpush1.msra.mxu0 0.0
        %823 = vmatprep.subr.mxu0 0.0
        %824 = vmatpush1.msra.mxu0 0.0
        %825 = vmatprep.subr.mxu0 0.0
        %826 = vmatpush1.msra.mxu0 0.0
        %827 = vmatprep.subr.mxu0 0.0
        %828 = vmatpush1.msra.mxu0 0.0
        %829 = vmatprep.subr.mxu0 0.0
        %830 = vmatpush1.msra.mxu0 0.0
        %831 = vmatprep.subr.mxu0 0.0
        %832 = vmatpush1.msra.mxu0 0.0
        %833 = vmatprep.subr.mxu0 0.0
        %834 = vmatpush1.msra.mxu0 0.0
        %835 = vmatprep.subr.mxu0 0.0
        %836 = vmatpush1.msra.mxu0 0.0
        %837 = vmatprep.subr.mxu0 0.0
        %838 = vmatpush1.msra.mxu0 0.0
        %839 = vmatprep.subr.mxu0 0.0
        %840 = vmatpush1.msra.mxu0 0.0
        %841 = vmatprep.subr.mxu0 0.0
        %842 = vmatpush1.msra.mxu0 0.0
        %843 = vmatprep.subr.mxu0 0.0
        %844 = vmatpush1.msra.mxu0 0.0
        %845 = vmatprep.subr.mxu0 0.0
        %846 = vmatpush1.msra.mxu0 0.0
        %847 = vmatprep.subr.mxu0 0.0
        %848 = vmatpush1.msra.mxu0 0.0
        %849 = vmatprep.subr.mxu0 0.0
        %850 = vmatpush1.msra.mxu0 0.0
        %851 = vmatprep.mubr.f32.mxu0 0.0
        %852 = vmatmul.mubr.f32.gmra.mrb[0].mxu0 %v785
        %v853 = vpop.f32.mrb[0].mxu0
        %v854 = vadd.f32 0.0, %v853
        %v855 = vpop.f32.mrb[0].mxu0
        %856 = vdwg.mxu0
        %857 = vst.msk [vmem:[#allocation2] sm:$0xff] %vm693, %v854
        %858 = vrot.lane.b32.xlu0 %v687, 120
        %v859 = vpop.permute.xlu0 %858
        %860 = vrot.lane.b32.xlu0 %v687, 88
        %v861 = vpop.permute.xlu0 %860
        %v862 = vsel %vm693, %v859, 0
        %v864 = vsel %vm693, %v861, 0
        %866 = vmatprep.subr.mxu0 0.0
        %867 = vmatpush1.xpose.msra.mxu0 %v864
        %868 = vmatprep.subr.mxu0 0.0
        %869 = vmatpush1.xpose.msra.mxu0 0.0
        %870 = vmatprep.subr.mxu0 0.0
        %871 = vmatpush1.xpose.msra.mxu0 0.0
        %872 = vmatprep.subr.mxu0 0.0
        %873 = vmatpush1.xpose.msra.mxu0 0.0
        %874 = vmatprep.subr.mxu0 0.0
        %875 = vmatpush1.xpose.msra.mxu0 0.0
        %876 = vmatprep.subr.mxu0 0.0
        %877 = vmatpush1.xpose.msra.mxu0 0.0
        %878 = vmatprep.subr.mxu0 0.0
        %879 = vmatpush1.xpose.msra.mxu0 0.0
        %880 = vmatprep.subr.mxu0 0.0
        %881 = vmatpush1.xpose.msra.mxu0 0.0
        %882 = vmatprep.subr.mxu0 0.0
        %883 = vmatpush1.xpose.msra.mxu0 0.0
        %884 = vmatprep.subr.mxu0 0.0
        %885 = vmatpush1.xpose.msra.mxu0 0.0
        %886 = vmatprep.subr.mxu0 0.0
        %887 = vmatpush1.xpose.msra.mxu0 0.0
        %888 = vmatprep.subr.mxu0 0.0
        %889 = vmatpush1.xpose.msra.mxu0 0.0
        %890 = vmatprep.subr.mxu0 0.0
        %891 = vmatpush1.xpose.msra.mxu0 0.0
        %892 = vmatprep.subr.mxu0 0.0
        %893 = vmatpush1.xpose.msra.mxu0 0.0
        %894 = vmatprep.subr.mxu0 0.0
        %895 = vmatpush1.xpose.msra.mxu0 0.0
        %896 = vmatprep.subr.mxu0 0.0
        %897 = vmatpush1.xpose.msra.mxu0 0.0
        %898 = vmatprep.subr.mxu0 0.0
        %899 = vmatpush1.xpose.msra.mxu0 0.0
        %900 = vmatprep.subr.mxu0 0.0
        %901 = vmatpush1.xpose.msra.mxu0 0.0
        %902 = vmatprep.subr.mxu0 0.0
        %903 = vmatpush1.xpose.msra.mxu0 0.0
        %904 = vmatprep.subr.mxu0 0.0
        %905 = vmatpush1.xpose.msra.mxu0 0.0
        %906 = vmatprep.subr.mxu0 0.0
        %907 = vmatpush1.xpose.msra.mxu0 0.0
        %908 = vmatprep.subr.mxu0 0.0
        %909 = vmatpush1.xpose.msra.mxu0 0.0
        %910 = vmatprep.subr.mxu0 0.0
        %911 = vmatpush1.xpose.msra.mxu0 0.0
        %912 = vmatprep.subr.mxu0 0.0
        %913 = vmatpush1.xpose.msra.mxu0 0.0
        %914 = vmatprep.subr.mxu0 0.0
        %915 = vmatpush1.xpose.msra.mxu0 0.0
        %916 = vmatprep.subr.mxu0 0.0
        %917 = vmatpush1.xpose.msra.mxu0 0.0
        %918 = vmatprep.subr.mxu0 0.0
        %919 = vmatpush1.xpose.msra.mxu0 0.0
        %920 = vmatprep.subr.mxu0 0.0
        %921 = vmatpush1.xpose.msra.mxu0 0.0
        %922 = vmatprep.subr.mxu0 0.0
        %923 = vmatpush1.xpose.msra.mxu0 0.0
        %924 = vmatprep.subr.mxu0 0.0
        %925 = vmatpush1.xpose.msra.mxu0 0.0
        %926 = vmatprep.subr.mxu0 0.0
        %927 = vmatpush1.xpose.msra.mxu0 0.0
        %928 = vmatprep.subr.mxu0 0.0
        %929 = vmatpush1.xpose.msra.mxu0 0.0
        %930 = vmatprep.mubr.f32.mxu0 0.0
        %931 = vmatmul.mubr.f32.gmra.mrb[0].mxu0 %v862
        %v932 = vpop.f32.mrb[0].mxu0
        %v933 = vadd.f32 0.0, %v932
        %v934 = vpop.f32.mrb[0].mxu0
        %935 = vdwg.mxu0
        %v936 = vmul.f32 %v933, 0.35355338
        %v937 = vadd.f32 %v936, %v573
        %v938 = vsel %vm693, %v937, -inf
        %939 = vmax.xlane.f32.xlu0 %v938
        %v940 = vpop.xlane.xlu0 %939
        %v941 = vsub.f32 %v937, %v940
        %v942 = vmul.f32 %v941, 1.442695
        %v943 = vpow.pop %v942
        %v944 = vsel %vm693, %v943, 0.0
        %945 = vadd.xlane.f32.xlu0 %v944
        %v946 = vpop.xlane.xlu0 %945
        %v947 = vrcp.pop %v946
        %v948 = vmul.f32 %v943, %v947
        %949 = vrot.lane.b32.xlu0 %v687, 56
        %v950 = vpop.permute.xlu0 %949
        %v953 = vsel %vm693, %v948, 0
        %955 = vmatprep.subr.mxu0 0.0
        %956 = vmatpush1.msra.mxu0 %v950
        %957 = vmatprep.subr.mxu0 0.0
        %958 = vmatpush1.msra.mxu0 0.0
        %959 = vmatprep.subr.mxu0 0.0
        %960 = vmatpush1.msra.mxu0 0.0
        %961 = vmatprep.subr.mxu0 0.0
        %962 = vmatpush1.msra.mxu0 0.0
        %963 = vmatprep.subr.mxu0 0.0
        %964 = vmatpush1.msra.mxu0 0.0
        %965 = vmatprep.subr.mxu0 0.0
        %966 = vmatpush1.msra.mxu0 0.0
        %967 = vmatprep.subr.mxu0 0.0
        %968 = vmatpush1.msra.mxu0 0.0
        %969 = vmatprep.subr.mxu0 0.0
        %970 = vmatpush1.msra.mxu0 0.0
        %971 = vmatprep.subr.mxu0 0.0
        %972 = vmatpush1.msra.mxu0 0.0
        %973 = vmatprep.subr.mxu0 0.0
        %974 = vmatpush1.msra.mxu0 0.0
        %975 = vmatprep.subr.mxu0 0.0
        %976 = vmatpush1.msra.mxu0 0.0
        %977 = vmatprep.subr.mxu0 0.0
        %978 = vmatpush1.msra.mxu0 0.0
        %979 = vmatprep.subr.mxu0 0.0
        %980 = vmatpush1.msra.mxu0 0.0
        %981 = vmatprep.subr.mxu0 0.0
        %982 = vmatpush1.msra.mxu0 0.0
        %983 = vmatprep.subr.mxu0 0.0
        %984 = vmatpush1.msra.mxu0 0.0
        %985 = vmatprep.subr.mxu0 0.0
        %986 = vmatpush1.msra.mxu0 0.0
        %987 = vmatprep.subr.mxu0 0.0
        %988 = vmatpush1.msra.mxu0 0.0
        %989 = vmatprep.subr.mxu0 0.0
        %990 = vmatpush1.msra.mxu0 0.0
        %991 = vmatprep.subr.mxu0 0.0
        %992 = vmatpush1.msra.mxu0 0.0
        %993 = vmatprep.subr.mxu0 0.0
        %994 = vmatpush1.msra.mxu0 0.0
        %995 = vmatprep.subr.mxu0 0.0
        %996 = vmatpush1.msra.mxu0 0.0
        %997 = vmatprep.subr.mxu0 0.0
        %998 = vmatpush1.msra.mxu0 0.0
        %999 = vmatprep.subr.mxu0 0.0
        %1000 = vmatpush1.msra.mxu0 0.0
        %1001 = vmatprep.subr.mxu0 0.0
        %1002 = vmatpush1.msra.mxu0 0.0
        %1003 = vmatprep.subr.mxu0 0.0
        %1004 = vmatpush1.msra.mxu0 0.0
        %1005 = vmatprep.subr.mxu0 0.0
        %1006 = vmatpush1.msra.mxu0 0.0
        %1007 = vmatprep.subr.mxu0 0.0
        %1008 = vmatpush1.msra.mxu0 0.0
        %1009 = vmatprep.subr.mxu0 0.0
        %1010 = vmatpush1.msra.mxu0 0.0
        %1011 = vmatprep.subr.mxu0 0.0
        %1012 = vmatpush1.msra.mxu0 0.0
        %1013 = vmatprep.subr.mxu0 0.0
        %1014 = vmatpush1.msra.mxu0 0.0
        %1015 = vmatprep.subr.mxu0 0.0
        %1016 = vmatpush1.msra.mxu0 0.0
        %1017 = vmatprep.subr.mxu0 0.0
        %1018 = vmatpush1.msra.mxu0 0.0
        %1019 = vmatprep.mubr.f32.mxu0 0.0
        %1020 = vmatmul.mubr.f32.gmra.mrb[0].mxu0 %v953
        %v1021 = vpop.f32.mrb[0].mxu0
        %v1022 = vadd.f32 0.0, %v1021
        %v1023 = vpop.f32.mrb[0].mxu0
        %1024 = vdwg.mxu0
        %1026 = vrot.lane.b32.xlu0 %v1022, 8
        %v1027 = vpop.permute.xlu0 %1026
        %vm1029 = vcmask 130112
        %1030 = vst.msk [vmem:[#allocation2] sm:$0xff] %vm1029, %v1027
        %1031 = vrot.lane.b32.xlu0 %v687, 112
        %v1032 = vpop.permute.xlu0 %1031
        %1033 = vrot.lane.b32.xlu0 %v687, 80
        %v1034 = vpop.permute.xlu0 %1033
        %v1035 = vsel %vm693, %v1032, 0
        %v1037 = vsel %vm693, %v1034, 0
        %1039 = vmatprep.subr.mxu0 0.0
        %1040 = vmatpush1.xpose.msra.mxu0 %v1037
        %1041 = vmatprep.subr.mxu0 0.0
        %1042 = vmatpush1.xpose.msra.mxu0 0.0
        %1043 = vmatprep.subr.mxu0 0.0
        %1044 = vmatpush1.xpose.msra.mxu0 0.0
        %1045 = vmatprep.subr.mxu0 0.0
        %1046 = vmatpush1.xpose.msra.mxu0 0.0
        %1047 = vmatprep.subr.mxu0 0.0
        %1048 = vmatpush1.xpose.msra.mxu0 0.0
        %1049 = vmatprep.subr.mxu0 0.0
        %1050 = vmatpush1.xpose.msra.mxu0 0.0
        %1051 = vmatprep.subr.mxu0 0.0
        %1052 = vmatpush1.xpose.msra.mxu0 0.0
        %1053 = vmatprep.subr.mxu0 0.0
        %1054 = vmatpush1.xpose.msra.mxu0 0.0
        %1055 = vmatprep.subr.mxu0 0.0
        %1056 = vmatpush1.xpose.msra.mxu0 0.0
        %1057 = vmatprep.subr.mxu0 0.0
        %1058 = vmatpush1.xpose.msra.mxu0 0.0
        %1059 = vmatprep.subr.mxu0 0.0
        %1060 = vmatpush1.xpose.msra.mxu0 0.0
        %1061 = vmatprep.subr.mxu0 0.0
        %1062 = vmatpush1.xpose.msra.mxu0 0.0
        %1063 = vmatprep.subr.mxu0 0.0
        %1064 = vmatpush1.xpose.msra.mxu0 0.0
        %1065 = vmatprep.subr.mxu0 0.0
        %1066 = vmatpush1.xpose.msra.mxu0 0.0
        %1067 = vmatprep.subr.mxu0 0.0
        %1068 = vmatpush1.xpose.msra.mxu0 0.0
        %1069 = vmatprep.subr.mxu0 0.0
        %1070 = vmatpush1.xpose.msra.mxu0 0.0
        %1071 = vmatprep.subr.mxu0 0.0
        %1072 = vmatpush1.xpose.msra.mxu0 0.0
        %1073 = vmatprep.subr.mxu0 0.0
        %1074 = vmatpush1.xpose.msra.mxu0 0.0
        %1075 = vmatprep.subr.mxu0 0.0
        %1076 = vmatpush1.xpose.msra.mxu0 0.0
        %1077 = vmatprep.subr.mxu0 0.0
        %1078 = vmatpush1.xpose.msra.mxu0 0.0
        %1079 = vmatprep.subr.mxu0 0.0
        %1080 = vmatpush1.xpose.msra.mxu0 0.0
        %1081 = vmatprep.subr.mxu0 0.0
        %1082 = vmatpush1.xpose.msra.mxu0 0.0
        %1083 = vmatprep.subr.mxu0 0.0
        %1084 = vmatpush1.xpose.msra.mxu0 0.0
        %1085 = vmatprep.subr.mxu0 0.0
        %1086 = vmatpush1.xpose.msra.mxu0 0.0
        %1087 = vmatprep.subr.mxu0 0.0
        %1088 = vmatpush1.xpose.msra.mxu0 0.0
        %1089 = vmatprep.subr.mxu0 0.0
        %1090 = vmatpush1.xpose.msra.mxu0 0.0
        %1091 = vmatprep.subr.mxu0 0.0
        %1092 = vmatpush1.xpose.msra.mxu0 0.0
        %1093 = vmatprep.subr.mxu0 0.0
        %1094 = vmatpush1.xpose.msra.mxu0 0.0
        %1095 = vmatprep.subr.mxu0 0.0
        %1096 = vmatpush1.xpose.msra.mxu0 0.0
        %1097 = vmatprep.subr.mxu0 0.0
        %1098 = vmatpush1.xpose.msra.mxu0 0.0
        %1099 = vmatprep.subr.mxu0 0.0
        %1100 = vmatpush1.xpose.msra.mxu0 0.0
        %1101 = vmatprep.subr.mxu0 0.0
        %1102 = vmatpush1.xpose.msra.mxu0 0.0
        %1103 = vmatprep.mubr.f32.mxu0 0.0
        %1104 = vmatmul.mubr.f32.gmra.mrb[0].mxu0 %v1035
        %v1105 = vpop.f32.mrb[0].mxu0
        %v1106 = vadd.f32 0.0, %v1105
        %v1107 = vpop.f32.mrb[0].mxu0
        %1108 = vdwg.mxu0
        %v1109 = vmul.f32 %v1106, 0.35355338
        %v1110 = vadd.f32 %v1109, %v573
        %v1111 = vsel %vm693, %v1110, -inf
        %1112 = vmax.xlane.f32.xlu0 %v1111
        %v1113 = vpop.xlane.xlu0 %1112
        %v1114 = vsub.f32 %v1110, %v1113
        %v1115 = vmul.f32 %v1114, 1.442695
        %v1116 = vpow.pop %v1115
        %v1117 = vsel %vm693, %v1116, 0.0
        %1118 = vadd.xlane.f32.xlu0 %v1117
        %v1119 = vpop.xlane.xlu0 %1118
        %v1120 = vrcp.pop %v1119
        %v1121 = vmul.f32 %v1116, %v1120
        %1122 = vrot.lane.b32.xlu0 %v687, 48
        %v1123 = vpop.permute.xlu0 %1122
        %v1126 = vsel %vm693, %v1121, 0
        %1128 = vmatprep.subr.mxu0 0.0
        %1129 = vmatpush1.msra.mxu0 %v1123
        %1130 = vmatprep.subr.mxu0 0.0
        %1131 = vmatpush1.msra.mxu0 0.0
        %1132 = vmatprep.subr.mxu0 0.0
        %1133 = vmatpush1.msra.mxu0 0.0
        %1134 = vmatprep.subr.mxu0 0.0
        %1135 = vmatpush1.msra.mxu0 0.0
        %1136 = vmatprep.subr.mxu0 0.0
        %1137 = vmatpush1.msra.mxu0 0.0
        %1138 = vmatprep.subr.mxu0 0.0
        %1139 = vmatpush1.msra.mxu0 0.0
        %1140 = vmatprep.subr.mxu0 0.0
        %1141 = vmatpush1.msra.mxu0 0.0
        %1142 = vmatprep.subr.mxu0 0.0
        %1143 = vmatpush1.msra.mxu0 0.0
        %1144 = vmatprep.subr.mxu0 0.0
        %1145 = vmatpush1.msra.mxu0 0.0
        %1146 = vmatprep.subr.mxu0 0.0
        %1147 = vmatpush1.msra.mxu0 0.0
        %1148 = vmatprep.subr.mxu0 0.0
        %1149 = vmatpush1.msra.mxu0 0.0
        %1150 = vmatprep.subr.mxu0 0.0
        %1151 = vmatpush1.msra.mxu0 0.0
        %1152 = vmatprep.subr.mxu0 0.0
        %1153 = vmatpush1.msra.mxu0 0.0
        %1154 = vmatprep.subr.mxu0 0.0
        %1155 = vmatpush1.msra.mxu0 0.0
        %1156 = vmatprep.subr.mxu0 0.0
        %1157 = vmatpush1.msra.mxu0 0.0
        %1158 = vmatprep.subr.mxu0 0.0
        %1159 = vmatpush1.msra.mxu0 0.0
        %1160 = vmatprep.subr.mxu0 0.0
        %1161 = vmatpush1.msra.mxu0 0.0
        %1162 = vmatprep.subr.mxu0 0.0
        %1163 = vmatpush1.msra.mxu0 0.0
        %1164 = vmatprep.subr.mxu0 0.0
        %1165 = vmatpush1.msra.mxu0 0.0
        %1166 = vmatprep.subr.mxu0 0.0
        %1167 = vmatpush1.msra.mxu0 0.0
        %1168 = vmatprep.subr.mxu0 0.0
        %1169 = vmatpush1.msra.mxu0 0.0
        %1170 = vmatprep.subr.mxu0 0.0
        %1171 = vmatpush1.msra.mxu0 0.0
        %1172 = vmatprep.subr.mxu0 0.0
        %1173 = vmatpush1.msra.mxu0 0.0
        %1174 = vmatprep.subr.mxu0 0.0
        %1175 = vmatpush1.msra.mxu0 0.0
        %1176 = vmatprep.subr.mxu0 0.0
        %1177 = vmatpush1.msra.mxu0 0.0
        %1178 = vmatprep.subr.mxu0 0.0
        %1179 = vmatpush1.msra.mxu0 0.0
        %1180 = vmatprep.subr.mxu0 0.0
        %1181 = vmatpush1.msra.mxu0 0.0
        %1182 = vmatprep.subr.mxu0 0.0
        %1183 = vmatpush1.msra.mxu0 0.0
        %1184 = vmatprep.subr.mxu0 0.0
        %1185 = vmatpush1.msra.mxu0 0.0
        %1186 = vmatprep.subr.mxu0 0.0
        %1187 = vmatpush1.msra.mxu0 0.0
        %1188 = vmatprep.subr.mxu0 0.0
        %1189 = vmatpush1.msra.mxu0 0.0
        %1190 = vmatprep.subr.mxu0 0.0
        %1191 = vmatpush1.msra.mxu0 0.0
        %1192 = vmatprep.mubr.f32.mxu0 0.0
        %1193 = vmatmul.mubr.f32.gmra.mrb[0].mxu0 %v1126
        %v1194 = vpop.f32.mrb[0].mxu0
        %v1195 = vadd.f32 0.0, %v1194
        %v1196 = vpop.f32.mrb[0].mxu0
        %1197 = vdwg.mxu0
        %1199 = vrot.lane.b32.xlu0 %v1195, 16
        %v1200 = vpop.permute.xlu0 %1199
        %vm1202 = vcmask 195712
        %1203 = vst.msk [vmem:[#allocation2] sm:$0xff] %vm1202, %v1200
        %1204 = vrot.lane.b32.xlu0 %v687, 104
        %v1205 = vpop.permute.xlu0 %1204
        %1206 = vrot.lane.b32.xlu0 %v687, 72
        %v1207 = vpop.permute.xlu0 %1206
        %v1208 = vsel %vm693, %v1205, 0
        %v1210 = vsel %vm693, %v1207, 0
        %1212 = vmatprep.subr.mxu0 0.0
        %1213 = vmatpush1.xpose.msra.mxu0 %v1210
        %1214 = vmatprep.subr.mxu0 0.0
        %1215 = vmatpush1.xpose.msra.mxu0 0.0
        %1216 = vmatprep.subr.mxu0 0.0
        %1217 = vmatpush1.xpose.msra.mxu0 0.0
        %1218 = vmatprep.subr.mxu0 0.0
        %1219 = vmatpush1.xpose.msra.mxu0 0.0
        %1220 = vmatprep.subr.mxu0 0.0
        %1221 = vmatpush1.xpose.msra.mxu0 0.0
        %1222 = vmatprep.subr.mxu0 0.0
        %1223 = vmatpush1.xpose.msra.mxu0 0.0
        %1224 = vmatprep.subr.mxu0 0.0
        %1225 = vmatpush1.xpose.msra.mxu0 0.0
        %1226 = vmatprep.subr.mxu0 0.0
        %1227 = vmatpush1.xpose.msra.mxu0 0.0
        %1228 = vmatprep.subr.mxu0 0.0
        %1229 = vmatpush1.xpose.msra.mxu0 0.0
        %1230 = vmatprep.subr.mxu0 0.0
        %1231 = vmatpush1.xpose.msra.mxu0 0.0
        %1232 = vmatprep.subr.mxu0 0.0
        %1233 = vmatpush1.xpose.msra.mxu0 0.0
        %1234 = vmatprep.subr.mxu0 0.0
        %1235 = vmatpush1.xpose.msra.mxu0 0.0
        %1236 = vmatprep.subr.mxu0 0.0
        %1237 = vmatpush1.xpose.msra.mxu0 0.0
        %1238 = vmatprep.subr.mxu0 0.0
        %1239 = vmatpush1.xpose.msra.mxu0 0.0
        %1240 = vmatprep.subr.mxu0 0.0
        %1241 = vmatpush1.xpose.msra.mxu0 0.0
        %1242 = vmatprep.subr.mxu0 0.0
        %1243 = vmatpush1.xpose.msra.mxu0 0.0
        %1244 = vmatprep.subr.mxu0 0.0
        %1245 = vmatpush1.xpose.msra.mxu0 0.0
        %1246 = vmatprep.subr.mxu0 0.0
        %1247 = vmatpush1.xpose.msra.mxu0 0.0
        %1248 = vmatprep.subr.mxu0 0.0
        %1249 = vmatpush1.xpose.msra.mxu0 0.0
        %1250 = vmatprep.subr.mxu0 0.0
        %1251 = vmatpush1.xpose.msra.mxu0 0.0
        %1252 = vmatprep.subr.mxu0 0.0
        %1253 = vmatpush1.xpose.msra.mxu0 0.0
        %1254 = vmatprep.subr.mxu0 0.0
        %1255 = vmatpush1.xpose.msra.mxu0 0.0
        %1256 = vmatprep.subr.mxu0 0.0
        %1257 = vmatpush1.xpose.msra.mxu0 0.0
        %1258 = vmatprep.subr.mxu0 0.0
        %1259 = vmatpush1.xpose.msra.mxu0 0.0
        %1260 = vmatprep.subr.mxu0 0.0
        %1261 = vmatpush1.xpose.msra.mxu0 0.0
        %1262 = vmatprep.subr.mxu0 0.0
        %1263 = vmatpush1.xpose.msra.mxu0 0.0
        %1264 = vmatprep.subr.mxu0 0.0
        %1265 = vmatpush1.xpose.msra.mxu0 0.0
        %1266 = vmatprep.subr.mxu0 0.0
        %1267 = vmatpush1.xpose.msra.mxu0 0.0
        %1268 = vmatprep.subr.mxu0 0.0
        %1269 = vmatpush1.xpose.msra.mxu0 0.0
        %1270 = vmatprep.subr.mxu0 0.0
        %1271 = vmatpush1.xpose.msra.mxu0 0.0
        %1272 = vmatprep.subr.mxu0 0.0
        %1273 = vmatpush1.xpose.msra.mxu0 0.0
        %1274 = vmatprep.subr.mxu0 0.0
        %1275 = vmatpush1.xpose.msra.mxu0 0.0
        %1276 = vmatprep.mubr.f32.mxu0 0.0
        %1277 = vmatmul.mubr.f32.gmra.mrb[0].mxu0 %v1208
        %v1278 = vpop.f32.mrb[0].mxu0
        %v1279 = vadd.f32 0.0, %v1278
        %v1280 = vpop.f32.mrb[0].mxu0
        %1281 = vdwg.mxu0
        %v1282 = vmul.f32 %v1279, 0.35355338
        %v1283 = vadd.f32 %v1282, %v573
        %v1284 = vsel %vm693, %v1283, -inf
        %1285 = vmax.xlane.f32.xlu0 %v1284
        %v1286 = vpop.xlane.xlu0 %1285
        %v1287 = vsub.f32 %v1283, %v1286
        %v1288 = vmul.f32 %v1287, 1.442695
        %v1289 = vpow.pop %v1288
        %v1290 = vsel %vm693, %v1289, 0.0
        %1291 = vadd.xlane.f32.xlu0 %v1290
        %v1292 = vpop.xlane.xlu0 %1291
        %v1293 = vrcp.pop %v1292
        %v1294 = vmul.f32 %v1289, %v1293
        %1295 = vrot.lane.b32.xlu0 %v687, 40
        %v1296 = vpop.permute.xlu0 %1295
        %v1299 = vsel %vm693, %v1294, 0
        %1301 = vmatprep.subr.mxu0 0.0
        %1302 = vmatpush1.msra.mxu0 %v1296
        %1303 = vmatprep.subr.mxu0 0.0
        %1304 = vmatpush1.msra.mxu0 0.0
        %1305 = vmatprep.subr.mxu0 0.0
        %1306 = vmatpush1.msra.mxu0 0.0
        %1307 = vmatprep.subr.mxu0 0.0
        %1308 = vmatpush1.msra.mxu0 0.0
        %1309 = vmatprep.subr.mxu0 0.0
        %1310 = vmatpush1.msra.mxu0 0.0
        %1311 = vmatprep.subr.mxu0 0.0
        %1312 = vmatpush1.msra.mxu0 0.0
        %1313 = vmatprep.subr.mxu0 0.0
        %1314 = vmatpush1.msra.mxu0 0.0
        %1315 = vmatprep.subr.mxu0 0.0
        %1316 = vmatpush1.msra.mxu0 0.0
        %1317 = vmatprep.subr.mxu0 0.0
        %1318 = vmatpush1.msra.mxu0 0.0
        %1319 = vmatprep.subr.mxu0 0.0
        %1320 = vmatpush1.msra.mxu0 0.0
        %1321 = vmatprep.subr.mxu0 0.0
        %1322 = vmatpush1.msra.mxu0 0.0
        %1323 = vmatprep.subr.mxu0 0.0
        %1324 = vmatpush1.msra.mxu0 0.0
        %1325 = vmatprep.subr.mxu0 0.0
        %1326 = vmatpush1.msra.mxu0 0.0
        %1327 = vmatprep.subr.mxu0 0.0
        %1328 = vmatpush1.msra.mxu0 0.0
        %1329 = vmatprep.subr.mxu0 0.0
        %1330 = vmatpush1.msra.mxu0 0.0
        %1331 = vmatprep.subr.mxu0 0.0
        %1332 = vmatpush1.msra.mxu0 0.0
        %1333 = vmatprep.subr.mxu0 0.0
        %1334 = vmatpush1.msra.mxu0 0.0
        %1335 = vmatprep.subr.mxu0 0.0
        %1336 = vmatpush1.msra.mxu0 0.0
        %1337 = vmatprep.subr.mxu0 0.0
        %1338 = vmatpush1.msra.mxu0 0.0
        %1339 = vmatprep.subr.mxu0 0.0
        %1340 = vmatpush1.msra.mxu0 0.0
        %1341 = vmatprep.subr.mxu0 0.0
        %1342 = vmatpush1.msra.mxu0 0.0
        %1343 = vmatprep.subr.mxu0 0.0
        %1344 = vmatpush1.msra.mxu0 0.0
        %1345 = vmatprep.subr.mxu0 0.0
        %1346 = vmatpush1.msra.mxu0 0.0
        %1347 = vmatprep.subr.mxu0 0.0
        %1348 = vmatpush1.msra.mxu0 0.0
        %1349 = vmatprep.subr.mxu0 0.0
        %1350 = vmatpush1.msra.mxu0 0.0
        %1351 = vmatprep.subr.mxu0 0.0
        %1352 = vmatpush1.msra.mxu0 0.0
        %1353 = vmatprep.subr.mxu0 0.0
        %1354 = vmatpush1.msra.mxu0 0.0
        %1355 = vmatprep.subr.mxu0 0.0
        %1356 = vmatpush1.msra.mxu0 0.0
        %1357 = vmatprep.subr.mxu0 0.0
        %1358 = vmatpush1.msra.mxu0 0.0
        %1359 = vmatprep.subr.mxu0 0.0
        %1360 = vmatpush1.msra.mxu0 0.0
        %1361 = vmatprep.subr.mxu0 0.0
        %1362 = vmatpush1.msra.mxu0 0.0
        %1363 = vmatprep.subr.mxu0 0.0
        %1364 = vmatpush1.msra.mxu0 0.0
        %1365 = vmatprep.mubr.f32.mxu0 0.0
        %1366 = vmatmul.mubr.f32.gmra.mrb[0].mxu0 %v1299
        %v1367 = vpop.f32.mrb[0].mxu0
        %v1368 = vadd.f32 0.0, %v1367
        %v1369 = vpop.f32.mrb[0].mxu0
        %1370 = vdwg.mxu0
        %1372 = vrot.lane.b32.xlu0 %v1368, 24
        %v1373 = vpop.permute.xlu0 %1372
        %vm1375 = vcmask 261312
        %1376 = vst.msk [vmem:[#allocation2] sm:$0xff] %vm1375, %v1373
        %v1377 = vld [vmem:[#allocation2] sm:$0xff]
        %v1378 = vld [vmem:[%s6] sm:$0xff]
        %v1379 = vld [vmem:[%s6 + $0x8] sm:$0xff]
        %v1380 = vld [vmem:[%s6 + $0x10] sm:$0xff]
        %v1381 = vld [vmem:[%s6 + $0x18] sm:$0xff]
        %v1382 = vld [vmem:[%s7] sm:$0x1]
        %v1384 = vlaneseq
        %v1385 = vshrl.u32 %v1384, 7
        %v1386 = vsub.s32 0, %v1385
        %v1387 = vrot.slane %v1382, %v1386
        %v1390 = vsel %vm577, %v1377, 0
        %1392 = vmatprep.subr.mxu0 0.0
        %1393 = vmatpush1.msra.mxu0 %v1378
        %1394 = vmatprep.subr.mxu0 0.0
        %1395 = vmatpush1.msra.mxu0 %v1379
        %1396 = vmatprep.subr.mxu0 0.0
        %1397 = vmatpush1.msra.mxu0 %v1380
        %1398 = vmatprep.subr.mxu0 0.0
        %1399 = vmatpush1.msra.mxu0 %v1381
        %1400 = vmatprep.subr.mxu0 0.0
        %1401 = vmatpush1.msra.mxu0 0.0
        %1402 = vmatprep.subr.mxu0 0.0
        %1403 = vmatpush1.msra.mxu0 0.0
        %1404 = vmatprep.subr.mxu0 0.0
        %1405 = vmatpush1.msra.mxu0 0.0
        %1406 = vmatprep.subr.mxu0 0.0
        %1407 = vmatpush1.msra.mxu0 0.0
        %1408 = vmatprep.subr.mxu0 0.0
        %1409 = vmatpush1.msra.mxu0 0.0
        %1410 = vmatprep.subr.mxu0 0.0
        %1411 = vmatpush1.msra.mxu0 0.0
        %1412 = vmatprep.subr.mxu0 0.0
        %1413 = vmatpush1.msra.mxu0 0.0
        %1414 = vmatprep.subr.mxu0 0.0
        %1415 = vmatpush1.msra.mxu0 0.0
        %1416 = vmatprep.subr.mxu0 0.0
        %1417 = vmatpush1.msra.mxu0 0.0
        %1418 = vmatprep.subr.mxu0 0.0
        %1419 = vmatpush1.msra.mxu0 0.0
        %1420 = vmatprep.subr.mxu0 0.0
        %1421 = vmatpush1.msra.mxu0 0.0
        %1422 = vmatprep.subr.mxu0 0.0
        %1423 = vmatpush1.msra.mxu0 0.0
        %1424 = vmatprep.subr.mxu0 0.0
        %1425 = vmatpush1.msra.mxu0 0.0
        %1426 = vmatprep.subr.mxu0 0.0
        %1427 = vmatpush1.msra.mxu0 0.0
        %1428 = vmatprep.subr.mxu0 0.0
        %1429 = vmatpush1.msra.mxu0 0.0
        %1430 = vmatprep.subr.mxu0 0.0
        %1431 = vmatpush1.msra.mxu0 0.0
        %1432 = vmatprep.subr.mxu0 0.0
        %1433 = vmatpush1.msra.mxu0 0.0
        %1434 = vmatprep.subr.mxu0 0.0
        %1435 = vmatpush1.msra.mxu0 0.0
        %1436 = vmatprep.subr.mxu0 0.0
        %1437 = vmatpush1.msra.mxu0 0.0
        %1438 = vmatprep.subr.mxu0 0.0
        %1439 = vmatpush1.msra.mxu0 0.0
        %1440 = vmatprep.subr.mxu0 0.0
        %1441 = vmatpush1.msra.mxu0 0.0
        %1442 = vmatprep.subr.mxu0 0.0
        %1443 = vmatpush1.msra.mxu0 0.0
        %1444 = vmatprep.subr.mxu0 0.0
        %1445 = vmatpush1.msra.mxu0 0.0
        %1446 = vmatprep.subr.mxu0 0.0
        %1447 = vmatpush1.msra.mxu0 0.0
        %1448 = vmatprep.subr.mxu0 0.0
        %1449 = vmatpush1.msra.mxu0 0.0
        %1450 = vmatprep.subr.mxu0 0.0
        %1451 = vmatpush1.msra.mxu0 0.0
        %1452 = vmatprep.subr.mxu0 0.0
        %1453 = vmatpush1.msra.mxu0 0.0
        %1454 = vmatprep.subr.mxu0 0.0
        %1455 = vmatpush1.msra.mxu0 0.0
        %1456 = vmatprep.mubr.f32.mxu0 0.0
        %1457 = vmatmul.mubr.f32.gmra.mrb[0].mxu0 %v1390
        %v1458 = vpop.f32.mrb[0].mxu0
        %v1459 = vadd.f32 %v1387, %v1458
        %v1460 = vpop.f32.mrb[0].mxu0
        %1461 = vdwg.mxu0
        %v1462 = vadd.f32 %v1459, %v605
        %v1463 = vld [vmem:[%s8] sm:$0x1]
        %v1464 = vld [vmem:[%s9] sm:$0x1]
        %v1465 = vsel %vm577, %v1462, 0.0
        %1466 = vadd.xlane.f32.xlu0 %v1465
        %v1467 = vpop.xlane.xlu0 %1466
        %v1468 = vmul.f32 %v1467, %v581
        %v1469 = vsub.f32 %v1462, %v1468
        %v1470 = vmul.f32 %v1469, %v1469
        %v1471 = vsel %vm577, %v1470, 0.0
        %1472 = vadd.xlane.f32.xlu0 %v1471
        %v1473 = vpop.xlane.xlu0 %1472
        %v1474 = vmul.f32 %v1473, %v581
        %v1475 = vadd.f32 %v1474, 1e-12
        %v1476 = vrsqrt.pop %v1475
        %v1477 = vmul.f32 %v1469, %v1476
        %v1479 = vlaneseq
        %v1480 = vshrl.u32 %v1479, 7
        %v1481 = vsub.s32 0, %v1480
        %v1482 = vrot.slane %v1463, %v1481
        %v1484 = vmul.f32 %v1477, %v1482
        %v1486 = vlaneseq
        %v1487 = vshrl.u32 %v1486, 7
        %v1488 = vsub.s32 0, %v1487
        %v1489 = vrot.slane %v1464, %v1488
        %v1491 = vadd.f32 %v1484, %v1489
        %v1492 = vld [vmem:[%s10] sm:$0xff]
        %v1493 = vld [vmem:[%s10 + $0x8] sm:$0xff]
        %v1494 = vld [vmem:[%s10 + $0x10] sm:$0xff]
        %v1495 = vld [vmem:[%s10 + $0x18] sm:$0xff]
        %v1496 = vld [vmem:[%s11] sm:$0x1]
        %v1498 = vlaneseq
        %v1499 = vshrl.u32 %v1498, 7
        %v1500 = vsub.s32 0, %v1499
        %v1501 = vrot.slane %v1496, %v1500
        %v1504 = vsel %vm577, %v1491, 0
        %1506 = vmatprep.subr.mxu0 0.0
        %1507 = vmatpush1.msra.mxu0 %v1492
        %1508 = vmatprep.subr.mxu0 0.0
        %1509 = vmatpush1.msra.mxu0 %v1493
        %1510 = vmatprep.subr.mxu0 0.0
        %1511 = vmatpush1.msra.mxu0 %v1494
        %1512 = vmatprep.subr.mxu0 0.0
        %1513 = vmatpush1.msra.mxu0 %v1495
        %1514 = vmatprep.subr.mxu0 0.0
        %1515 = vmatpush1.msra.mxu0 0.0
        %1516 = vmatprep.subr.mxu0 0.0
        %1517 = vmatpush1.msra.mxu0 0.0
        %1518 = vmatprep.subr.mxu0 0.0
        %1519 = vmatpush1.msra.mxu0 0.0
        %1520 = vmatprep.subr.mxu0 0.0
        %1521 = vmatpush1.msra.mxu0 0.0
        %1522 = vmatprep.subr.mxu0 0.0
        %1523 = vmatpush1.msra.mxu0 0.0
        %1524 = vmatprep.subr.mxu0 0.0
        %1525 = vmatpush1.msra.mxu0 0.0
        %1526 = vmatprep.subr.mxu0 0.0
        %1527 = vmatpush1.msra.mxu0 0.0
        %1528 = vmatprep.subr.mxu0 0.0
        %1529 = vmatpush1.msra.mxu0 0.0
        %1530 = vmatprep.subr.mxu0 0.0
        %1531 = vmatpush1.msra.mxu0 0.0
        %1532 = vmatprep.subr.mxu0 0.0
        %1533 = vmatpush1.msra.mxu0 0.0
        %1534 = vmatprep.subr.mxu0 0.0
        %1535 = vmatpush1.msra.mxu0 0.0
        %1536 = vmatprep.subr.mxu0 0.0
        %1537 = vmatpush1.msra.mxu0 0.0
        %1538 = vmatprep.subr.mxu0 0.0
        %1539 = vmatpush1.msra.mxu0 0.0
        %1540 = vmatprep.subr.mxu0 0.0
        %1541 = vmatpush1.msra.mxu0 0.0
        %1542 = vmatprep.subr.mxu0 0.0
        %1543 = vmatpush1.msra.mxu0 0.0
        %1544 = vmatprep.subr.mxu0 0.0
        %1545 = vmatpush1.msra.mxu0 0.0
        %1546 = vmatprep.subr.mxu0 0.0
        %1547 = vmatpush1.msra.mxu0 0.0
        %1548 = vmatprep.subr.mxu0 0.0
        %1549 = vmatpush1.msra.mxu0 0.0
        %1550 = vmatprep.subr.mxu0 0.0
        %1551 = vmatpush1.msra.mxu0 0.0
        %1552 = vmatprep.subr.mxu0 0.0
        %1553 = vmatpush1.msra.mxu0 0.0
        %1554 = vmatprep.subr.mxu0 0.0
        %1555 = vmatpush1.msra.mxu0 0.0
        %1556 = vmatprep.subr.mxu0 0.0
        %1557 = vmatpush1.msra.mxu0 0.0
        %1558 = vmatprep.subr.mxu0 0.0
        %1559 = vmatpush1.msra.mxu0 0.0
        %1560 = vmatprep.subr.mxu0 0.0
        %1561 = vmatpush1.msra.mxu0 0.0
        %1562 = vmatprep.subr.mxu0 0.0
        %1563 = vmatpush1.msra.mxu0 0.0
        %1564 = vmatprep.subr.mxu0 0.0
        %1565 = vmatpush1.msra.mxu0 0.0
        %1566 = vmatprep.subr.mxu0 0.0
        %1567 = vmatpush1.msra.mxu0 0.0
        %1568 = vmatprep.subr.mxu0 0.0
        %1569 = vmatpush1.msra.mxu0 0.0
        %1570 = vmatprep.mubr.f32.mxu0 0.0
        %1571 = vmatmul.mubr.f32.gmra.mrb[0].mxu0 %v1504
        %v1572 = vpop.f32.mrb[0].mxu0
        %v1573 = vadd.f32 %v1501, %v1572
        %v1574 = vpop.f32.mrb[0].mxu0
        %1575 = vdwg.mxu0
        %v1576 = vmul.f32 %v1573, 0.5
        %v1577 = vmul.f32 %v1573, 0.70710677
        %v1578 = verf.f32.pop %v1577
        %v1579 = vadd.f32 %v1578, 1.0
        %v1580 = vmul.f32 %v1576, %v1579
        %v1581 = vld [vmem:[%s12] sm:$0xff]
        %v1582 = vld [vmem:[%s12 + $0x8] sm:$0xff]
        %v1583 = vld [vmem:[%s12 + $0x10] sm:$0xff]
        %v1584 = vld [vmem:[%s12 + $0x18] sm:$0xff]
        %v1585 = vld [vmem:[%s12 + $0x20] sm:$0xff]
        %v1586 = vld [vmem:[%s12 + $0x28] sm:$0xff]
        %v1587 = vld [vmem:[%s12 + $0x30] sm:$0xff]
        %v1588 = vld [vmem:[%s12 + $0x38] sm:$0xff]
        %v1589 = vld [vmem:[%s13] sm:$0x1]
        %v1591 = vlaneseq
        %v1592 = vshrl.u32 %v1591, 7
        %v1593 = vsub.s32 0, %v1592
        %v1594 = vrot.slane %v1589, %v1593
        %vm1596 = vcmask 523264
        %v1598 = vsel %vm1596, %v1580, 0
        %1600 = vmatprep.subr.mxu0 0.0
        %1601 = vmatpush1.msra.mxu0 %v1581
        %1602 = vmatprep.subr.mxu0 0.0
        %1603 = vmatpush1.msra.mxu0 %v1582
        %1604 = vmatprep.subr.mxu0 0.0
        %1605 = vmatpush1.msra.mxu0 %v1583
        %1606 = vmatprep.subr.mxu0 0.0
        %1607 = vmatpush1.msra.mxu0 %v1584
        %1608 = vmatprep.subr.mxu0 0.0
        %1609 = vmatpush1.msra.mxu0 %v1585
        %1610 = vmatprep.subr.mxu0 0.0
        %1611 = vmatpush1.msra.mxu0 %v1586
        %1612 = vmatprep.subr.mxu0 0.0
        %1613 = vmatpush1.msra.mxu0 %v1587
        %1614 = vmatprep.subr.mxu0 0.0
        %1615 = vmatpush1.msra.mxu0 %v1588
        %1616 = vmatprep.subr.mxu0 0.0
        %1617 = vmatpush1.msra.mxu0 0.0
        %1618 = vmatprep.subr.mxu0 0.0
        %1619 = vmatpush1.msra.mxu0 0.0
        %1620 = vmatprep.subr.mxu0 0.0
        %1621 = vmatpush1.msra.mxu0 0.0
        %1622 = vmatprep.subr.mxu0 0.0
        %1623 = vmatpush1.msra.mxu0 0.0
        %1624 = vmatprep.subr.mxu0 0.0
        %1625 = vmatpush1.msra.mxu0 0.0
        %1626 = vmatprep.subr.mxu0 0.0
        %1627 = vmatpush1.msra.mxu0 0.0
        %1628 = vmatprep.subr.mxu0 0.0
        %1629 = vmatpush1.msra.mxu0 0.0
        %1630 = vmatprep.subr.mxu0 0.0
        %1631 = vmatpush1.msra.mxu0 0.0
        %1632 = vmatprep.subr.mxu0 0.0
        %1633 = vmatpush1.msra.mxu0 0.0
        %1634 = vmatprep.subr.mxu0 0.0
        %1635 = vmatpush1.msra.mxu0 0.0
        %1636 = vmatprep.subr.mxu0 0.0
        %1637 = vmatpush1.msra.mxu0 0.0
        %1638 = vmatprep.subr.mxu0 0.0
        %1639 = vmatpush1.msra.mxu0 0.0
        %1640 = vmatprep.subr.mxu0 0.0
        %1641 = vmatpush1.msra.mxu0 0.0
        %1642 = vmatprep.subr.mxu0 0.0
        %1643 = vmatpush1.msra.mxu0 0.0
        %1644 = vmatprep.subr.mxu0 0.0
        %1645 = vmatpush1.msra.mxu0 0.0
        %1646 = vmatprep.subr.mxu0 0.0
        %1647 = vmatpush1.msra.mxu0 0.0
        %1648 = vmatprep.subr.mxu0 0.0
        %1649 = vmatpush1.msra.mxu0 0.0
        %1650 = vmatprep.subr.mxu0 0.0
        %1651 = vmatpush1.msra.mxu0 0.0
        %1652 = vmatprep.subr.mxu0 0.0
        %1653 = vmatpush1.msra.mxu0 0.0
        %1654 = vmatprep.subr.mxu0 0.0
        %1655 = vmatpush1.msra.mxu0 0.0
        %1656 = vmatprep.subr.mxu0 0.0
        %1657 = vmatpush1.msra.mxu0 0.0
        %1658 = vmatprep.subr.mxu0 0.0
        %1659 = vmatpush1.msra.mxu0 0.0
        %1660 = vmatprep.subr.mxu0 0.0
        %1661 = vmatpush1.msra.mxu0 0.0
        %1662 = vmatprep.subr.mxu0 0.0
        %1663 = vmatpush1.msra.mxu0 0.0
        %1664 = vmatprep.mubr.f32.mxu0 0.0
        %1665 = vmatmul.mubr.f32.gmra.mrb[0].mxu0 %v1598
        %v1666 = vpop.f32.mrb[0].mxu0
        %v1667 = vadd.f32 %v1594, %v1666
        %v1668 = vpop.f32.mrb[0].mxu0
        %1669 = vdwg.mxu0
        %v1670 = vadd.f32 %v1667, %v1491
        %v1671 = vld [vmem:[%s14] sm:$0x1]
        %v1672 = vld [vmem:[%s15] sm:$0x1]
        %v1673 = vsel %vm577, %v1670, 0.0
        %1674 = vadd.xlane.f32.xlu0 %v1673
        %v1675 = vpop.xlane.xlu0 %1674
        %v1676 = vmul.f32 %v1675, %v581
        %v1677 = vsub.f32 %v1670, %v1676
        %v1678 = vmul.f32 %v1677, %v1677
        %v1679 = vsel %vm577, %v1678, 0.0
        %1680 = vadd.xlane.f32.xlu0 %v1679
        %v1681 = vpop.xlane.xlu0 %1680
        %v1682 = vmul.f32 %v1681, %v581
        %v1683 = vadd.f32 %v1682, 1e-12
        %v1684 = vrsqrt.pop %v1683
        %v1685 = vmul.f32 %v1677, %v1684
        %v1687 = vlaneseq
        %v1688 = vshrl.u32 %v1687, 7
        %v1689 = vsub.s32 0, %v1688
        %v1690 = vrot.slane %v1671, %v1689
        %v1692 = vmul.f32 %v1685, %v1690
        %v1694 = vlaneseq
        %v1695 = vshrl.u32 %v1694, 7
        %v1696 = vsub.s32 0, %v1695
        %v1697 = vrot.slane %v1672, %v1696
        %v1699 = vadd.f32 %v1692, %v1697
        %s1700 = scalar_lea.vmem %s4, 32
        %v1701 = vld [vmem:[%s1700] sm:$0xff]
        %v1702 = vld [vmem:[%s1700 + $0x8] sm:$0xff]
        %v1703 = vld [vmem:[%s1700 + $0x10] sm:$0xff]
        %v1704 = vld [vmem:[%s1700 + $0x18] sm:$0xff]
        %s1705 = scalar_lea.vmem %s5, 1
        %v1706 = vld [vmem:[%s1705] sm:$0x1]
        %v1708 = vlaneseq
        %v1709 = vshrl.u32 %v1708, 7
        %v1710 = vsub.s32 0, %v1709
        %v1711 = vrot.slane %v1706, %v1710
        %v1714 = vsel %vm577, %v1699, 0
        %1716 = vmatprep.subr.mxu0 0.0
        %1717 = vmatpush1.msra.mxu0 %v1701
        %1718 = vmatprep.subr.mxu0 0.0
        %1719 = vmatpush1.msra.mxu0 %v1702
        %1720 = vmatprep.subr.mxu0 0.0
        %1721 = vmatpush1.msra.mxu0 %v1703
        %1722 = vmatprep.subr.mxu0 0.0
        %1723 = vmatpush1.msra.mxu0 %v1704
        %1724 = vmatprep.subr.mxu0 0.0
        %1725 = vmatpush1.msra.mxu0 0.0
        %1726 = vmatprep.subr.mxu0 0.0
        %1727 = vmatpush1.msra.mxu0 0.0
        %1728 = vmatprep.subr.mxu0 0.0
        %1729 = vmatpush1.msra.mxu0 0.0
        %1730 = vmatprep.subr.mxu0 0.0
        %1731 = vmatpush1.msra.mxu0 0.0
        %1732 = vmatprep.subr.mxu0 0.0
        %1733 = vmatpush1.msra.mxu0 0.0
        %1734 = vmatprep.subr.mxu0 0.0
        %1735 = vmatpush1.msra.mxu0 0.0
        %1736 = vmatprep.subr.mxu0 0.0
        %1737 = vmatpush1.msra.mxu0 0.0
        %1738 = vmatprep.subr.mxu0 0.0
        %1739 = vmatpush1.msra.mxu0 0.0
        %1740 = vmatprep.subr.mxu0 0.0
        %1741 = vmatpush1.msra.mxu0 0.0
        %1742 = vmatprep.subr.mxu0 0.0
        %1743 = vmatpush1.msra.mxu0 0.0
        %1744 = vmatprep.subr.mxu0 0.0
        %1745 = vmatpush1.msra.mxu0 0.0
        %1746 = vmatprep.subr.mxu0 0.0
        %1747 = vmatpush1.msra.mxu0 0.0
        %1748 = vmatprep.subr.mxu0 0.0
        %1749 = vmatpush1.msra.mxu0 0.0
        %1750 = vmatprep.subr.mxu0 0.0
        %1751 = vmatpush1.msra.mxu0 0.0
        %1752 = vmatprep.subr.mxu0 0.0
        %1753 = vmatpush1.msra.mxu0 0.0
        %1754 = vmatprep.subr.mxu0 0.0
        %1755 = vmatpush1.msra.mxu0 0.0
        %1756 = vmatprep.subr.mxu0 0.0
        %1757 = vmatpush1.msra.mxu0 0.0
        %1758 = vmatprep.subr.mxu0 0.0
        %1759 = vmatpush1.msra.mxu0 0.0
        %1760 = vmatprep.subr.mxu0 0.0
        %1761 = vmatpush1.msra.mxu0 0.0
        %1762 = vmatprep.subr.mxu0 0.0
        %1763 = vmatpush1.msra.mxu0 0.0
        %1764 = vmatprep.subr.mxu0 0.0
        %1765 = vmatpush1.msra.mxu0 0.0
        %1766 = vmatprep.subr.mxu0 0.0
        %1767 = vmatpush1.msra.mxu0 0.0
        %1768 = vmatprep.subr.mxu0 0.0
        %1769 = vmatpush1.msra.mxu0 0.0
        %1770 = vmatprep.subr.mxu0 0.0
        %1771 = vmatpush1.msra.mxu0 0.0
        %1772 = vmatprep.subr.mxu0 0.0
        %1773 = vmatpush1.msra.mxu0 0.0
        %1774 = vmatprep.subr.mxu0 0.0
        %1775 = vmatpush1.msra.mxu0 0.0
        %1776 = vmatprep.subr.mxu0 0.0
        %1777 = vmatpush1.msra.mxu0 0.0
        %1778 = vmatprep.subr.mxu0 0.0
        %1779 = vmatpush1.msra.mxu0 0.0
        %1780 = vmatprep.mubr.f32.mxu0 0.0
        %1781 = vmatmul.mubr.f32.gmra.mrb[0].mxu0 %v1714
        %v1782 = vpop.f32.mrb[0].mxu0
        %v1783 = vadd.f32 %v1711, %v1782
        %v1784 = vpop.f32.mrb[0].mxu0
        %1785 = vdwg.mxu0
        %1787 = vrot.lane.b32.xlu0 %v1783, 96
        %v1788 = vpop.permute.xlu0 %1787
        %v1789 = vsel %vm693, %v1783, 0
        %v1791 = vsel %vm693, %v1788, 0
        %1793 = vmatprep.subr.mxu0 0.0
        %1794 = vmatpush1.xpose.msra.mxu0 %v1791
        %1795 = vmatprep.subr.mxu0 0.0
        %1796 = vmatpush1.xpose.msra.mxu0 0.0
        %1797 = vmatprep.subr.mxu0 0.0
        %1798 = vmatpush1.xpose.msra.mxu0 0.0
        %1799 = vmatprep.subr.mxu0 0.0
        %1800 = vmatpush1.xpose.msra.mxu0 0.0
        %1801 = vmatprep.subr.mxu0 0.0
        %1802 = vmatpush1.xpose.msra.mxu0 0.0
        %1803 = vmatprep.subr.mxu0 0.0
        %1804 = vmatpush1.xpose.msra.mxu0 0.0
        %1805 = vmatprep.subr.mxu0 0.0
        %1806 = vmatpush1.xpose.msra.mxu0 0.0
        %1807 = vmatprep.subr.mxu0 0.0
        %1808 = vmatpush1.xpose.msra.mxu0 0.0
        %1809 = vmatprep.subr.mxu0 0.0
        %1810 = vmatpush1.xpose.msra.mxu0 0.0
        %1811 = vmatprep.subr.mxu0 0.0
        %1812 = vmatpush1.xpose.msra.mxu0 0.0
        %1813 = vmatprep.subr.mxu0 0.0
        %1814 = vmatpush1.xpose.msra.mxu0 0.0
        %1815 = vmatprep.subr.mxu0 0.0
        %1816 = vmatpush1.xpose.msra.mxu0 0.0
        %1817 = vmatprep.subr.mxu0 0.0
        %1818 = vmatpush1.xpose.msra.mxu0 0.0
        %1819 = vmatprep.subr.mxu0 0.0
        %1820 = vmatpush1.xpose.msra.mxu0 0.0
        %1821 = vmatprep.subr.mxu0 0.0
        %1822 = vmatpush1.xpose.msra.mxu0 0.0
        %1823 = vmatprep.subr.mxu0 0.0
        %1824 = vmatpush1.xpose.msra.mxu0 0.0
        %1825 = vmatprep.subr.mxu0 0.0
        %1826 = vmatpush1.xpose.msra.mxu0 0.0
        %1827 = vmatprep.subr.mxu0 0.0
        %1828 = vmatpush1.xpose.msra.mxu0 0.0
        %1829 = vmatprep.subr.mxu0 0.0
        %1830 = vmatpush1.xpose.msra.mxu0 0.0
        %1831 = vmatprep.subr.mxu0 0.0
        %1832 = vmatpush1.xpose.msra.mxu0 0.0
        %1833 = vmatprep.subr.mxu0 0.0
        %1834 = vmatpush1.xpose.msra.mxu0 0.0
        %1835 = vmatprep.subr.mxu0 0.0
        %1836 = vmatpush1.xpose.msra.mxu0 0.0
        %1837 = vmatprep.subr.mxu0 0.0
        %1838 = vmatpush1.xpose.msra.mxu0 0.0
        %1839 = vmatprep.subr.mxu0 0.0
        %1840 = vmatpush1.xpose.msra.mxu0 0.0
        %1841 = vmatprep.subr.mxu0 0.0
        %1842 = vmatpush1.xpose.msra.mxu0 0.0
        %1843 = vmatprep.subr.mxu0 0.0
        %1844 = vmatpush1.xpose.msra.mxu0 0.0
        %1845 = vmatprep.subr.mxu0 0.0
        %1846 = vmatpush1.xpose.msra.mxu0 0.0
        %1847 = vmatprep.subr.mxu0 0.0
        %1848 = vmatpush1.xpose.msra.mxu0 0.0
        %1849 = vmatprep.subr.mxu0 0.0
        %1850 = vmatpush1.xpose.msra.mxu0 0.0
        %1851 = vmatprep.subr.mxu0 0.0
        %1852 = vmatpush1.xpose.msra.mxu0 0.0
        %1853 = vmatprep.subr.mxu0 0.0
        %1854 = vmatpush1.xpose.msra.mxu0 0.0
        %1855 = vmatprep.subr.mxu0 0.0
        %1856 = vmatpush1.xpose.msra.mxu0 0.0
        %1857 = vmatprep.mubr.f32.mxu0 0.0
        %1858 = vmatmul.mubr.f32.gmra.mrb[0].mxu0 %v1789
        %v1859 = vpop.f32.mrb[0].mxu0
        %v1860 = vadd.f32 0.0, %v1859
        %v1861 = vpop.f32.mrb[0].mxu0
        %1862 = vdwg.mxu0
        %v1863 = vmul.f32 %v1860, 0.35355338
        %v1864 = vadd.f32 %v1863, %v573
        %v1865 = vsel %vm693, %v1864, -inf
        %1866 = vmax.xlane.f32.xlu0 %v1865
        %v1867 = vpop.xlane.xlu0 %1866
        %v1868 = vsub.f32 %v1864, %v1867
        %v1869 = vmul.f32 %v1868, 1.442695
        %v1870 = vpow.pop %v1869
        %v1871 = vsel %vm693, %v1870, 0.0
        %1872 = vadd.xlane.f32.xlu0 %v1871
        %v1873 = vpop.xlane.xlu0 %1872
        %v1874 = vrcp.pop %v1873
        %v1875 = vmul.f32 %v1870, %v1874
        %1876 = vrot.lane.b32.xlu0 %v1783, 64
        %v1877 = vpop.permute.xlu0 %1876
        %v1880 = vsel %vm693, %v1875, 0
        %1882 = vmatprep.subr.mxu0 0.0
        %1883 = vmatpush1.msra.mxu0 %v1877
        %1884 = vmatprep.subr.mxu0 0.0
        %1885 = vmatpush1.msra.mxu0 0.0
        %1886 = vmatprep.subr.mxu0 0.0
        %1887 = vmatpush1.msra.mxu0 0.0
        %1888 = vmatprep.subr.mxu0 0.0
        %1889 = vmatpush1.msra.mxu0 0.0
        %1890 = vmatprep.subr.mxu0 0.0
        %1891 = vmatpush1.msra.mxu0 0.0
        %1892 = vmatprep.subr.mxu0 0.0
        %1893 = vmatpush1.msra.mxu0 0.0
        %1894 = vmatprep.subr.mxu0 0.0
        %1895 = vmatpush1.msra.mxu0 0.0
        %1896 = vmatprep.subr.mxu0 0.0
        %1897 = vmatpush1.msra.mxu0 0.0
        %1898 = vmatprep.subr.mxu0 0.0
        %1899 = vmatpush1.msra.mxu0 0.0
        %1900 = vmatprep.subr.mxu0 0.0
        %1901 = vmatpush1.msra.mxu0 0.0
        %1902 = vmatprep.subr.mxu0 0.0
        %1903 = vmatpush1.msra.mxu0 0.0
        %1904 = vmatprep.subr.mxu0 0.0
        %1905 = vmatpush1.msra.mxu0 0.0
        %1906 = vmatprep.subr.mxu0 0.0
        %1907 = vmatpush1.msra.mxu0 0.0
        %1908 = vmatprep.subr.mxu0 0.0
        %1909 = vmatpush1.msra.mxu0 0.0
        %1910 = vmatprep.subr.mxu0 0.0
        %1911 = vmatpush1.msra.mxu0 0.0
        %1912 = vmatprep.subr.mxu0 0.0
        %1913 = vmatpush1.msra.mxu0 0.0
        %1914 = vmatprep.subr.mxu0 0.0
        %1915 = vmatpush1.msra.mxu0 0.0
        %1916 = vmatprep.subr.mxu0 0.0
        %1917 = vmatpush1.msra.mxu0 0.0
        %1918 = vmatprep.subr.mxu0 0.0
        %1919 = vmatpush1.msra.mxu0 0.0
        %1920 = vmatprep.subr.mxu0 0.0
        %1921 = vmatpush1.msra.mxu0 0.0
        %1922 = vmatprep.subr.mxu0 0.0
        %1923 = vmatpush1.msra.mxu0 0.0
        %1924 = vmatprep.subr.mxu0 0.0
        %1925 = vmatpush1.msra.mxu0 0.0
        %1926 = vmatprep.subr.mxu0 0.0
        %1927 = vmatpush1.msra.mxu0 0.0
        %1928 = vmatprep.subr.mxu0 0.0
        %1929 = vmatpush1.msra.mxu0 0.0
        %1930 = vmatprep.subr.mxu0 0.0
        %1931 = vmatpush1.msra.mxu0 0.0
        %1932 = vmatprep.subr.mxu0 0.0
        %1933 = vmatpush1.msra.mxu0 0.0
        %1934 = vmatprep.subr.mxu0 0.0
        %1935 = vmatpush1.msra.mxu0 0.0
        %1936 = vmatprep.subr.mxu0 0.0
        %1937 = vmatpush1.msra.mxu0 0.0
        %1938 = vmatprep.subr.mxu0 0.0
        %1939 = vmatpush1.msra.mxu0 0.0
        %1940 = vmatprep.subr.mxu0 0.0
        %1941 = vmatpush1.msra.mxu0 0.0
        %1942 = vmatprep.subr.mxu0 0.0
        %1943 = vmatpush1.msra.mxu0 0.0
        %1944 = vmatprep.subr.mxu0 0.0
        %1945 = vmatpush1.msra.mxu0 0.0
        %1946 = vmatprep.mubr.f32.mxu0 0.0
        %1947 = vmatmul.mubr.f32.gmra.mrb[0].mxu0 %v1880
        %v1948 = vpop.f32.mrb[0].mxu0
        %v1949 = vadd.f32 0.0, %v1948
        %v1950 = vpop.f32.mrb[0].mxu0
        %1951 = vdwg.mxu0
        %1952 = vst.msk [vmem:[#allocation2] sm:$0xff] %vm693, %v1949
        %1953 = vrot.lane.b32.xlu0 %v1783, 120
        %v1954 = vpop.permute.xlu0 %1953
        %1955 = vrot.lane.b32.xlu0 %v1783, 88
        %v1956 = vpop.permute.xlu0 %1955
        %v1957 = vsel %vm693, %v1954, 0
        %v1959 = vsel %vm693, %v1956, 0
        %1961 = vmatprep.subr.mxu0 0.0
        %1962 = vmatpush1.xpose.msra.mxu0 %v1959
        %1963 = vmatprep.subr.mxu0 0.0
        %1964 = vmatpush1.xpose.msra.mxu0 0.0
        %1965 = vmatprep.subr.mxu0 0.0
        %1966 = vmatpush1.xpose.msra.mxu0 0.0
        %1967 = vmatprep.subr.mxu0 0.0
        %1968 = vmatpush1.xpose.msra.mxu0 0.0
        %1969 = vmatprep.subr.mxu0 0.0
        %1970 = vmatpush1.xpose.msra.mxu0 0.0
        %1971 = vmatprep.subr.mxu0 0.0
        %1972 = vmatpush1.xpose.msra.mxu0 0.0
        %1973 = vmatprep.subr.mxu0 0.0
        %1974 = vmatpush1.xpose.msra.mxu0 0.0
        %1975 = vmatprep.subr.mxu0 0.0
        %1976 = vmatpush1.xpose.msra.mxu0 0.0
        %1977 = vmatprep.subr.mxu0 0.0
        %1978 = vmatpush1.xpose.msra.mxu0 0.0
        %1979 = vmatprep.subr.mxu0 0.0
        %1980 = vmatpush1.xpose.msra.mxu0 0.0
        %1981 = vmatprep.subr.mxu0 0.0
        %1982 = vmatpush1.xpose.msra.mxu0 0.0
        %1983 = vmatprep.subr.mxu0 0.0
        %1984 = vmatpush1.xpose.msra.mxu0 0.0
        %1985 = vmatprep.subr.mxu0 0.0
        %1986 = vmatpush1.xpose.msra.mxu0 0.0
        %1987 = vmatprep.subr.mxu0 0.0
        %1988 = vmatpush1.xpose.msra.mxu0 0.0
        %1989 = vmatprep.subr.mxu0 0.0
        %1990 = vmatpush1.xpose.msra.mxu0 0.0
        %1991 = vmatprep.subr.mxu0 0.0
        %1992 = vmatpush1.xpose.msra.mxu0 0.0
        %1993 = vmatprep.subr.mxu0 0.0
        %1994 = vmatpush1.xpose.msra.mxu0 0.0
        %1995 = vmatprep.subr.mxu0 0.0
        %1996 = vmatpush1.xpose.msra.mxu0 0.0
        %1997 = vmatprep.subr.mxu0 0.0
        %1998 = vmatpush1.xpose.msra.mxu0 0.0
        %1999 = vmatprep.subr.mxu0 0.0
        %2000 = vmatpush1.xpose.msra.mxu0 0.0
        %2001 = vmatprep.subr.mxu0 0.0
        %2002 = vmatpush1.xpose.msra.mxu0 0.0
        %2003 = vmatprep.subr.mxu0 0.0
        %2004 = vmatpush1.xpose.msra.mxu0 0.0
        %2005 = vmatprep.subr.mxu0 0.0
        %2006 = vmatpush1.xpose.msra.mxu0 0.0
        %2007 = vmatprep.subr.mxu0 0.0
        %2008 = vmatpush1.xpose.msra.mxu0 0.0
        %2009 = vmatprep.subr.mxu0 0.0
        %2010 = vmatpush1.xpose.msra.mxu0 0.0
        %2011 = vmatprep.subr.mxu0 0.0
        %2012 = vmatpush1.xpose.msra.mxu0 0.0
        %2013 = vmatprep.subr.mxu0 0.0
        %2014 = vmatpush1.xpose.msra.mxu0 0.0
        %2015 = vmatprep.subr.mxu0 0.0
        %2016 = vmatpush1.xpose.msra.mxu0 0.0
        %2017 = vmatprep.subr.mxu0 0.0
        %2018 = vmatpush1.xpose.msra.mxu0 0.0
        %2019 = vmatprep.subr.mxu0 0.0
        %2020 = vmatpush1.xpose.msra.mxu0 0.0
        %2021 = vmatprep.subr.mxu0 0.0
        %2022 = vmatpush1.xpose.msra.mxu0 0.0
        %2023 = vmatprep.subr.mxu0 0.0
        %2024 = vmatpush1.xpose.msra.mxu0 0.0
        %2025 = vmatprep.mubr.f32.mxu0 0.0
        %2026 = vmatmul.mubr.f32.gmra.mrb[0].mxu0 %v1957
        %v2027 = vpop.f32.mrb[0].mxu0
        %v2028 = vadd.f32 0.0, %v2027
        %v2029 = vpop.f32.mrb[0].mxu0
        %2030 = vdwg.mxu0
        %v2031 = vmul.f32 %v2028, 0.35355338
        %v2032 = vadd.f32 %v2031, %v573
        %v2033 = vsel %vm693, %v2032, -inf
        %2034 = vmax.xlane.f32.xlu0 %v2033
        %v2035 = vpop.xlane.xlu0 %2034
        %v2036 = vsub.f32 %v2032, %v2035
        %v2037 = vmul.f32 %v2036, 1.442695
        %v2038 = vpow.pop %v2037
        %v2039 = vsel %vm693, %v2038, 0.0
        %2040 = vadd.xlane.f32.xlu0 %v2039
        %v2041 = vpop.xlane.xlu0 %2040
        %v2042 = vrcp.pop %v2041
        %v2043 = vmul.f32 %v2038, %v2042
        %2044 = vrot.lane.b32.xlu0 %v1783, 56
        %v2045 = vpop.permute.xlu0 %2044
        %v2048 = vsel %vm693, %v2043, 0
        %2050 = vmatprep.subr.mxu0 0.0
        %2051 = vmatpush1.msra.mxu0 %v2045
        %2052 = vmatprep.subr.mxu0 0.0
        %2053 = vmatpush1.msra.mxu0 0.0
        %2054 = vmatprep.subr.mxu0 0.0
        %2055 = vmatpush1.msra.mxu0 0.0
        %2056 = vmatprep.subr.mxu0 0.0
        %2057 = vmatpush1.msra.mxu0 0.0
        %2058 = vmatprep.subr.mxu0 0.0
        %2059 = vmatpush1.msra.mxu0 0.0
        %2060 = vmatprep.subr.mxu0 0.0
        %2061 = vmatpush1.msra.mxu0 0.0
        %2062 = vmatprep.subr.mxu0 0.0
        %2063 = vmatpush1.msra.mxu0 0.0
        %2064 = vmatprep.subr.mxu0 0.0
        %2065 = vmatpush1.msra.mxu0 0.0
        %2066 = vmatprep.subr.mxu0 0.0
        %2067 = vmatpush1.msra.mxu0 0.0
        %2068 = vmatprep.subr.mxu0 0.0
        %2069 = vmatpush1.msra.mxu0 0.0
        %2070 = vmatprep.subr.mxu0 0.0
        %2071 = vmatpush1.msra.mxu0 0.0
        %2072 = vmatprep.subr.mxu0 0.0
        %2073 = vmatpush1.msra.mxu0 0.0
        %2074 = vmatprep.subr.mxu0 0.0
        %2075 = vmatpush1.msra.mxu0 0.0
        %2076 = vmatprep.subr.mxu0 0.0
        %2077 = vmatpush1.msra.mxu0 0.0
        %2078 = vmatprep.subr.mxu0 0.0
        %2079 = vmatpush1.msra.mxu0 0.0
        %2080 = vmatprep.subr.mxu0 0.0
        %2081 = vmatpush1.msra.mxu0 0.0
        %2082 = vmatprep.subr.mxu0 0.0
        %2083 = vmatpush1.msra.mxu0 0.0
        %2084 = vmatprep.subr.mxu0 0.0
        %2085 = vmatpush1.msra.mxu0 0.0
        %2086 = vmatprep.subr.mxu0 0.0
        %2087 = vmatpush1.msra.mxu0 0.0
        %2088 = vmatprep.subr.mxu0 0.0
        %2089 = vmatpush1.msra.mxu0 0.0
        %2090 = vmatprep.subr.mxu0 0.0
        %2091 = vmatpush1.msra.mxu0 0.0
        %2092 = vmatprep.subr.mxu0 0.0
        %2093 = vmatpush1.msra.mxu0 0.0
        %2094 = vmatprep.subr.mxu0 0.0
        %2095 = vmatpush1.msra.mxu0 0.0
        %2096 = vmatprep.subr.mxu0 0.0
        %2097 = vmatpush1.msra.mxu0 0.0
        %2098 = vmatprep.subr.mxu0 0.0
        %2099 = vmatpush1.msra.mxu0 0.0
        %2100 = vmatprep.subr.mxu0 0.0
        %2101 = vmatpush1.msra.mxu0 0.0
        %2102 = vmatprep.subr.mxu0 0.0
        %2103 = vmatpush1.msra.mxu0 0.0
        %2104 = vmatprep.subr.mxu0 0.0
        %2105 = vmatpush1.msra.mxu0 0.0
        %2106 = vmatprep.subr.mxu0 0.0
        %2107 = vmatpush1.msra.mxu0 0.0
        %2108 = vmatprep.subr.mxu0 0.0
        %2109 = vmatpush1.msra.mxu0 0.0
        %2110 = vmatprep.subr.mxu0 0.0
        %2111 = vmatpush1.msra.mxu0 0.0
        %2112 = vmatprep.subr.mxu0 0.0
        %2113 = vmatpush1.msra.mxu0 0.0
        %2114 = vmatprep.mubr.f32.mxu0 0.0
        %2115 = vmatmul.mubr.f32.gmra.mrb[0].mxu0 %v2048
        %v2116 = vpop.f32.mrb[0].mxu0
        %v2117 = vadd.f32 0.0, %v2116
        %v2118 = vpop.f32.mrb[0].mxu0
        %2119 = vdwg.mxu0
        %2121 = vrot.lane.b32.xlu0 %v2117, 8
        %v2122 = vpop.permute.xlu0 %2121
        %2124 = vst.msk [vmem:[#allocation2] sm:$0xff] %vm1029, %v2122
        %2125 = vrot.lane.b32.xlu0 %v1783, 112
        %v2126 = vpop.permute.xlu0 %2125
        %2127 = vrot.lane.b32.xlu0 %v1783, 80
        %v2128 = vpop.permute.xlu0 %2127
        %v2129 = vsel %vm693, %v2126, 0
        %v2131 = vsel %vm693, %v2128, 0
        %2133 = vmatprep.subr.mxu0 0.0
        %2134 = vmatpush1.xpose.msra.mxu0 %v2131
        %2135 = vmatprep.subr.mxu0 0.0
        %2136 = vmatpush1.xpose.msra.mxu0 0.0
        %2137 = vmatprep.subr.mxu0 0.0
        %2138 = vmatpush1.xpose.msra.mxu0 0.0
        %2139 = vmatprep.subr.mxu0 0.0
        %2140 = vmatpush1.xpose.msra.mxu0 0.0
        %2141 = vmatprep.subr.mxu0 0.0
        %2142 = vmatpush1.xpose.msra.mxu0 0.0
        %2143 = vmatprep.subr.mxu0 0.0
        %2144 = vmatpush1.xpose.msra.mxu0 0.0
        %2145 = vmatprep.subr.mxu0 0.0
        %2146 = vmatpush1.xpose.msra.mxu0 0.0
        %2147 = vmatprep.subr.mxu0 0.0
        %2148 = vmatpush1.xpose.msra.mxu0 0.0
        %2149 = vmatprep.subr.mxu0 0.0
        %2150 = vmatpush1.xpose.msra.mxu0 0.0
        %2151 = vmatprep.subr.mxu0 0.0
        %2152 = vmatpush1.xpose.msra.mxu0 0.0
        %2153 = vmatprep.subr.mxu0 0.0
        %2154 = vmatpush1.xpose.msra.mxu0 0.0
        %2155 = vmatprep.subr.mxu0 0.0
        %2156 = vmatpush1.xpose.msra.mxu0 0.0
        %2157 = vmatprep.subr.mxu0 0.0
        %2158 = vmatpush1.xpose.msra.mxu0 0.0
        %2159 = vmatprep.subr.mxu0 0.0
        %2160 = vmatpush1.xpose.msra.mxu0 0.0
        %2161 = vmatprep.subr.mxu0 0.0
        %2162 = vmatpush1.xpose.msra.mxu0 0.0
        %2163 = vmatprep.subr.mxu0 0.0
        %2164 = vmatpush1.xpose.msra.mxu0 0.0
        %2165 = vmatprep.subr.mxu0 0.0
        %2166 = vmatpush1.xpose.msra.mxu0 0.0
        %2167 = vmatprep.subr.mxu0 0.0
        %2168 = vmatpush1.xpose.msra.mxu0 0.0
        %2169 = vmatprep.subr.mxu0 0.0
        %2170 = vmatpush1.xpose.msra.mxu0 0.0
        %2171 = vmatprep.subr.mxu0 0.0
        %2172 = vmatpush1.xpose.msra.mxu0 0.0
        %2173 = vmatprep.subr.mxu0 0.0
        %2174 = vmatpush1.xpose.msra.mxu0 0.0
        %2175 = vmatprep.subr.mxu0 0.0
        %2176 = vmatpush1.xpose.msra.mxu0 0.0
        %2177 = vmatprep.subr.mxu0 0.0
        %2178 = vmatpush1.xpose.msra.mxu0 0.0
        %2179 = vmatprep.subr.mxu0 0.0
        %2180 = vmatpush1.xpose.msra.mxu0 0.0
        %2181 = vmatprep.subr.mxu0 0.0
        %2182 = vmatpush1.xpose.msra.mxu0 0.0
        %2183 = vmatprep.subr.mxu0 0.0
        %2184 = vmatpush1.xpose.msra.mxu0 0.0
        %2185 = vmatprep.subr.mxu0 0.0
        %2186 = vmatpush1.xpose.msra.mxu0 0.0
        %2187 = vmatprep.subr.mxu0 0.0
        %2188 = vmatpush1.xpose.msra.mxu0 0.0
        %2189 = vmatprep.subr.mxu0 0.0
        %2190 = vmatpush1.xpose.msra.mxu0 0.0
        %2191 = vmatprep.subr.mxu0 0.0
        %2192 = vmatpush1.xpose.msra.mxu0 0.0
        %2193 = vmatprep.subr.mxu0 0.0
        %2194 = vmatpush1.xpose.msra.mxu0 0.0
        %2195 = vmatprep.subr.mxu0 0.0
        %2196 = vmatpush1.xpose.msra.mxu0 0.0
        %2197 = vmatprep.mubr.f32.mxu0 0.0
        %2198 = vmatmul.mubr.f32.gmra.mrb[0].mxu0 %v2129
        %v2199 = vpop.f32.mrb[0].mxu0
        %v2200 = vadd.f32 0.0, %v2199
        %v2201 = vpop.f32.mrb[0].mxu0
        %2202 = vdwg.mxu0
        %v2203 = vmul.f32 %v2200, 0.35355338
        %v2204 = vadd.f32 %v2203, %v573
        %v2205 = vsel %vm693, %v2204, -inf
        %2206 = vmax.xlane.f32.xlu0 %v2205
        %v2207 = vpop.xlane.xlu0 %2206
        %v2208 = vsub.f32 %v2204, %v2207
        %v2209 = vmul.f32 %v2208, 1.442695
        %v2210 = vpow.pop %v2209
        %v2211 = vsel %vm693, %v2210, 0.0
        %2212 = vadd.xlane.f32.xlu0 %v2211
        %v2213 = vpop.xlane.xlu0 %2212
        %v2214 = vrcp.pop %v2213
        %v2215 = vmul.f32 %v2210, %v2214
        %2216 = vrot.lane.b32.xlu0 %v1783, 48
        %v2217 = vpop.permute.xlu0 %2216
        %v2220 = vsel %vm693, %v2215, 0
        %2222 = vmatprep.subr.mxu0 0.0
        %2223 = vmatpush1.msra.mxu0 %v2217
        %2224 = vmatprep.subr.mxu0 0.0
        %2225 = vmatpush1.msra.mxu0 0.0
        %2226 = vmatprep.subr.mxu0 0.0
        %2227 = vmatpush1.msra.mxu0 0.0
        %2228 = vmatprep.subr.mxu0 0.0
        %2229 = vmatpush1.msra.mxu0 0.0
        %2230 = vmatprep.subr.mxu0 0.0
        %2231 = vmatpush1.msra.mxu0 0.0
        %2232 = vmatprep.subr.mxu0 0.0
        %2233 = vmatpush1.msra.mxu0 0.0
        %2234 = vmatprep.subr.mxu0 0.0
        %2235 = vmatpush1.msra.mxu0 0.0
        %2236 = vmatprep.subr.mxu0 0.0
        %2237 = vmatpush1.msra.mxu0 0.0
        %2238 = vmatprep.subr.mxu0 0.0
        %2239 = vmatpush1.msra.mxu0 0.0
        %2240 = vmatprep.subr.mxu0 0.0
        %2241 = vmatpush1.msra.mxu0 0.0
        %2242 = vmatprep.subr.mxu0 0.0
        %2243 = vmatpush1.msra.mxu0 0.0
        %2244 = vmatprep.subr.mxu0 0.0
        %2245 = vmatpush1.msra.mxu0 0.0
        %2246 = vmatprep.subr.mxu0 0.0
        %2247 = vmatpush1.msra.mxu0 0.0
        %2248 = vmatprep.subr.mxu0 0.0
        %2249 = vmatpush1.msra.mxu0 0.0
        %2250 = vmatprep.subr.mxu0 0.0
        %2251 = vmatpush1.msra.mxu0 0.0
        %2252 = vmatprep.subr.mxu0 0.0
        %2253 = vmatpush1.msra.mxu0 0.0
        %2254 = vmatprep.subr.mxu0 0.0
        %2255 = vmatpush1.msra.mxu0 0.0
        %2256 = vmatprep.subr.mxu0 0.0
        %2257 = vmatpush1.msra.mxu0 0.0
        %2258 = vmatprep.subr.mxu0 0.0
        %2259 = vmatpush1.msra.mxu0 0.0
        %2260 = vmatprep.subr.mxu0 0.0
        %2261 = vmatpush1.msra.mxu0 0.0
        %2262 = vmatprep.subr.mxu0 0.0
        %2263 = vmatpush1.msra.mxu0 0.0
        %2264 = vmatprep.subr.mxu0 0.0
        %2265 = vmatpush1.msra.mxu0 0.0
        %2266 = vmatprep.subr.mxu0 0.0
        %2267 = vmatpush1.msra.mxu0 0.0
        %2268 = vmatprep.subr.mxu0 0.0
        %2269 = vmatpush1.msra.mxu0 0.0
        %2270 = vmatprep.subr.mxu0 0.0
        %2271 = vmatpush1.msra.mxu0 0.0
        %2272 = vmatprep.subr.mxu0 0.0
        %2273 = vmatpush1.msra.mxu0 0.0
        %2274 = vmatprep.subr.mxu0 0.0
        %2275 = vmatpush1.msra.mxu0 0.0
        %2276 = vmatprep.subr.mxu0 0.0
        %2277 = vmatpush1.msra.mxu0 0.0
        %2278 = vmatprep.subr.mxu0 0.0
        %2279 = vmatpush1.msra.mxu0 0.0
        %2280 = vmatprep.subr.mxu0 0.0
        %2281 = vmatpush1.msra.mxu0 0.0
        %2282 = vmatprep.subr.mxu0 0.0
        %2283 = vmatpush1.msra.mxu0 0.0
        %2284 = vmatprep.subr.mxu0 0.0
        %2285 = vmatpush1.msra.mxu0 0.0
        %2286 = vmatprep.mubr.f32.mxu0 0.0
        %2287 = vmatmul.mubr.f32.gmra.mrb[0].mxu0 %v2220
        %v2288 = vpop.f32.mrb[0].mxu0
        %v2289 = vadd.f32 0.0, %v2288
        %v2290 = vpop.f32.mrb[0].mxu0
        %2291 = vdwg.mxu0
        %2293 = vrot.lane.b32.xlu0 %v2289, 16
        %v2294 = vpop.permute.xlu0 %2293
        %2296 = vst.msk [vmem:[#allocation2] sm:$0xff] %vm1202, %v2294
        %2297 = vrot.lane.b32.xlu0 %v1783, 104
        %v2298 = vpop.permute.xlu0 %2297
        %2299 = vrot.lane.b32.xlu0 %v1783, 72
        %v2300 = vpop.permute.xlu0 %2299
        %v2301 = vsel %vm693, %v2298, 0
        %v2303 = vsel %vm693, %v2300, 0
        %2305 = vmatprep.subr.mxu0 0.0
        %2306 = vmatpush1.xpose.msra.mxu0 %v2303
        %2307 = vmatprep.subr.mxu0 0.0
        %2308 = vmatpush1.xpose.msra.mxu0 0.0
        %2309 = vmatprep.subr.mxu0 0.0
        %2310 = vmatpush1.xpose.msra.mxu0 0.0
        %2311 = vmatprep.subr.mxu0 0.0
        %2312 = vmatpush1.xpose.msra.mxu0 0.0
        %2313 = vmatprep.subr.mxu0 0.0
        %2314 = vmatpush1.xpose.msra.mxu0 0.0
        %2315 = vmatprep.subr.mxu0 0.0
        %2316 = vmatpush1.xpose.msra.mxu0 0.0
        %2317 = vmatprep.subr.mxu0 0.0
        %2318 = vmatpush1.xpose.msra.mxu0 0.0
        %2319 = vmatprep.subr.mxu0 0.0
        %2320 = vmatpush1.xpose.msra.mxu0 0.0
        %2321 = vmatprep.subr.mxu0 0.0
        %2322 = vmatpush1.xpose.msra.mxu0 0.0
        %2323 = vmatprep.subr.mxu0 0.0
        %2324 = vmatpush1.xpose.msra.mxu0 0.0
        %2325 = vmatprep.subr.mxu0 0.0
        %2326 = vmatpush1.xpose.msra.mxu0 0.0
        %2327 = vmatprep.subr.mxu0 0.0
        %2328 = vmatpush1.xpose.msra.mxu0 0.0
        %2329 = vmatprep.subr.mxu0 0.0
        %2330 = vmatpush1.xpose.msra.mxu0 0.0
        %2331 = vmatprep.subr.mxu0 0.0
        %2332 = vmatpush1.xpose.msra.mxu0 0.0
        %2333 = vmatprep.subr.mxu0 0.0
        %2334 = vmatpush1.xpose.msra.mxu0 0.0
        %2335 = vmatprep.subr.mxu0 0.0
        %2336 = vmatpush1.xpose.msra.mxu0 0.0
        %2337 = vmatprep.subr.mxu0 0.0
        %2338 = vmatpush1.xpose.msra.mxu0 0.0
        %2339 = vmatprep.subr.mxu0 0.0
        %2340 = vmatpush1.xpose.msra.mxu0 0.0
        %2341 = vmatprep.subr.mxu0 0.0
        %2342 = vmatpush1.xpose.msra.mxu0 0.0
        %2343 = vmatprep.subr.mxu0 0.0
        %2344 = vmatpush1.xpose.msra.mxu0 0.0
        %2345 = vmatprep.subr.mxu0 0.0
        %2346 = vmatpush1.xpose.msra.mxu0 0.0
        %2347 = vmatprep.subr.mxu0 0.0
        %2348 = vmatpush1.xpose.msra.mxu0 0.0
        %2349 = vmatprep.subr.mxu0 0.0
        %2350 = vmatpush1.xpose.msra.mxu0 0.0
        %2351 = vmatprep.subr.mxu0 0.0
        %2352 = vmatpush1.xpose.msra.mxu0 0.0
        %2353 = vmatprep.subr.mxu0 0.0
        %2354 = vmatpush1.xpose.msra.mxu0 0.0
        %2355 = vmatprep.subr.mxu0 0.0
        %2356 = vmatpush1.xpose.msra.mxu0 0.0
        %2357 = vmatprep.subr.mxu0 0.0
        %2358 = vmatpush1.xpose.msra.mxu0 0.0
        %2359 = vmatprep.subr.mxu0 0.0
        %2360 = vmatpush1.xpose.msra.mxu0 0.0
        %2361 = vmatprep.subr.mxu0 0.0
        %2362 = vmatpush1.xpose.msra.mxu0 0.0
        %2363 = vmatprep.subr.mxu0 0.0
        %2364 = vmatpush1.xpose.msra.mxu0 0.0
        %2365 = vmatprep.subr.mxu0 0.0
        %2366 = vmatpush1.xpose.msra.mxu0 0.0
        %2367 = vmatprep.subr.mxu0 0.0
        %2368 = vmatpush1.xpose.msra.mxu0 0.0
        %2369 = vmatprep.mubr.f32.mxu0 0.0
        %2370 = vmatmul.mubr.f32.gmra.mrb[0].mxu0 %v2301
        %v2371 = vpop.f32.mrb[0].mxu0
        %v2372 = vadd.f32 0.0, %v2371
        %v2373 = vpop.f32.mrb[0].mxu0
        %2374 = vdwg.mxu0
        %v2375 = vmul.f32 %v2372, 0.35355338
        %v2376 = vadd.f32 %v2375, %v573
        %v2377 = vsel %vm693, %v2376, -inf
        %2378 = vmax.xlane.f32.xlu0 %v2377
        %v2379 = vpop.xlane.xlu0 %2378
        %v2380 = vsub.f32 %v2376, %v2379
        %v2381 = vmul.f32 %v2380, 1.442695
        %v2382 = vpow.pop %v2381
        %v2383 = vsel %vm693, %v2382, 0.0
        %2384 = vadd.xlane.f32.xlu0 %v2383
        %v2385 = vpop.xlane.xlu0 %2384
        %v2386 = vrcp.pop %v2385
        %v2387 = vmul.f32 %v2382, %v2386
        %2388 = vrot.lane.b32.xlu0 %v1783, 40
        %v2389 = vpop.permute.xlu0 %2388
        %v2392 = vsel %vm693, %v2387, 0
        %2394 = vmatprep.subr.mxu0 0.0
        %2395 = vmatpush1.msra.mxu0 %v2389
        %2396 = vmatprep.subr.mxu0 0.0
        %2397 = vmatpush1.msra.mxu0 0.0
        %2398 = vmatprep.subr.mxu0 0.0
        %2399 = vmatpush1.msra.mxu0 0.0
        %2400 = vmatprep.subr.mxu0 0.0
        %2401 = vmatpush1.msra.mxu0 0.0
        %2402 = vmatprep.subr.mxu0 0.0
        %2403 = vmatpush1.msra.mxu0 0.0
        %2404 = vmatprep.subr.mxu0 0.0
        %2405 = vmatpush1.msra.mxu0 0.0
        %2406 = vmatprep.subr.mxu0 0.0
        %2407 = vmatpush1.msra.mxu0 0.0
        %2408 = vmatprep.subr.mxu0 0.0
        %2409 = vmatpush1.msra.mxu0 0.0
        %2410 = vmatprep.subr.mxu0 0.0
        %2411 = vmatpush1.msra.mxu0 0.0
        %2412 = vmatprep.subr.mxu0 0.0
        %2413 = vmatpush1.msra.mxu0 0.0
        %2414 = vmatprep.subr.mxu0 0.0
        %2415 = vmatpush1.msra.mxu0 0.0
        %2416 = vmatprep.subr.mxu0 0.0
        %2417 = vmatpush1.msra.mxu0 0.0
        %2418 = vmatprep.subr.mxu0 0.0
        %2419 = vmatpush1.msra.mxu0 0.0
        %2420 = vmatprep.subr.mxu0 0.0
        %2421 = vmatpush1.msra.mxu0 0.0
        %2422 = vmatprep.subr.mxu0 0.0
        %2423 = vmatpush1.msra.mxu0 0.0
        %2424 = vmatprep.subr.mxu0 0.0
        %2425 = vmatpush1.msra.mxu0 0.0
        %2426 = vmatprep.subr.mxu0 0.0
        %2427 = vmatpush1.msra.mxu0 0.0
        %2428 = vmatprep.subr.mxu0 0.0
        %2429 = vmatpush1.msra.mxu0 0.0
        %2430 = vmatprep.subr.mxu0 0.0
        %2431 = vmatpush1.msra.mxu0 0.0
        %2432 = vmatprep.subr.mxu0 0.0
        %2433 = vmatpush1.msra.mxu0 0.0
        %2434 = vmatprep.subr.mxu0 0.0
        %2435 = vmatpush1.msra.mxu0 0.0
        %2436 = vmatprep.subr.mxu0 0.0
        %2437 = vmatpush1.msra.mxu0 0.0
        %2438 = vmatprep.subr.mxu0 0.0
        %2439 = vmatpush1.msra.mxu0 0.0
        %2440 = vmatprep.subr.mxu0 0.0
        %2441 = vmatpush1.msra.mxu0 0.0
        %2442 = vmatprep.subr.mxu0 0.0
        %2443 = vmatpush1.msra.mxu0 0.0
        %2444 = vmatprep.subr.mxu0 0.0
        %2445 = vmatpush1.msra.mxu0 0.0
        %2446 = vmatprep.subr.mxu0 0.0
        %2447 = vmatpush1.msra.mxu0 0.0
        %2448 = vmatprep.subr.mxu0 0.0
        %2449 = vmatpush1.msra.mxu0 0.0
        %2450 = vmatprep.subr.mxu0 0.0
        %2451 = vmatpush1.msra.mxu0 0.0
        %2452 = vmatprep.subr.mxu0 0.0
        %2453 = vmatpush1.msra.mxu0 0.0
        %2454 = vmatprep.subr.mxu0 0.0
        %2455 = vmatpush1.msra.mxu0 0.0
        %2456 = vmatprep.subr.mxu0 0.0
        %2457 = vmatpush1.msra.mxu0 0.0
        %2458 = vmatprep.mubr.f32.mxu0 0.0
        %2459 = vmatmul.mubr.f32.gmra.mrb[0].mxu0 %v2392
        %v2460 = vpop.f32.mrb[0].mxu0
        %v2461 = vadd.f32 0.0, %v2460
        %v2462 = vpop.f32.mrb[0].mxu0
        %2463 = vdwg.mxu0
        %2465 = vrot.lane.b32.xlu0 %v2461, 24
        %v2466 = vpop.permute.xlu0 %2465
        %2468 = vst.msk [vmem:[#allocation2] sm:$0xff] %vm1375, %v2466
        %v2469 = vadd.f32 %v1875, %v2043
        %v2470 = vadd.f32 %v2469, %v2215
        %v2471 = vadd.f32 %v2470, %v2387
        %v2472 = vmul.f32 %v2471, 0.25
        %vm2473 = vcmask 57344
        %2474 = vst.msk [vmem:[%s566] sm:$0x1] %vm2473, %v2472
        %v2475 = vld [vmem:[#allocation2] sm:$0xff]
        %s2476 = scalar_lea.vmem %s6, 32
        %v2477 = vld [vmem:[%s2476] sm:$0xff]
        %v2478 = vld [vmem:[%s2476 + $0x8] sm:$0xff]
        %v2479 = vld [vmem:[%s2476 + $0x10] sm:$0xff]
        %v2480 = vld [vmem:[%s2476 + $0x18] sm:$0xff]
        %s2481 = scalar_lea.vmem %s7, 1
        %v2482 = vld [vmem:[%s2481] sm:$0x1]
        %v2484 = vlaneseq
        %v2485 = vshrl.u32 %v2484, 7
        %v2486 = vsub.s32 0, %v2485
        %v2487 = vrot.slane %v2482, %v2486
        %v2490 = vsel %vm577, %v2475, 0
        %2492 = vmatprep.subr.mxu0 0.0
        %2493 = vmatpush1.msra.mxu0 %v2477
        %2494 = vmatprep.subr.mxu0 0.0
        %2495 = vmatpush1.msra.mxu0 %v2478
        %2496 = vmatprep.subr.mxu0 0.0
        %2497 = vmatpush1.msra.mxu0 %v2479
        %2498 = vmatprep.subr.mxu0 0.0
        %2499 = vmatpush1.msra.mxu0 %v2480
        %2500 = vmatprep.subr.mxu0 0.0
        %2501 = vmatpush1.msra.mxu0 0.0
        %2502 = vmatprep.subr.mxu0 0.0
        %2503 = vmatpush1.msra.mxu0 0.0
        %2504 = vmatprep.subr.mxu0 0.0
        %2505 = vmatpush1.msra.mxu0 0.0
        %2506 = vmatprep.subr.mxu0 0.0
        %2507 = vmatpush1.msra.mxu0 0.0
        %2508 = vmatprep.subr.mxu0 0.0
        %2509 = vmatpush1.msra.mxu0 0.0
        %2510 = vmatprep.subr.mxu0 0.0
        %2511 = vmatpush1.msra.mxu0 0.0
        %2512 = vmatprep.subr.mxu0 0.0
        %2513 = vmatpush1.msra.mxu0 0.0
        %2514 = vmatprep.subr.mxu0 0.0
        %2515 = vmatpush1.msra.mxu0 0.0
        %2516 = vmatprep.subr.mxu0 0.0
        %2517 = vmatpush1.msra.mxu0 0.0
        %2518 = vmatprep.subr.mxu0 0.0
        %2519 = vmatpush1.msra.mxu0 0.0
        %2520 = vmatprep.subr.mxu0 0.0
        %2521 = vmatpush1.msra.mxu0 0.0
        %2522 = vmatprep.subr.mxu0 0.0
        %2523 = vmatpush1.msra.mxu0 0.0
        %2524 = vmatprep.subr.mxu0 0.0
        %2525 = vmatpush1.msra.mxu0 0.0
        %2526 = vmatprep.subr.mxu0 0.0
        %2527 = vmatpush1.msra.mxu0 0.0
        %2528 = vmatprep.subr.mxu0 0.0
        %2529 = vmatpush1.msra.mxu0 0.0
        %2530 = vmatprep.subr.mxu0 0.0
        %2531 = vmatpush1.msra.mxu0 0.0
        %2532 = vmatprep.subr.mxu0 0.0
        %2533 = vmatpush1.msra.mxu0 0.0
        %2534 = vmatprep.subr.mxu0 0.0
        %2535 = vmatpush1.msra.mxu0 0.0
        %2536 = vmatprep.subr.mxu0 0.0
        %2537 = vmatpush1.msra.mxu0 0.0
        %2538 = vmatprep.subr.mxu0 0.0
        %2539 = vmatpush1.msra.mxu0 0.0
        %2540 = vmatprep.subr.mxu0 0.0
        %2541 = vmatpush1.msra.mxu0 0.0
        %2542 = vmatprep.subr.mxu0 0.0
        %2543 = vmatpush1.msra.mxu0 0.0
        %2544 = vmatprep.subr.mxu0 0.0
        %2545 = vmatpush1.msra.mxu0 0.0
        %2546 = vmatprep.subr.mxu0 0.0
        %2547 = vmatpush1.msra.mxu0 0.0
        %2548 = vmatprep.subr.mxu0 0.0
        %2549 = vmatpush1.msra.mxu0 0.0
        %2550 = vmatprep.subr.mxu0 0.0
        %2551 = vmatpush1.msra.mxu0 0.0
        %2552 = vmatprep.subr.mxu0 0.0
        %2553 = vmatpush1.msra.mxu0 0.0
        %2554 = vmatprep.subr.mxu0 0.0
        %2555 = vmatpush1.msra.mxu0 0.0
        %2556 = vmatprep.mubr.f32.mxu0 0.0
        %2557 = vmatmul.mubr.f32.gmra.mrb[0].mxu0 %v2490
        %v2558 = vpop.f32.mrb[0].mxu0
        %v2559 = vadd.f32 %v2487, %v2558
        %v2560 = vpop.f32.mrb[0].mxu0
        %2561 = vdwg.mxu0
        %v2562 = vadd.f32 %v2559, %v1699
        %s2563 = scalar_lea.vmem %s8, 1
        %v2564 = vld [vmem:[%s2563] sm:$0x1]
        %s2565 = scalar_lea.vmem %s9, 1
        %v2566 = vld [vmem:[%s2565] sm:$0x1]
        %v2567 = vsel %vm577, %v2562, 0.0
        %2568 = vadd.xlane.f32.xlu0 %v2567
        %v2569 = vpop.xlane.xlu0 %2568
        %v2570 = vmul.f32 %v2569, %v581
        %v2571 = vsub.f32 %v2562, %v2570
        %v2572 = vmul.f32 %v2571, %v2571
        %v2573 = vsel %vm577, %v2572, 0.0
        %2574 = vadd.xlane.f32.xlu0 %v2573
        %v2575 = vpop.xlane.xlu0 %2574
        %v2576 = vmul.f32 %v2575, %v581
        %v2577 = vadd.f32 %v2576, 1e-12
        %v2578 = vrsqrt.pop %v2577
        %v2579 = vmul.f32 %v2571, %v2578
        %v2581 = vlaneseq
        %v2582 = vshrl.u32 %v2581, 7
        %v2583 = vsub.s32 0, %v2582
        %v2584 = vrot.slane %v2564, %v2583
        %v2586 = vmul.f32 %v2579, %v2584
        %v2588 = vlaneseq
        %v2589 = vshrl.u32 %v2588, 7
        %v2590 = vsub.s32 0, %v2589
        %v2591 = vrot.slane %v2566, %v2590
        %v2593 = vadd.f32 %v2586, %v2591
        %s2594 = scalar_lea.vmem %s10, 32
        %v2595 = vld [vmem:[%s2594] sm:$0xff]
        %v2596 = vld [vmem:[%s2594 + $0x8] sm:$0xff]
        %v2597 = vld [vmem:[%s2594 + $0x10] sm:$0xff]
        %v2598 = vld [vmem:[%s2594 + $0x18] sm:$0xff]
        %s2599 = scalar_lea.vmem %s11, 1
        %v2600 = vld [vmem:[%s2599] sm:$0x1]
        %v2602 = vlaneseq
        %v2603 = vshrl.u32 %v2602, 7
        %v2604 = vsub.s32 0, %v2603
        %v2605 = vrot.slane %v2600, %v2604
        %v2608 = vsel %vm577, %v2593, 0
        %2610 = vmatprep.subr.mxu0 0.0
        %2611 = vmatpush1.msra.mxu0 %v2595
        %2612 = vmatprep.subr.mxu0 0.0
        %2613 = vmatpush1.msra.mxu0 %v2596
        %2614 = vmatprep.subr.mxu0 0.0
        %2615 = vmatpush1.msra.mxu0 %v2597
        %2616 = vmatprep.subr.mxu0 0.0
        %2617 = vmatpush1.msra.mxu0 %v2598
        %2618 = vmatprep.subr.mxu0 0.0
        %2619 = vmatpush1.msra.mxu0 0.0
        %2620 = vmatprep.subr.mxu0 0.0
        %2621 = vmatpush1.msra.mxu0 0.0
        %2622 = vmatprep.subr.mxu0 0.0
        %2623 = vmatpush1.msra.mxu0 0.0
        %2624 = vmatprep.subr.mxu0 0.0
        %2625 = vmatpush1.msra.mxu0 0.0
        %2626 = vmatprep.subr.mxu0 0.0
        %2627 = vmatpush1.msra.mxu0 0.0
        %2628 = vmatprep.subr.mxu0 0.0
        %2629 = vmatpush1.msra.mxu0 0.0
        %2630 = vmatprep.subr.mxu0 0.0
        %2631 = vmatpush1.msra.mxu0 0.0
        %2632 = vmatprep.subr.mxu0 0.0
        %2633 = vmatpush1.msra.mxu0 0.0
        %2634 = vmatprep.subr.mxu0 0.0
        %2635 = vmatpush1.msra.mxu0 0.0
        %2636 = vmatprep.subr.mxu0 0.0
        %2637 = vmatpush1.msra.mxu0 0.0
        %2638 = vmatprep.subr.mxu0 0.0
        %2639 = vmatpush1.msra.mxu0 0.0
        %2640 = vmatprep.subr.mxu0 0.0
        %2641 = vmatpush1.msra.mxu0 0.0
        %2642 = vmatprep.subr.mxu0 0.0
        %2643 = vmatpush1.msra.mxu0 0.0
        %2644 = vmatprep.subr.mxu0 0.0
        %2645 = vmatpush1.msra.mxu0 0.0
        %2646 = vmatprep.subr.mxu0 0.0
        %2647 = vmatpush1.msra.mxu0 0.0
        %2648 = vmatprep.subr.mxu0 0.0
        %2649 = vmatpush1.msra.mxu0 0.0
        %2650 = vmatprep.subr.mxu0 0.0
        %2651 = vmatpush1.msra.mxu0 0.0
        %2652 = vmatprep.subr.mxu0 0.0
        %2653 = vmatpush1.msra.mxu0 0.0
        %2654 = vmatprep.subr.mxu0 0.0
        %2655 = vmatpush1.msra.mxu0 0.0
        %2656 = vmatprep.subr.mxu0 0.0
        %2657 = vmatpush1.msra.mxu0 0.0
        %2658 = vmatprep.subr.mxu0 0.0
        %2659 = vmatpush1.msra.mxu0 0.0
        %2660 = vmatprep.subr.mxu0 0.0
        %2661 = vmatpush1.msra.mxu0 0.0
        %2662 = vmatprep.subr.mxu0 0.0
        %2663 = vmatpush1.msra.mxu0 0.0
        %2664 = vmatprep.subr.mxu0 0.0
        %2665 = vmatpush1.msra.mxu0 0.0
        %2666 = vmatprep.subr.mxu0 0.0
        %2667 = vmatpush1.msra.mxu0 0.0
        %2668 = vmatprep.subr.mxu0 0.0
        %2669 = vmatpush1.msra.mxu0 0.0
        %2670 = vmatprep.subr.mxu0 0.0
        %2671 = vmatpush1.msra.mxu0 0.0
        %2672 = vmatprep.subr.mxu0 0.0
        %2673 = vmatpush1.msra.mxu0 0.0
        %2674 = vmatprep.mubr.f32.mxu0 0.0
        %2675 = vmatmul.mubr.f32.gmra.mrb[0].mxu0 %v2608
        %v2676 = vpop.f32.mrb[0].mxu0
        %v2677 = vadd.f32 %v2605, %v2676
        %v2678 = vpop.f32.mrb[0].mxu0
        %2679 = vdwg.mxu0
        %v2680 = vmul.f32 %v2677, 0.5
        %v2681 = vmul.f32 %v2677, 0.70710677
        %v2682 = verf.f32.pop %v2681
        %v2683 = vadd.f32 %v2682, 1.0
        %v2684 = vmul.f32 %v2680, %v2683
        %s2685 = scalar_lea.vmem %s12, 64
        %v2686 = vld [vmem:[%s2685] sm:$0xff]
        %v2687 = vld [vmem:[%s2685 + $0x8] sm:$0xff]
        %v2688 = vld [vmem:[%s2685 + $0x10] sm:$0xff]
        %v2689 = vld [vmem:[%s2685 + $0x18] sm:$0xff]
        %v2690 = vld [vmem:[%s2685 + $0x20] sm:$0xff]
        %v2691 = vld [vmem:[%s2685 + $0x28] sm:$0xff]
        %v2692 = vld [vmem:[%s2685 + $0x30] sm:$0xff]
        %v2693 = vld [vmem:[%s2685 + $0x38] sm:$0xff]
        %s2694 = scalar_lea.vmem %s13, 1
        %v2695 = vld [vmem:[%s2694] sm:$0x1]
        %v2697 = vlaneseq
        %v2698 = vshrl.u32 %v2697, 7
        %v2699 = vsub.s32 0, %v2698
        %v2700 = vrot.slane %v2695, %v2699
        %v2703 = vsel %vm1596, %v2684, 0
        %2705 = vmatprep.subr.mxu0 0.0
        %2706 = vmatpush1.msra.mxu0 %v2686
        %2707 = vmatprep.subr.mxu0 0.0
        %2708 = vmatpush1.msra.mxu0 %v2687
        %2709 = vmatprep.subr.mxu0 0.0
        %2710 = vmatpush1.msra.mxu0 %v2688
        %2711 = vmatprep.subr.mxu0 0.0
        %2712 = vmatpush1.msra.mxu0 %v2689
        %2713 = vmatprep.subr.mxu0 0.0
        %2714 = vmatpush1.msra.mxu0 %v2690
        %2715 = vmatprep.subr.mxu0 0.0
        %2716 = vmatpush1.msra.mxu0 %v2691
        %2717 = vmatprep.subr.mxu0 0.0
        %2718 = vmatpush1.msra.mxu0 %v2692
        %2719 = vmatprep.subr.mxu0 0.0
        %2720 = vmatpush1.msra.mxu0 %v2693
        %2721 = vmatprep.subr.mxu0 0.0
        %2722 = vmatpush1.msra.mxu0 0.0
        %2723 = vmatprep.subr.mxu0 0.0
        %2724 = vmatpush1.msra.mxu0 0.0
        %2725 = vmatprep.subr.mxu0 0.0
        %2726 = vmatpush1.msra.mxu0 0.0
        %2727 = vmatprep.subr.mxu0 0.0
        %2728 = vmatpush1.msra.mxu0 0.0
        %2729 = vmatprep.subr.mxu0 0.0
        %2730 = vmatpush1.msra.mxu0 0.0
        %2731 = vmatprep.subr.mxu0 0.0
        %2732 = vmatpush1.msra.mxu0 0.0
        %2733 = vmatprep.subr.mxu0 0.0
        %2734 = vmatpush1.msra.mxu0 0.0
        %2735 = vmatprep.subr.mxu0 0.0
        %2736 = vmatpush1.msra.mxu0 0.0
        %2737 = vmatprep.subr.mxu0 0.0
        %2738 = vmatpush1.msra.mxu0 0.0
        %2739 = vmatprep.subr.mxu0 0.0
        %2740 = vmatpush1.msra.mxu0 0.0
        %2741 = vmatprep.subr.mxu0 0.0
        %2742 = vmatpush1.msra.mxu0 0.0
        %2743 = vmatprep.subr.mxu0 0.0
        %2744 = vmatpush1.msra.mxu0 0.0
        %2745 = vmatprep.subr.mxu0 0.0
        %2746 = vmatpush1.msra.mxu0 0.0
        %2747 = vmatprep.subr.mxu0 0.0
        %2748 = vmatpush1.msra.mxu0 0.0
        %2749 = vmatprep.subr.mxu0 0.0
        %2750 = vmatpush1.msra.mxu0 0.0
        %2751 = vmatprep.subr.mxu0 0.0
        %2752 = vmatpush1.msra.mxu0 0.0
        %2753 = vmatprep.subr.mxu0 0.0
        %2754 = vmatpush1.msra.mxu0 0.0
        %2755 = vmatprep.subr.mxu0 0.0
        %2756 = vmatpush1.msra.mxu0 0.0
        %2757 = vmatprep.subr.mxu0 0.0
        %2758 = vmatpush1.msra.mxu0 0.0
        %2759 = vmatprep.subr.mxu0 0.0
        %2760 = vmatpush1.msra.mxu0 0.0
        %2761 = vmatprep.subr.mxu0 0.0
        %2762 = vmatpush1.msra.mxu0 0.0
        %2763 = vmatprep.subr.mxu0 0.0
        %2764 = vmatpush1.msra.mxu0 0.0
        %2765 = vmatprep.subr.mxu0 0.0
        %2766 = vmatpush1.msra.mxu0 0.0
        %2767 = vmatprep.subr.mxu0 0.0
        %2768 = vmatpush1.msra.mxu0 0.0
        %2769 = vmatprep.mubr.f32.mxu0 0.0
        %2770 = vmatmul.mubr.f32.gmra.mrb[0].mxu0 %v2703
        %v2771 = vpop.f32.mrb[0].mxu0
        %v2772 = vadd.f32 %v2700, %v2771
        %v2773 = vpop.f32.mrb[0].mxu0
        %2774 = vdwg.mxu0
        %v2775 = vadd.f32 %v2772, %v2593
        %s2776 = scalar_lea.vmem %s14, 1
        %v2777 = vld [vmem:[%s2776] sm:$0x1]
        %s2778 = scalar_lea.vmem %s15, 1
        %v2779 = vld [vmem:[%s2778] sm:$0x1]
        %v2780 = vsel %vm577, %v2775, 0.0
        %2781 = vadd.xlane.f32.xlu0 %v2780
        %v2782 = vpop.xlane.xlu0 %2781
        %v2783 = vmul.f32 %v2782, %v581
        %v2784 = vsub.f32 %v2775, %v2783
        %v2785 = vmul.f32 %v2784, %v2784
        %v2786 = vsel %vm577, %v2785, 0.0
        %2787 = vadd.xlane.f32.xlu0 %v2786
        %v2788 = vpop.xlane.xlu0 %2787
        %v2789 = vmul.f32 %v2788, %v581
        %v2790 = vadd.f32 %v2789, 1e-12
        %v2791 = vrsqrt.pop %v2790
        %v2792 = vmul.f32 %v2784, %v2791
        %v2794 = vlaneseq
        %v2795 = vshrl.u32 %v2794, 7
        %v2796 = vsub.s32 0, %v2795
        %v2797 = vrot.slane %v2777, %v2796
        %v2799 = vmul.f32 %v2792, %v2797
        %v2801 = vlaneseq
        %v2802 = vshrl.u32 %v2801, 7
        %v2803 = vsub.s32 0, %v2802
        %v2804 = vrot.slane %v2779, %v2803
        %v2806 = vadd.f32 %v2799, %v2804
        %2807 = vst.msk [vmem:[%s551] sm:$0xff] %vm577, %v2806
        %s2808 = sand.u32 %s386, 1
        %s2809 = scalar_lea.sflag [#allocation4], %s2808
        %s2810 = sand.u32 %s386, 1
        %s2811 = smul.addr %s2810, 8
        %s2812 = scalar_lea.vmem [#allocation3], %s2811
        %p2813 = scmp.lt.s32.totalorder %s32, 1
        %s2814 = scalar_select %p2813, %s32, 1
        %s2815 = scalar_lea.vmem %s17, %s2814
        // Predicated region
        $region85: #{encode.1} parent=83 // pred_check
          %p2816 = pneg %p396
        $region86: #{encode.1} parent=83 // pred_check_branch
          %2818 = sbr.rel (%p2816) target = $region88
        $region87: #{encode.1} parent=83 // pred_region
          %s2820 = ssub.s32 128, 128
          %2821 = vsyncadd %s2809, %s2820
          %s2822 = smul.addr %s32, 128
          %s2823 = scalar_lea.hbm %s16, %s2822
          %s2825 = sshll.u32 %s2812, 4
          %s2826 = int_to_ptr.vmem [resolvable:$true] %s2825
          %2828 = dma.vmem_to_hbm [thread:$0]  %s2826, 128, %s2823, %s2809
        $region88: #{encode.1} parent=83 // pred_fallthru
          _
        // Predicated region
        $region89: #{encode.1} parent=83 // pred_check
          %p2829 = pneg %p422
        $region90: #{encode.1} parent=83 // pred_check_branch
          %2831 = sbr.rel (%p2829) target = $region92
        $region91: #{encode.1} parent=83 // pred_region
          _
        $region92: #{encode.1} parent=83 // pred_fallthru
          _
      $region84: #{encode.1} parent=5 // pred_fallthru
        _
      %p2832 = scmp.le.s32.totalorder 2, %s27
      // Predicated region
      $region93: #{encode.1} parent=5 // pred_check
        %p2833 = pneg %p2832
      $region94: #{encode.1} parent=5 // pred_check_branch
        %2835 = sbr.rel (%p2833) target = $region96
      $region95: #{encode.1} parent=5 // pred_region
        %s2836 = ssub.s32 %s27, 2
        // Predicated region
        $region97: #{encode.1} parent=95 // pred_check
          %p2837 = pneg %p402
        $region98: #{encode.1} parent=95 // pred_check_branch
          %2839 = sbr.rel (%p2837) target = $region100
        $region99: #{encode.1} parent=95 // pred_region
          %s2840 = sand.u32 %s387, 1
          %s2841 = scalar_lea.sflag [#allocation4], %s2840
          %s2842 = sand.u32 %s387, 1
          %s2843 = smul.addr %s2842, 8
          %s2844 = scalar_lea.vmem [#allocation3], %s2843
          %2845 = dma.done %s2841, 128
        $region100: #{encode.1} parent=95 // pred_fallthru
          _
        // Predicated region
        $region101: #{encode.1} parent=95 // pred_check
          %p2846 = pneg %p428
        $region102: #{encode.1} parent=95 // pred_check_branch
          %2848 = sbr.rel (%p2846) target = $region104
        $region103: #{encode.1} parent=95 // pred_region
          %p2849 = scmp.lt.s32.totalorder %s33, 1
          %s2850 = scalar_select %p2849, %s33, 1
          %s2851 = scalar_lea.vmem %s17, %s2850
        $region104: #{encode.1} parent=95 // pred_fallthru
          _
      $region96: #{encode.1} parent=5 // pred_fallthru
        _
    $region6: #{encode.1} parent=1 // loop_footer
      %s31 = sadd.s32 1, %s27
    $region7: #{encode.1} parent=1 // loop_footer_branch
      %26 = sbr.rel target = $region3
    $region8: #{encode.1} parent=1 // loop_exit
      _
    %2852 = vsyncpa [#allocation4], 1
    %s2853 = scalar_lea.sflag [#allocation4], 1
    %2854 = vsyncpa %s2853, 1

</llo_original>
